<compile_context>
chip_gen: v7x
topology: tpu7x:2x2x1
jax: 0.10.0
libtpu: 0.0.40
codegen_flags: <defaults>
</compile_context>

<pallas_src>
import functools

import jax
import jax.numpy as jnp
from jax import lax
from jax.experimental import pallas as pl
from jax.experimental.pallas import tpu as pltpu


# ----------------------------------------------------------------------------
# Helpers: tile pickers + scoped-VMEM budget (bigger on 128-MiB parts).
# ----------------------------------------------------------------------------
def _pick(dim, candidates):
    for c in candidates:
        if dim % c == 0 and dim >= c:
            return c
    return dim  # fall back to a full-extent block (small / odd dims)


def _pick_chunk(T):
    # Chunk length for the WKV recurrence.  Kept <= 64 so exp(-cum_log_decay)
    # stays well inside float32 range.
    for c in (64, 32, 16, 8):
        if T % c == 0:
            return c
    return T


_VMEM_LIMIT_CACHE = []


def _vmem_limit_bytes():
    # Raise the scoped-VMEM budget on 128-MiB parts (v5e/v6e); stay with the
    # default on smaller parts (v7x: 64 MiB physical) or if the query fails.
    if not _VMEM_LIMIT_CACHE:
        limit = None
        try:
            cap = int(pltpu.get_tpu_info().vmem_capacity_bytes)
            if cap >= 128 * 1024 * 1024:
                limit = 100 * 1024 * 1024
        except Exception:
            limit = None
        _VMEM_LIMIT_CACHE.append(limit)
    return _VMEM_LIMIT_CACHE[0]


def _cparams(dims):
    return pltpu.CompilerParams(dimension_semantics=dims,
                                vmem_limit_bytes=_vmem_limit_bytes())


# ----------------------------------------------------------------------------
# Tiled matmul kernel (bf16 operands, f32 accumulator, optional fused tanh).
# ----------------------------------------------------------------------------
def _matmul_kernel(a_ref, b_ref, o_ref, acc_ref, *, activation):
    @pl.when(pl.program_id(2) == 0)
    def _():
        acc_ref[...] = jnp.zeros_like(acc_ref)

    acc_ref[...] += jnp.dot(a_ref[...], b_ref[...],
                            preferred_element_type=jnp.float32)

    @pl.when(pl.program_id(2) == pl.num_programs(2) - 1)
    def _():
        acc = acc_ref[...]
        if activation == "tanh":
            acc = jnp.tanh(acc)
        o_ref[...] = acc.astype(o_ref.dtype)


def pallas_matmul(a, b, activation=None, out_dtype=jnp.float32):
    M, K = a.shape
    K2, N = b.shape
    assert K == K2
    tm = _pick(M, (256, 128, 64, 32, 16, 8))
    tn = _pick(N, (256, 128))
    tk = _pick(K, (512, 256, 128))
    a = a.astype(jnp.bfloat16)
    b = b.astype(jnp.bfloat16)
    kern = functools.partial(_matmul_kernel, activation=activation)
    return pl.pallas_call(
        kern,
        out_shape=jax.ShapeDtypeStruct((M, N), out_dtype),
        grid_spec=pltpu.PrefetchScalarGridSpec(
            num_scalar_prefetch=0,
            grid=(M // tm, N // tn, K // tk),
            in_specs=[pl.BlockSpec((tm, tk), lambda i, j, k: (i, k)),
                      pl.BlockSpec((tk, tn), lambda i, j, k: (k, j))],
            out_specs=pl.BlockSpec((tm, tn), lambda i, j, k: (i, j)),
            scratch_shapes=[pltpu.VMEM((tm, tn), jnp.float32)]),
        compiler_params=_cparams(("parallel", "parallel", "arbitrary")),
    )(a, b)


# ----------------------------------------------------------------------------
# Fused 5-way low-rank mix: t1 (M, 5*TM) @ time_maa_w2 (5, TM, C) -> 5 x (M, C)
# in one pallas_call (no transpose / stack / per-slice launches).
# ----------------------------------------------------------------------------
def _mix5_kernel(t1_ref, w2_ref, o0, o1, o2, o3, o4, *, TM):
    outs = (o0, o1, o2, o3, o4)
    t1 = t1_ref[...]
    for i in range(5):                     # static unroll
        y = jnp.dot(t1[:, i * TM:(i + 1) * TM], w2_ref[i],
                    preferred_element_type=jnp.float32)
        outs[i][...] = y.astype(outs[i].dtype)


def pallas_mix5(t1, w2):
    M, K5 = t1.shape
    _, TM, C = w2.shape
    assert K5 == 5 * TM
    tm = _pick(M, (512, 256, 128, 64, 32, 16, 8))
    tn = _pick(C, (512, 256, 128))
    kern = functools.partial(_mix5_kernel, TM=TM)
    out_spec = pl.BlockSpec((tm, tn), lambda m, n: (m, n))
    outs = pl.pallas_call(
        kern,
        out_shape=tuple(jax.ShapeDtypeStruct((M, C), jnp.float32) for _ in range(5)),
        grid=(M // tm, C // tn),
        in_specs=[pl.BlockSpec((tm, 5 * TM), lambda m, n: (m, 0)),
                  pl.BlockSpec((5, TM, tn), lambda m, n: (0, 0, n))],
        out_specs=tuple(out_spec for _ in range(5)),
        compiler_params=_cparams(("parallel", "parallel")),
    )(t1.astype(jnp.bfloat16), w2.astype(jnp.bfloat16))
    return outs


# ----------------------------------------------------------------------------
# Chunked bidirectional-RWKV-6 WKV recurrence.
#   per head:  y[t,i] = sum_j r[t,j] * (S[j,i] + u[j]*k[t,j]*v[t,i])
#              S[j,i] <- k[t,j]*v[t,i] + exp(-exp(w[t,j])) * S[j,i]
# Chunked form: within a chunk of L steps everything is MXU matmuls with a
# strictly-causal decay-weighted mask; only the (N, N) state crosses chunks.
# The state is stored transposed ([i, j]) so all scalings stay lane-broadcasts.
# ----------------------------------------------------------------------------
def _wkv6_chunk_kernel(r_ref, k_ref, v_ref, w_ref, u_ref, o_ref, state_ref, *, L, N):
    @pl.when(pl.program_id(2) == 0)
    def _():
        state_ref[...] = jnp.zeros_like(state_ref)

    f32 = jnp.float32
    r = r_ref[...]                        # (L, N)
    k = k_ref[...]
    v = v_ref[...]
    u = u_ref[...]                        # (1, N)
    logd = -jnp.exp(w_ref[...])           # (L, N) log of per-step decay, <= 0

    # Cumulative log-decay via a small lower-triangular matmul (MXU) instead of
    # a per-timestep scan (hoists the transcendentals out of any serial loop).
    ti = lax.broadcasted_iota(jnp.int32, (L, L), 0)      # row = t
    si = lax.broadcasted_iota(jnp.int32, (L, L), 1)      # col = s
    tril_incl = (si <= ti).astype(f32)
    cw_incl = jnp.dot(tril_incl, logd, preferred_element_type=f32)   # sum_{s<=t}
    cw = cw_incl - logd                                              # sum_{s<t}
    d_chunk = jnp.exp(cw_incl[L - 1:L, :])                           # (1, N) whole-chunk decay

    rd = r * jnp.exp(cw)                              # r_t * prod_{p<t} d_p
    kd_in = k * jnp.exp(-cw_incl)                     # k_s / prod_{p<=s} d_p (intra-chunk)
    kd_st = k * jnp.exp(cw_incl[L - 1:L, :] - cw_incl)  # k_s * prod_{p>s} d_p (exponent <= 0)

    state = state_ref[...]                            # (N, N) = S^T, [i, j]

    # Cross-chunk contribution:  out[t,i] += sum_j rd[t,j] * S[j,i]
    out = lax.dot_general(rd, state, (((1,), (1,)), ((), ())),
                          preferred_element_type=f32)                 # (L, N)
    # Intra-chunk:  A[t,s] = <rd_t, kd_s>, strictly causal, then A @ v
    a_mat = lax.dot_general(rd, kd_in, (((1,), (1,)), ((), ())),
                            preferred_element_type=f32)               # (L, L)
    a_mat = jnp.where(si < ti, a_mat, 0.0)
    out = out + jnp.dot(a_mat, v, preferred_element_type=f32)
    # Current-token bonus:  (r_t . (u * k_t)) * v_t
    out = out + jnp.sum(r * u * k, axis=-1, keepdims=True) * v
    o_ref[...] = out.astype(o_ref.dtype)

    # State for the next chunk:  S^T <- d_chunk * S^T + v^T @ kd_st
    state_ref[...] = d_chunk * state + lax.dot_general(
        v, kd_st, (((0,), (0,)), ((), ())), preferred_element_type=f32)


def pallas_wkv6(r, k, v, w, u):
    # r, k, v, w: (B, H, T, N) float32 ; u: (H, 1, N) float32
    B, H, T, N = r.shape
    L = _pick_chunk(T)
    NC = T // L
    kern = functools.partial(_wkv6_chunk_kernel, L=L, N=N)
    spec = pl.BlockSpec((pl.Squeezed(), pl.Squeezed(), L, N),
                        lambda b, h, c: (b, h, c, 0))
    u_spec = pl.BlockSpec((pl.Squeezed(), 1, N), lambda b, h, c: (h, 0, 0))
    return pl.pallas_call(
        kern,
        out_shape=jax.ShapeDtypeStruct((B, H, T, N), jnp.float32),
        grid_spec=pltpu.PrefetchScalarGridSpec(
            num_scalar_prefetch=0,
            grid=(B, H, NC),
            in_specs=[spec, spec, spec, spec, u_spec],
            out_specs=spec,
            scratch_shapes=[pltpu.VMEM((N, N), jnp.float32)]),
        compiler_params=_cparams(("parallel", "parallel", "arbitrary")),
    )(r, k, v, w, u)


# ----------------------------------------------------------------------------
# Fused (o_fwd + o_bwd) * mask -> GroupNorm(n_head) -> * SiLU(g), row-tiled,
# lane-dense (tile_M, C) in/out.
# ----------------------------------------------------------------------------
def _gn_gate_kernel(of_ref, ob_ref, m_ref, g_ref, w_ref, b_ref, o_ref, *, H, N, eps):
    x = (of_ref[...] + ob_ref[...]) * m_ref[...]          # (tm, C)
    tm = x.shape[0]
    xg = x.reshape(tm, H, N)
    mean = jnp.mean(xg, axis=-1, keepdims=True)
    var = jnp.mean(jnp.square(xg - mean), axis=-1, keepdims=True)
    xn = ((xg - mean) * lax.rsqrt(var + eps)).reshape(tm, H * N)
    xn = xn * w_ref[...] + b_ref[...]                      # lane-dense affine
    g = g_ref[...]
    o_ref[...] = xn * (g * jax.nn.sigmoid(g))


def pallas_gn_gate(o_f, o_b, mask, g, ln_w, ln_b, *, H, N, eps):
    M, C = o_f.shape
    tm = _pick(M, (1024, 512, 256, 128, 64, 32, 16, 8))
    kern = functools.partial(_gn_gate_kernel, H=H, N=N, eps=float(eps))
    row_spec = pl.BlockSpec((tm, C), lambda i: (i, 0))
    vec_spec = pl.BlockSpec((1, C), lambda i: (0, 0))
    return pl.pallas_call(
        kern,
        out_shape=jax.ShapeDtypeStruct((M, C), jnp.float32),
        grid=(M // tm,),
        in_specs=[row_spec, row_spec,
                  pl.BlockSpec((tm, 1), lambda i: (i, 0)),
                  row_spec, vec_spec, vec_spec],
        out_specs=row_spec,
        compiler_params=_cparams(("parallel",)),
    )(o_f, o_b, mask, g, ln_w, ln_b)


# ----------------------------------------------------------------------------
# Parameter initialization (mirrors BiRWKV_Tmix_x060.__init__ deterministically).
# ----------------------------------------------------------------------------
def init_params(key, args, layer_id):
    n_embd = args["n_embd"]
    dim_att = args["dim_att"]
    head_size = args["head_size_a"]
    n_layer = args["n_layer"]
    n_head = dim_att // head_size

    ratio_0_to_1 = layer_id / (n_layer - 1)
    ratio_1_to_almost0 = 1.0 - layer_id / n_layer

    ddd = (jnp.arange(n_embd, dtype=jnp.float32) / n_embd)[None, None, :]
    p = {}
    p["time_maa_x"] = 1.0 - jnp.power(ddd, ratio_1_to_almost0)
    p["time_maa_w"] = 1.0 - jnp.power(ddd, ratio_1_to_almost0)
    p["time_maa_k"] = 1.0 - jnp.power(ddd, ratio_1_to_almost0)
    p["time_maa_v"] = 1.0 - (jnp.power(ddd, ratio_1_to_almost0) + 0.3 * ratio_0_to_1)
    p["time_maa_r"] = 1.0 - jnp.power(ddd, 0.5 * ratio_1_to_almost0)
    p["time_maa_g"] = 1.0 - jnp.power(ddd, 0.5 * ratio_1_to_almost0)

    TM = 32 * (2 if n_embd == 4096 else 1)   # TIME_MIX_EXTRA_DIM
    TD = 64 * (2 if n_embd == 4096 else 1)   # TIME_DECAY_EXTRA_DIM
    keys = jax.random.split(key, 10)
    p["time_maa_w1"] = jax.random.uniform(keys[0], (n_embd, TM * 5), minval=-1e-4, maxval=1e-4)
    p["time_maa_w2"] = jax.random.uniform(keys[1], (5, TM, n_embd), minval=-1e-4, maxval=1e-4)

    n = jnp.arange(dim_att, dtype=jnp.float32)
    decay_speed = -6.0 + 5.0 * (n / (dim_att - 1)) ** (0.7 + 1.3 * ratio_0_to_1)
    p["time_decay"] = decay_speed[None, None, :]
    p["time_decay_w1"] = jax.random.uniform(keys[2], (n_embd, TD), minval=-1e-4, maxval=1e-4)
    p["time_decay_w2"] = jax.random.uniform(keys[3], (TD, dim_att), minval=-1e-4, maxval=1e-4)

    zigzag = (((jnp.arange(dim_att) + 1) % 3) - 1).astype(jnp.float32) * 0.1
    tmp = ratio_0_to_1 * (1.0 - n / (dim_att - 1)) + zigzag
    p["time_faaaa"] = tmp.reshape(n_head, head_size)

    # Linear layers (bias=False).  Stored as (in, out): y = x @ W.
    scale = 0.1
    p["W_r"] = jax.random.normal(keys[4], (n_embd, dim_att)) * scale
    p["W_k"] = jax.random.normal(keys[5], (n_embd, dim_att)) * scale
    p["W_v"] = jax.random.normal(keys[6], (n_embd, dim_att)) * scale
    p["W_o"] = jax.random.normal(keys[7], (dim_att, n_embd)) * scale
    p["W_g"] = jax.random.normal(keys[8], (n_embd, dim_att)) * scale

    # GroupNorm affine params (PyTorch default init).
    p["ln_w"] = jnp.ones((dim_att,), jnp.float32)
    p["ln_b"] = jnp.zeros((dim_att,), jnp.float32)
    return p


# ----------------------------------------------------------------------------
# Forward pass.
# ----------------------------------------------------------------------------
def birwkv_tmix_forward(params, x, rev_idx, mask, *, n_head, head_size, head_size_divisor):
    B, T, C = x.shape
    H, N = n_head, head_size
    M = B * T
    flat = lambda a: a.reshape(M, -1)

    # ---- jit_func: token-shift mixing ----
    # time_shift = ZeroPad2d((0,0,1,-1)): shift right along T, zero at t=0.
    x_shift = jnp.pad(x, ((0, 0), (1, 0), (0, 0)))[:, :T, :]
    xx = x_shift - x
    xxx = x + xx * params["time_maa_x"]

    t1 = pallas_matmul(flat(xxx), params["time_maa_w1"], activation="tanh")  # (M, 5*TM)
    mw, mk, mv, mr, mg = pallas_mix5(t1, params["time_maa_w2"])              # 5 x (M, C)
    to_btc = lambda a: a.reshape(B, T, C)
    mw, mk, mv, mr, mg = map(to_btc, (mw, mk, mv, mr, mg))

    xw = x + xx * (params["time_maa_w"] + mw)
    xk = x + xx * (params["time_maa_k"] + mk)
    xv = x + xx * (params["time_maa_v"] + mv)
    xr = x + xx * (params["time_maa_r"] + mr)
    xg = x + xx * (params["time_maa_g"] + mg)

    r = pallas_matmul(flat(xr), params["W_r"])
    k = pallas_matmul(flat(xk), params["W_k"])
    v = pallas_matmul(flat(xv), params["W_v"])
    g_pre = pallas_matmul(flat(xg), params["W_g"])      # SiLU applied inside GN kernel

    ww = pallas_matmul(
        pallas_matmul(flat(xw), params["time_decay_w1"], activation="tanh"),
        params["time_decay_w2"])
    w = params["time_decay"].reshape(1, -1) + ww        # (M, dim_att)

    u = params["time_faaaa"].reshape(H, 1, N)

    to_bhtn = lambda a: a.reshape(B, T, H, N).transpose(0, 2, 1, 3)
    from_bhtn = lambda a: a.transpose(0, 2, 1, 3).reshape(B, T, C)

    # ---- forward-direction WKV ----
    o_f = pallas_wkv6(*(to_bhtn(a) for a in (r, k, v, w)), u)      # (B, H, T, N)

    # ---- reversed-direction WKV ----
    # TODO(synk): for a plain flip rev_idx the gather could be fused into the WKV
    # kernel; kept outside to support arbitrary per-batch rev_idx permutations.
    idx = rev_idx[:, :, None]
    rev = lambda a: jnp.take_along_axis(a, jnp.broadcast_to(idx, a.shape), axis=1)
    o_b_rev = pallas_wkv6(*(to_bhtn(rev(to_btc(a))) for a in (r, k, v, w)), u)
    o_b = rev(from_bhtn(o_b_rev))                                  # back to original order
    o_f2 = from_bhtn(o_f)

    # ---- jit_func_2: (o_f + o_b) * mask -> GroupNorm(H) -> * SiLU(g) -> W_o ----
    eps = 1e-5 * head_size_divisor ** 2
    gn = pallas_gn_gate(
        o_f2.reshape(M, C), o_b.reshape(M, C), mask.reshape(M, 1).astype(jnp.float32),
        g_pre, params["ln_w"].reshape(1, -1), params["ln_b"].reshape(1, -1),
        H=H, N=N, eps=eps)
    out = pallas_matmul(gn, params["W_o"]).reshape(B, T, C)
    return out


# ----------------------------------------------------------------------------
if __name__ == "__main__":
    args = dict(n_embd=32, dim_att=32, head_size_a=8, n_layer=4, head_size_divisor=8)
    layer_id = 1
    n_head = args["dim_att"] // args["head_size_a"]

    B, T, C = 2, 8, args["n_embd"]
    key = jax.random.PRNGKey(0)
    k_param, k_x = jax.random.split(key)

    params = init_params(k_param, args, layer_id)
    x = jax.random.normal(k_x, (B, T, C), dtype=jnp.float32)
    rev_idx = jnp.broadcast_to(jnp.arange(T - 1, -1, -1, dtype=jnp.int32)[None, :], (B, T))
    mask = jnp.ones((B, T), dtype=jnp.float32)

    fwd = jax.jit(functools.partial(
        birwkv_tmix_forward,
        n_head=n_head, head_size=args["head_size_a"],
        head_size_divisor=args["head_size_divisor"]))

    out = fwd(params, x, rev_idx, mask)
    out = jax.block_until_ready(out)
    assert out.shape == (B, T, C)
    assert bool(jnp.all(jnp.isfinite(out)))
    print("KERNEL_OK")
</pallas_src>

<mosaic_0001>
module attributes {stable_mosaic.version = 11 : i64} {
  func.func @_matmul_kernel(%arg0: i32, %arg1: i32, %arg2: i32, %arg3: memref<16x32xbf16, #tpu.memory_space<vmem>>, %arg4: memref<32x160xbf16, #tpu.memory_space<vmem>>, %arg5: memref<16x160xf32, #tpu.memory_space<vmem>>, %arg6: memref<16x160xf32, #tpu.memory_space<vmem>>) attributes {dimension_semantics = [#tpu.dimension_semantics<parallel>, #tpu.dimension_semantics<parallel>, #tpu.dimension_semantics<arbitrary>], iteration_bounds = array<i64: 1, 1, 1>, scalar_prefetch = 0 : i64, scratch_operands = 1 : i64, tpu.core_type = #tpu.core_type<tc>, window_params = [{transform_indices = @transform_0, window_bounds = array<i64: 16, 32>}, {transform_indices = @transform_1, window_bounds = array<i64: 32, 160>}, {transform_indices = @transform_2, window_bounds = array<i64: 16, 160>}]} {
    %c0_i32 = arith.constant 0 : i32
    %0 = arith.cmpi eq, %arg2, %c0_i32 : i32
    %1 = arith.extui %0 : i1 to i32
    %c0_i32_0 = arith.constant 0 : i32
    %2 = arith.cmpi ne, %1, %c0_i32_0 : i32
    scf.if %2 {
      %cst_10 = arith.constant 0.000000e+00 : f32
      %12 = vector.broadcast %cst_10 : f32 to vector<16x160xf32>
      %c0_11 = arith.constant 0 : index
      %c0_12 = arith.constant 0 : index
      %13 = vector.load %arg6[%c0_11, %c0_12] : memref<16x160xf32, #tpu.memory_space<vmem>>, vector<16x160xf32>
      tpu.vector_store %arg6[%c0_11, %c0_12], %12 {strides = array<i32>} : memref<16x160xf32, #tpu.memory_space<vmem>>, vector<16x160xf32>,
    } else {
    }
    %c0 = arith.constant 0 : index
    %c0_1 = arith.constant 0 : index
    %3 = vector.load %arg6[%c0, %c0_1] : memref<16x160xf32, #tpu.memory_space<vmem>>, vector<16x160xf32>
    %c0_2 = arith.constant 0 : index
    %c0_3 = arith.constant 0 : index
    %4 = vector.load %arg3[%c0_2, %c0_3] : memref<16x32xbf16, #tpu.memory_space<vmem>>, vector<16x32xbf16>
    %c0_4 = arith.constant 0 : index
    %c0_5 = arith.constant 0 : index
    %5 = vector.load %arg4[%c0_4, %c0_5] : memref<32x160xbf16, #tpu.memory_space<vmem>>, vector<32x160xbf16>
    %cst = arith.constant dense<0.000000e+00> : vector<16x160xf32>
    %6 = tpu.matmul %4, %5, %cst {dimension_numbers = #tpu.dot_dimension_numbers<[1], [0], [0], [1], [0, 0, 1, 1], [], []>} : vector<16x32xbf16>, vector<32x160xbf16>, vector<16x160xf32> -> vector<16x160xf32>
    %7 = arith.addf %3, %6 : vector<16x160xf32>
    %c0_6 = arith.constant 0 : index
    %c0_7 = arith.constant 0 : index
    %8 = vector.load %arg6[%c0_6, %c0_7] : memref<16x160xf32, #tpu.memory_space<vmem>>, vector<16x160xf32>
    tpu.vector_store %arg6[%c0_6, %c0_7], %7 {strides = array<i32>} : memref<16x160xf32, #tpu.memory_space<vmem>>, vector<16x160xf32>,
    %c0_i32_8 = arith.constant 0 : i32
    %9 = arith.cmpi eq, %arg2, %c0_i32_8 : i32
    %10 = arith.extui %9 : i1 to i32
    %c0_i32_9 = arith.constant 0 : i32
    %11 = arith.cmpi ne, %10, %c0_i32_9 : i32
    scf.if %11 {
      %c0_10 = arith.constant 0 : index
      %c0_11 = arith.constant 0 : index
      %12 = vector.load %arg6[%c0_10, %c0_11] : memref<16x160xf32, #tpu.memory_space<vmem>>, vector<16x160xf32>
      %13 = math.tanh %12 : vector<16x160xf32>
      %c0_12 = arith.constant 0 : index
      %c0_13 = arith.constant 0 : index
      %14 = vector.load %arg5[%c0_12, %c0_13] : memref<16x160xf32, #tpu.memory_space<vmem>>, vector<16x160xf32>
      tpu.vector_store %arg5[%c0_12, %c0_13], %13 {strides = array<i32>} : memref<16x160xf32, #tpu.memory_space<vmem>>, vector<16x160xf32>,
    } else {
    }
    return
  }
  func.func @transform_0(%arg0: i32, %arg1: i32, %arg2: i32) -> (i32, i32) {
    %c0_i32 = arith.constant 0 : i32
    return %arg0, %arg2 : i32, i32
  }
  func.func @transform_1(%arg0: i32, %arg1: i32, %arg2: i32) -> (i32, i32) {
    %c0_i32 = arith.constant 0 : i32
    return %arg2, %arg1 : i32, i32
  }
  func.func @transform_2(%arg0: i32, %arg1: i32, %arg2: i32) -> (i32, i32) {
    %c0_i32 = arith.constant 0 : i32
    return %arg0, %arg1 : i32, i32
  }
}

module attributes {stable_mosaic.version = 11 : i64} {
  func.func @_mix5_kernel(%arg0: i32, %arg1: i32, %arg2: memref<16x160xbf16, #tpu.memory_space<vmem>>, %arg3: memref<5x32x32xbf16, #tpu.memory_space<vmem>>, %arg4: memref<16x32xf32, #tpu.memory_space<vmem>>, %arg5: memref<16x32xf32, #tpu.memory_space<vmem>>, %arg6: memref<16x32xf32, #tpu.memory_space<vmem>>, %arg7: memref<16x32xf32, #tpu.memory_space<vmem>>, %arg8: memref<16x32xf32, #tpu.memory_space<vmem>>) attributes {dimension_semantics = [#tpu.dimension_semantics<parallel>, #tpu.dimension_semantics<parallel>], iteration_bounds = array<i64: 1, 1>, scalar_prefetch = 0 : i64, scratch_operands = 0 : i64, tpu.core_type = #tpu.core_type<tc>, window_params = [{transform_indices = @transform_0, window_bounds = array<i64: 16, 160>}, {transform_indices = @transform_1, window_bounds = array<i64: 5, 32, 32>}, {transform_indices = @transform_2, window_bounds = array<i64: 16, 32>}, {transform_indices = @transform_3, window_bounds = array<i64: 16, 32>}, {transform_indices = @transform_4, window_bounds = array<i64: 16, 32>}, {transform_indices = @transform_5, window_bounds = array<i64: 16, 32>}, {transform_indices = @transform_6, window_bounds = array<i64: 16, 32>}]} {
    %c0 = arith.constant 0 : index
    %c0_0 = arith.constant 0 : index
    %0 = vector.load %arg2[%c0, %c0_0] : memref<16x160xbf16, #tpu.memory_space<vmem>>, vector<16x160xbf16>
    %1 = vector.extract_strided_slice %0 {offsets = [0, 0], sizes = [16, 32], strides = [1, 1]} : vector<16x160xbf16> to vector<16x32xbf16>
    %c0_1 = arith.constant 0 : index
    %c0_2 = arith.constant 0 : index
    %c0_3 = arith.constant 0 : index
    %2 = vector.load %arg3[%c0_1, %c0_2, %c0_3] : memref<5x32x32xbf16, #tpu.memory_space<vmem>>, vector<1x32x32xbf16>
    %3 = vector.shape_cast %2 : vector<1x32x32xbf16> to vector<32x32xbf16>
    %cst = arith.constant dense<0.000000e+00> : vector<16x32xf32>
    %4 = tpu.matmul %1, %3, %cst {dimension_numbers = #tpu.dot_dimension_numbers<[1], [0], [0], [1], [0, 0, 1, 1], [], []>} : vector<16x32xbf16>, vector<32x32xbf16>, vector<16x32xf32> -> vector<16x32xf32>
    %c0_4 = arith.constant 0 : index
    %c0_5 = arith.constant 0 : index
    %5 = vector.load %arg4[%c0_4, %c0_5] : memref<16x32xf32, #tpu.memory_space<vmem>>, vector<16x32xf32>
    tpu.vector_store %arg4[%c0_4, %c0_5], %4 {strides = array<i32>} : memref<16x32xf32, #tpu.memory_space<vmem>>, vector<16x32xf32>,
    %6 = vector.extract_strided_slice %0 {offsets = [0, 32], sizes = [16, 32], strides = [1, 1]} : vector<16x160xbf16> to vector<16x32xbf16>
    %c1 = arith.constant 1 : index
    %c0_6 = arith.constant 0 : index
    %c0_7 = arith.constant 0 : index
    %7 = vector.load %arg3[%c1, %c0_6, %c0_7] : memref<5x32x32xbf16, #tpu.memory_space<vmem>>, vector<1x32x32xbf16>
    %8 = vector.shape_cast %7 : vector<1x32x32xbf16> to vector<32x32xbf16>
    %cst_8 = arith.constant dense<0.000000e+00> : vector<16x32xf32>
    %9 = tpu.matmul %6, %8, %cst_8 {dimension_numbers = #tpu.dot_dimension_numbers<[1], [0], [0], [1], [0, 0, 1, 1], [], []>} : vector<16x32xbf16>, vector<32x32xbf16>, vector<16x32xf32> -> vector<16x32xf32>
    %c0_9 = arith.constant 0 : index
    %c0_10 = arith.constant 0 : index
    %10 = vector.load %arg5[%c0_9, %c0_10] : memref<16x32xf32, #tpu.memory_space<vmem>>, vector<16x32xf32>
    tpu.vector_store %arg5[%c0_9, %c0_10], %9 {strides = array<i32>} : memref<16x32xf32, #tpu.memory_space<vmem>>, vector<16x32xf32>,
    %11 = vector.extract_strided_slice %0 {offsets = [0, 64], sizes = [16, 32], strides = [1, 1]} : vector<16x160xbf16> to vector<16x32xbf16>
    %c2 = arith.constant 2 : index
    %c0_11 = arith.constant 0 : index
    %c0_12 = arith.constant 0 : index
    %12 = vector.load %arg3[%c2, %c0_11, %c0_12] : memref<5x32x32xbf16, #tpu.memory_space<vmem>>, vector<1x32x32xbf16>
    %13 = vector.shape_cast %12 : vector<1x32x32xbf16> to vector<32x32xbf16>
    %cst_13 = arith.constant dense<0.000000e+00> : vector<16x32xf32>
    %14 = tpu.matmul %11, %13, %cst_13 {dimension_numbers = #tpu.dot_dimension_numbers<[1], [0], [0], [1], [0, 0, 1, 1], [], []>} : vector<16x32xbf16>, vector<32x32xbf16>, vector<16x32xf32> -> vector<16x32xf32>
    %c0_14 = arith.constant 0 : index
    %c0_15 = arith.constant 0 : index
    %15 = vector.load %arg6[%c0_14, %c0_15] : memref<16x32xf32, #tpu.memory_space<vmem>>, vector<16x32xf32>
    tpu.vector_store %arg6[%c0_14, %c0_15], %14 {strides = array<i32>} : memref<16x32xf32, #tpu.memory_space<vmem>>, vector<16x32xf32>,
    %16 = vector.extract_strided_slice %0 {offsets = [0, 96], sizes = [16, 32], strides = [1, 1]} : vector<16x160xbf16> to vector<16x32xbf16>
    %c3 = arith.constant 3 : index
    %c0_16 = arith.constant 0 : index
    %c0_17 = arith.constant 0 : index
    %17 = vector.load %arg3[%c3, %c0_16, %c0_17] : memref<5x32x32xbf16, #tpu.memory_space<vmem>>, vector<1x32x32xbf16>
    %18 = vector.shape_cast %17 : vector<1x32x32xbf16> to vector<32x32xbf16>
    %cst_18 = arith.constant dense<0.000000e+00> : vector<16x32xf32>
    %19 = tpu.matmul %16, %18, %cst_18 {dimension_numbers = #tpu.dot_dimension_numbers<[1], [0], [0], [1], [0, 0, 1, 1], [], []>} : vector<16x32xbf16>, vector<32x32xbf16>, vector<16x32xf32> -> vector<16x32xf32>
    %c0_19 = arith.constant 0 : index
    %c0_20 = arith.constant 0 : index
    %20 = vector.load %arg7[%c0_19, %c0_20] : memref<16x32xf32, #tpu.memory_space<vmem>>, vector<16x32xf32>
    tpu.vector_store %arg7[%c0_19, %c0_20], %19 {strides = array<i32>} : memref<16x32xf32, #tpu.memory_space<vmem>>, vector<16x32xf32>,
    %21 = vector.extract_strided_slice %0 {offsets = [0, 128], sizes = [16, 32], strides = [1, 1]} : vector<16x160xbf16> to vector<16x32xbf16>
    %c4 = arith.constant 4 : index
    %c0_21 = arith.constant 0 : index
    %c0_22 = arith.constant 0 : index
    %22 = vector.load %arg3[%c4, %c0_21, %c0_22] : memref<5x32x32xbf16, #tpu.memory_space<vmem>>, vector<1x32x32xbf16>
    %23 = vector.shape_cast %22 : vector<1x32x32xbf16> to vector<32x32xbf16>
    %cst_23 = arith.constant dense<0.000000e+00> : vector<16x32xf32>
    %24 = tpu.matmul %21, %23, %cst_23 {dimension_numbers = #tpu.dot_dimension_numbers<[1], [0], [0], [1], [0, 0, 1, 1], [], []>} : vector<16x32xbf16>, vector<32x32xbf16>, vector<16x32xf32> -> vector<16x32xf32>
    %c0_24 = arith.constant 0 : index
    %c0_25 = arith.constant 0 : index
    %25 = vector.load %arg8[%c0_24, %c0_25] : memref<16x32xf32, #tpu.memory_space<vmem>>, vector<16x32xf32>
    tpu.vector_store %arg8[%c0_24, %c0_25], %24 {strides = array<i32>} : memref<16x32xf32, #tpu.memory_space<vmem>>, vector<16x32xf32>,
    return
  }
  func.func @transform_0(%arg0: i32, %arg1: i32) -> (i32, i32) {
    %c0_i32 = arith.constant 0 : i32
    %c0_i32_0 = arith.constant 0 : i32
    return %arg0, %c0_i32 : i32, i32
  }
  func.func @transform_1(%arg0: i32, %arg1: i32) -> (i32, i32, i32) {
    %c0_i32 = arith.constant 0 : i32
    %c0_i32_0 = arith.constant 0 : i32
    %c0_i32_1 = arith.constant 0 : i32
    return %c0_i32, %c0_i32_0, %arg1 : i32, i32, i32
  }
  func.func @transform_2(%arg0: i32, %arg1: i32) -> (i32, i32) {
    %c0_i32 = arith.constant 0 : i32
    return %arg0, %arg1 : i32, i32
  }
  func.func @transform_3(%arg0: i32, %arg1: i32) -> (i32, i32) {
    %c0_i32 = arith.constant 0 : i32
    return %arg0, %arg1 : i32, i32
  }
  func.func @transform_4(%arg0: i32, %arg1: i32) -> (i32, i32) {
    %c0_i32 = arith.constant 0 : i32
    return %arg0, %arg1 : i32, i32
  }
  func.func @transform_5(%arg0: i32, %arg1: i32) -> (i32, i32) {
    %c0_i32 = arith.constant 0 : i32
    return %arg0, %arg1 : i32, i32
  }
  func.func @transform_6(%arg0: i32, %arg1: i32) -> (i32, i32) {
    %c0_i32 = arith.constant 0 : i32
    return %arg0, %arg1 : i32, i32
  }
}

module attributes {stable_mosaic.version = 11 : i64} {
  func.func @_matmul_kernel(%arg0: i32, %arg1: i32, %arg2: i32, %arg3: memref<16x32xbf16, #tpu.memory_space<vmem>>, %arg4: memref<32x32xbf16, #tpu.memory_space<vmem>>, %arg5: memref<16x32xf32, #tpu.memory_space<vmem>>, %arg6: memref<16x32xf32, #tpu.memory_space<vmem>>) attributes {dimension_semantics = [#tpu.dimension_semantics<parallel>, #tpu.dimension_semantics<parallel>, #tpu.dimension_semantics<arbitrary>], iteration_bounds = array<i64: 1, 1, 1>, scalar_prefetch = 0 : i64, scratch_operands = 1 : i64, tpu.core_type = #tpu.core_type<tc>, window_params = [{transform_indices = @transform_0, window_bounds = array<i64: 16, 32>}, {transform_indices = @transform_1, window_bounds = array<i64: 32, 32>}, {transform_indices = @transform_2, window_bounds = array<i64: 16, 32>}]} {
    %c0_i32 = arith.constant 0 : i32
    %0 = arith.cmpi eq, %arg2, %c0_i32 : i32
    %1 = arith.extui %0 : i1 to i32
    %c0_i32_0 = arith.constant 0 : i32
    %2 = arith.cmpi ne, %1, %c0_i32_0 : i32
    scf.if %2 {
      %cst_10 = arith.constant 0.000000e+00 : f32
      %12 = vector.broadcast %cst_10 : f32 to vector<16x32xf32>
      %c0_11 = arith.constant 0 : index
      %c0_12 = arith.constant 0 : index
      %13 = vector.load %arg6[%c0_11, %c0_12] : memref<16x32xf32, #tpu.memory_space<vmem>>, vector<16x32xf32>
      tpu.vector_store %arg6[%c0_11, %c0_12], %12 {strides = array<i32>} : memref<16x32xf32, #tpu.memory_space<vmem>>, vector<16x32xf32>,
    } else {
    }
    %c0 = arith.constant 0 : index
    %c0_1 = arith.constant 0 : index
    %3 = vector.load %arg6[%c0, %c0_1] : memref<16x32xf32, #tpu.memory_space<vmem>>, vector<16x32xf32>
    %c0_2 = arith.constant 0 : index
    %c0_3 = arith.constant 0 : index
    %4 = vector.load %arg3[%c0_2, %c0_3] : memref<16x32xbf16, #tpu.memory_space<vmem>>, vector<16x32xbf16>
    %c0_4 = arith.constant 0 : index
    %c0_5 = arith.constant 0 : index
    %5 = vector.load %arg4[%c0_4, %c0_5] : memref<32x32xbf16, #tpu.memory_space<vmem>>, vector<32x32xbf16>
    %cst = arith.constant dense<0.000000e+00> : vector<16x32xf32>
    %6 = tpu.matmul %4, %5, %cst {dimension_numbers = #tpu.dot_dimension_numbers<[1], [0], [0], [1], [0, 0, 1, 1], [], []>} : vector<16x32xbf16>, vector<32x32xbf16>, vector<16x32xf32> -> vector<16x32xf32>
    %7 = arith.addf %3, %6 : vector<16x32xf32>
    %c0_6 = arith.constant 0 : index
    %c0_7 = arith.constant 0 : index
    %8 = vector.load %arg6[%c0_6, %c0_7] : memref<16x32xf32, #tpu.memory_space<vmem>>, vector<16x32xf32>
    tpu.vector_store %arg6[%c0_6, %c0_7], %7 {strides = array<i32>} : memref<16x32xf32, #tpu.memory_space<vmem>>, vector<16x32xf32>,
    %c0_i32_8 = arith.constant 0 : i32
    %9 = arith.cmpi eq, %arg2, %c0_i32_8 : i32
    %10 = arith.extui %9 : i1 to i32
    %c0_i32_9 = arith.constant 0 : i32
    %11 = arith.cmpi ne, %10, %c0_i32_9 : i32
    scf.if %11 {
      %c0_10 = arith.constant 0 : index
      %c0_11 = arith.constant 0 : index
      %12 = vector.load %arg6[%c0_10, %c0_11] : memref<16x32xf32, #tpu.memory_space<vmem>>, vector<16x32xf32>
      %c0_12 = arith.constant 0 : index
      %c0_13 = arith.constant 0 : index
      %13 = vector.load %arg5[%c0_12, %c0_13] : memref<16x32xf32, #tpu.memory_space<vmem>>, vector<16x32xf32>
      tpu.vector_store %arg5[%c0_12, %c0_13], %12 {strides = array<i32>} : memref<16x32xf32, #tpu.memory_space<vmem>>, vector<16x32xf32>,
    } else {
    }
    return
  }
  func.func @transform_0(%arg0: i32, %arg1: i32, %arg2: i32) -> (i32, i32) {
    %c0_i32 = arith.constant 0 : i32
    return %arg0, %arg2 : i32, i32
  }
  func.func @transform_1(%arg0: i32, %arg1: i32, %arg2: i32) -> (i32, i32) {
    %c0_i32 = arith.constant 0 : i32
    return %arg2, %arg1 : i32, i32
  }
  func.func @transform_2(%arg0: i32, %arg1: i32, %arg2: i32) -> (i32, i32) {
    %c0_i32 = arith.constant 0 : i32
    return %arg0, %arg1 : i32, i32
  }
}

module attributes {stable_mosaic.version = 11 : i64} {
  func.func @_matmul_kernel(%arg0: i32, %arg1: i32, %arg2: i32, %arg3: memref<16x32xbf16, #tpu.memory_space<vmem>>, %arg4: memref<32x64xbf16, #tpu.memory_space<vmem>>, %arg5: memref<16x64xf32, #tpu.memory_space<vmem>>, %arg6: memref<16x64xf32, #tpu.memory_space<vmem>>) attributes {dimension_semantics = [#tpu.dimension_semantics<parallel>, #tpu.dimension_semantics<parallel>, #tpu.dimension_semantics<arbitrary>], iteration_bounds = array<i64: 1, 1, 1>, scalar_prefetch = 0 : i64, scratch_operands = 1 : i64, tpu.core_type = #tpu.core_type<tc>, window_params = [{transform_indices = @transform_0, window_bounds = array<i64: 16, 32>}, {transform_indices = @transform_1, window_bounds = array<i64: 32, 64>}, {transform_indices = @transform_2, window_bounds = array<i64: 16, 64>}]} {
    %c0_i32 = arith.constant 0 : i32
    %0 = arith.cmpi eq, %arg2, %c0_i32 : i32
    %1 = arith.extui %0 : i1 to i32
    %c0_i32_0 = arith.constant 0 : i32
    %2 = arith.cmpi ne, %1, %c0_i32_0 : i32
    scf.if %2 {
      %cst_10 = arith.constant 0.000000e+00 : f32
      %12 = vector.broadcast %cst_10 : f32 to vector<16x64xf32>
      %c0_11 = arith.constant 0 : index
      %c0_12 = arith.constant 0 : index
      %13 = vector.load %arg6[%c0_11, %c0_12] : memref<16x64xf32, #tpu.memory_space<vmem>>, vector<16x64xf32>
      tpu.vector_store %arg6[%c0_11, %c0_12], %12 {strides = array<i32>} : memref<16x64xf32, #tpu.memory_space<vmem>>, vector<16x64xf32>,
    } else {
    }
    %c0 = arith.constant 0 : index
    %c0_1 = arith.constant 0 : index
    %3 = vector.load %arg6[%c0, %c0_1] : memref<16x64xf32, #tpu.memory_space<vmem>>, vector<16x64xf32>
    %c0_2 = arith.constant 0 : index
    %c0_3 = arith.constant 0 : index
    %4 = vector.load %arg3[%c0_2, %c0_3] : memref<16x32xbf16, #tpu.memory_space<vmem>>, vector<16x32xbf16>
    %c0_4 = arith.constant 0 : index
    %c0_5 = arith.constant 0 : index
    %5 = vector.load %arg4[%c0_4, %c0_5] : memref<32x64xbf16, #tpu.memory_space<vmem>>, vector<32x64xbf16>
    %cst = arith.constant dense<0.000000e+00> : vector<16x64xf32>
    %6 = tpu.matmul %4, %5, %cst {dimension_numbers = #tpu.dot_dimension_numbers<[1], [0], [0], [1], [0, 0, 1, 1], [], []>} : vector<16x32xbf16>, vector<32x64xbf16>, vector<16x64xf32> -> vector<16x64xf32>
    %7 = arith.addf %3, %6 : vector<16x64xf32>
    %c0_6 = arith.constant 0 : index
    %c0_7 = arith.constant 0 : index
    %8 = vector.load %arg6[%c0_6, %c0_7] : memref<16x64xf32, #tpu.memory_space<vmem>>, vector<16x64xf32>
    tpu.vector_store %arg6[%c0_6, %c0_7], %7 {strides = array<i32>} : memref<16x64xf32, #tpu.memory_space<vmem>>, vector<16x64xf32>,
    %c0_i32_8 = arith.constant 0 : i32
    %9 = arith.cmpi eq, %arg2, %c0_i32_8 : i32
    %10 = arith.extui %9 : i1 to i32
    %c0_i32_9 = arith.constant 0 : i32
    %11 = arith.cmpi ne, %10, %c0_i32_9 : i32
    scf.if %11 {
      %c0_10 = arith.constant 0 : index
      %c0_11 = arith.constant 0 : index
      %12 = vector.load %arg6[%c0_10, %c0_11] : memref<16x64xf32, #tpu.memory_space<vmem>>, vector<16x64xf32>
      %13 = math.tanh %12 : vector<16x64xf32>
      %c0_12 = arith.constant 0 : index
      %c0_13 = arith.constant 0 : index
      %14 = vector.load %arg5[%c0_12, %c0_13] : memref<16x64xf32, #tpu.memory_space<vmem>>, vector<16x64xf32>
      tpu.vector_store %arg5[%c0_12, %c0_13], %13 {strides = array<i32>} : memref<16x64xf32, #tpu.memory_space<vmem>>, vector<16x64xf32>,
    } else {
    }
    return
  }
  func.func @transform_0(%arg0: i32, %arg1: i32, %arg2: i32) -> (i32, i32) {
    %c0_i32 = arith.constant 0 : i32
    return %arg0, %arg2 : i32, i32
  }
  func.func @transform_1(%arg0: i32, %arg1: i32, %arg2: i32) -> (i32, i32) {
    %c0_i32 = arith.constant 0 : i32
    return %arg2, %arg1 : i32, i32
  }
  func.func @transform_2(%arg0: i32, %arg1: i32, %arg2: i32) -> (i32, i32) {
    %c0_i32 = arith.constant 0 : i32
    return %arg0, %arg1 : i32, i32
  }
}

module attributes {stable_mosaic.version = 11 : i64} {
  func.func @_matmul_kernel(%arg0: i32, %arg1: i32, %arg2: i32, %arg3: memref<16x64xbf16, #tpu.memory_space<vmem>>, %arg4: memref<64x32xbf16, #tpu.memory_space<vmem>>, %arg5: memref<16x32xf32, #tpu.memory_space<vmem>>, %arg6: memref<16x32xf32, #tpu.memory_space<vmem>>) attributes {dimension_semantics = [#tpu.dimension_semantics<parallel>, #tpu.dimension_semantics<parallel>, #tpu.dimension_semantics<arbitrary>], iteration_bounds = array<i64: 1, 1, 1>, scalar_prefetch = 0 : i64, scratch_operands = 1 : i64, tpu.core_type = #tpu.core_type<tc>, window_params = [{transform_indices = @transform_0, window_bounds = array<i64: 16, 64>}, {transform_indices = @transform_1, window_bounds = array<i64: 64, 32>}, {transform_indices = @transform_2, window_bounds = array<i64: 16, 32>}]} {
    %c0_i32 = arith.constant 0 : i32
    %0 = arith.cmpi eq, %arg2, %c0_i32 : i32
    %1 = arith.extui %0 : i1 to i32
    %c0_i32_0 = arith.constant 0 : i32
    %2 = arith.cmpi ne, %1, %c0_i32_0 : i32
    scf.if %2 {
      %cst_10 = arith.constant 0.000000e+00 : f32
      %12 = vector.broadcast %cst_10 : f32 to vector<16x32xf32>
      %c0_11 = arith.constant 0 : index
      %c0_12 = arith.constant 0 : index
      %13 = vector.load %arg6[%c0_11, %c0_12] : memref<16x32xf32, #tpu.memory_space<vmem>>, vector<16x32xf32>
      tpu.vector_store %arg6[%c0_11, %c0_12], %12 {strides = array<i32>} : memref<16x32xf32, #tpu.memory_space<vmem>>, vector<16x32xf32>,
    } else {
    }
    %c0 = arith.constant 0 : index
    %c0_1 = arith.constant 0 : index
    %3 = vector.load %arg6[%c0, %c0_1] : memref<16x32xf32, #tpu.memory_space<vmem>>, vector<16x32xf32>
    %c0_2 = arith.constant 0 : index
    %c0_3 = arith.constant 0 : index
    %4 = vector.load %arg3[%c0_2, %c0_3] : memref<16x64xbf16, #tpu.memory_space<vmem>>, vector<16x64xbf16>
    %c0_4 = arith.constant 0 : index
    %c0_5 = arith.constant 0 : index
    %5 = vector.load %arg4[%c0_4, %c0_5] : memref<64x32xbf16, #tpu.memory_space<vmem>>, vector<64x32xbf16>
    %cst = arith.constant dense<0.000000e+00> : vector<16x32xf32>
    %6 = tpu.matmul %4, %5, %cst {dimension_numbers = #tpu.dot_dimension_numbers<[1], [0], [0], [1], [0, 0, 1, 1], [], []>} : vector<16x64xbf16>, vector<64x32xbf16>, vector<16x32xf32> -> vector<16x32xf32>
    %7 = arith.addf %3, %6 : vector<16x32xf32>
    %c0_6 = arith.constant 0 : index
    %c0_7 = arith.constant 0 : index
    %8 = vector.load %arg6[%c0_6, %c0_7] : memref<16x32xf32, #tpu.memory_space<vmem>>, vector<16x32xf32>
    tpu.vector_store %arg6[%c0_6, %c0_7], %7 {strides = array<i32>} : memref<16x32xf32, #tpu.memory_space<vmem>>, vector<16x32xf32>,
    %c0_i32_8 = arith.constant 0 : i32
    %9 = arith.cmpi eq, %arg2, %c0_i32_8 : i32
    %10 = arith.extui %9 : i1 to i32
    %c0_i32_9 = arith.constant 0 : i32
    %11 = arith.cmpi ne, %10, %c0_i32_9 : i32
    scf.if %11 {
      %c0_10 = arith.constant 0 : index
      %c0_11 = arith.constant 0 : index
      %12 = vector.load %arg6[%c0_10, %c0_11] : memref<16x32xf32, #tpu.memory_space<vmem>>, vector<16x32xf32>
      %c0_12 = arith.constant 0 : index
      %c0_13 = arith.constant 0 : index
      %13 = vector.load %arg5[%c0_12, %c0_13] : memref<16x32xf32, #tpu.memory_space<vmem>>, vector<16x32xf32>
      tpu.vector_store %arg5[%c0_12, %c0_13], %12 {strides = array<i32>} : memref<16x32xf32, #tpu.memory_space<vmem>>, vector<16x32xf32>,
    } else {
    }
    return
  }
  func.func @transform_0(%arg0: i32, %arg1: i32, %arg2: i32) -> (i32, i32) {
    %c0_i32 = arith.constant 0 : i32
    return %arg0, %arg2 : i32, i32
  }
  func.func @transform_1(%arg0: i32, %arg1: i32, %arg2: i32) -> (i32, i32) {
    %c0_i32 = arith.constant 0 : i32
    return %arg2, %arg1 : i32, i32
  }
  func.func @transform_2(%arg0: i32, %arg1: i32, %arg2: i32) -> (i32, i32) {
    %c0_i32 = arith.constant 0 : i32
    return %arg0, %arg1 : i32, i32
  }
}

module attributes {stable_mosaic.version = 11 : i64} {
  func.func @_wkv6_chunk_kernel(%arg0: i32, %arg1: i32, %arg2: i32, %arg3: memref<1x1x8x8xf32, #tpu.memory_space<vmem>>, %arg4: memref<1x1x8x8xf32, #tpu.memory_space<vmem>>, %arg5: memref<1x1x8x8xf32, #tpu.memory_space<vmem>>, %arg6: memref<1x1x8x8xf32, #tpu.memory_space<vmem>>, %arg7: memref<1x1x8xf32, #tpu.memory_space<vmem>>, %arg8: memref<1x1x8x8xf32, #tpu.memory_space<vmem>>, %arg9: memref<8x8xf32, #tpu.memory_space<vmem>>) attributes {dimension_semantics = [#tpu.dimension_semantics<parallel>, #tpu.dimension_semantics<parallel>, #tpu.dimension_semantics<arbitrary>], iteration_bounds = array<i64: 2, 4, 1>, scalar_prefetch = 0 : i64, scratch_operands = 1 : i64, tpu.core_type = #tpu.core_type<tc>, window_params = [{transform_indices = @transform_0, window_bounds = array<i64: 1, 1, 8, 8>}, {transform_indices = @transform_1, window_bounds = array<i64: 1, 1, 8, 8>}, {transform_indices = @transform_2, window_bounds = array<i64: 1, 1, 8, 8>}, {transform_indices = @transform_3, window_bounds = array<i64: 1, 1, 8, 8>}, {transform_indices = @transform_4, window_bounds = array<i64: 1, 1, 8>}, {transform_indices = @transform_5, window_bounds = array<i64: 1, 1, 8, 8>}]} {
    %c0_i32 = arith.constant 0 : i32
    %0 = arith.cmpi eq, %arg2, %c0_i32 : i32
    %1 = arith.extui %0 : i1 to i32
    %c0_i32_0 = arith.constant 0 : i32
    %2 = arith.cmpi ne, %1, %c0_i32_0 : i32
    scf.if %2 {
      %cst_35 = arith.constant 0.000000e+00 : f32
      %60 = vector.broadcast %cst_35 : f32 to vector<8x8xf32>
      %c0_36 = arith.constant 0 : index
      %c0_37 = arith.constant 0 : index
      %61 = vector.load %arg9[%c0_36, %c0_37] : memref<8x8xf32, #tpu.memory_space<vmem>>, vector<8x8xf32>
      tpu.vector_store %arg9[%c0_36, %c0_37], %60 {strides = array<i32>} : memref<8x8xf32, #tpu.memory_space<vmem>>, vector<8x8xf32>,
    } else {
    }
    %c0 = arith.constant 0 : index
    %c0_1 = arith.constant 0 : index
    %c0_2 = arith.constant 0 : index
    %c0_3 = arith.constant 0 : index
    %3 = vector.load %arg3[%c0, %c0_1, %c0_2, %c0_3] : memref<1x1x8x8xf32, #tpu.memory_space<vmem>>, vector<1x1x8x8xf32>
    %4 = vector.shape_cast %3 : vector<1x1x8x8xf32> to vector<8x8xf32>
    %c0_4 = arith.constant 0 : index
    %c0_5 = arith.constant 0 : index
    %c0_6 = arith.constant 0 : index
    %c0_7 = arith.constant 0 : index
    %5 = vector.load %arg4[%c0_4, %c0_5, %c0_6, %c0_7] : memref<1x1x8x8xf32, #tpu.memory_space<vmem>>, vector<1x1x8x8xf32>
    %6 = vector.shape_cast %5 : vector<1x1x8x8xf32> to vector<8x8xf32>
    %c0_8 = arith.constant 0 : index
    %c0_9 = arith.constant 0 : index
    %c0_10 = arith.constant 0 : index
    %c0_11 = arith.constant 0 : index
    %7 = vector.load %arg5[%c0_8, %c0_9, %c0_10, %c0_11] : memref<1x1x8x8xf32, #tpu.memory_space<vmem>>, vector<1x1x8x8xf32>
    %8 = vector.shape_cast %7 : vector<1x1x8x8xf32> to vector<8x8xf32>
    %c0_12 = arith.constant 0 : index
    %c0_13 = arith.constant 0 : index
    %c0_14 = arith.constant 0 : index
    %9 = vector.load %arg7[%c0_12, %c0_13, %c0_14] : memref<1x1x8xf32, #tpu.memory_space<vmem>>, vector<1x1x8xf32>
    %10 = vector.shape_cast %9 : vector<1x1x8xf32> to vector<1x8xf32>
    %c0_15 = arith.constant 0 : index
    %c0_16 = arith.constant 0 : index
    %c0_17 = arith.constant 0 : index
    %c0_18 = arith.constant 0 : index
    %11 = vector.load %arg6[%c0_15, %c0_16, %c0_17, %c0_18] : memref<1x1x8x8xf32, #tpu.memory_space<vmem>>, vector<1x1x8x8xf32>
    %12 = vector.shape_cast %11 : vector<1x1x8x8xf32> to vector<8x8xf32>
    %13 = math.exp %12 : vector<8x8xf32>
    %cst = arith.constant 0.000000e+00 : f32
    %14 = vector.broadcast %cst : f32 to vector<8x8xf32>
    %15 = arith.subf %14, %13 : vector<8x8xf32>
    %16 = tpu.iota {dimensions = array<i32: 0>} : vector<8x8xi32>
    %17 = tpu.iota {dimensions = array<i32: 1>} : vector<8x8xi32>
    %18 = arith.cmpi sle, %17, %16 : vector<8x8xi32>
    %19 = arith.extui %18 : vector<8x8xi1> to vector<8x8xi32>
    %20 = arith.sitofp %19 : vector<8x8xi32> to vector<8x8xf32>
    %cst_19 = arith.constant dense<0.000000e+00> : vector<8x8xf32>
    %21 = tpu.matmul %20, %15, %cst_19 {dimension_numbers = #tpu.dot_dimension_numbers<[1], [0], [0], [1], [0, 0, 1, 1], [], []>} : vector<8x8xf32>, vector<8x8xf32>, vector<8x8xf32> -> vector<8x8xf32>
    %22 = arith.subf %21, %15 : vector<8x8xf32>
    %23 = vector.extract_strided_slice %21 {offsets = [7, 0], sizes = [1, 8], strides = [1, 1]} : vector<8x8xf32> to vector<1x8xf32>
    %24 = math.exp %23 : vector<1x8xf32>
    %25 = math.exp %22 : vector<8x8xf32>
    %26 = arith.mulf %4, %25 : vector<8x8xf32>
    %cst_20 = arith.constant 0.000000e+00 : f32
    %27 = vector.broadcast %cst_20 : f32 to vector<8x8xf32>
    %28 = arith.subf %27, %21 : vector<8x8xf32>
    %29 = math.exp %28 : vector<8x8xf32>
    %30 = arith.mulf %6, %29 : vector<8x8xf32>
    %31 = vector.extract_strided_slice %21 {offsets = [7, 0], sizes = [1, 8], strides = [1, 1]} : vector<8x8xf32> to vector<1x8xf32>
    %32 = vector.broadcast %31 : vector<1x8xf32> to vector<8x8xf32>
    %33 = arith.subf %32, %21 : vector<8x8xf32>
    %34 = math.exp %33 : vector<8x8xf32>
    %35 = arith.mulf %6, %34 : vector<8x8xf32>
    %c0_21 = arith.constant 0 : index
    %c0_22 = arith.constant 0 : index
    %36 = vector.load %arg9[%c0_21, %c0_22] : memref<8x8xf32, #tpu.memory_space<vmem>>, vector<8x8xf32>
    %cst_23 = arith.constant dense<0.000000e+00> : vector<8x8xf32>
    %37 = tpu.matmul %26, %36, %cst_23 {dimension_numbers = #tpu.dot_dimension_numbers<[1], [1], [0], [0], [0, 0, 1, 0], [], []>} : vector<8x8xf32>, vector<8x8xf32>, vector<8x8xf32> -> vector<8x8xf32>
    %cst_24 = arith.constant dense<0.000000e+00> : vector<8x8xf32>
    %38 = tpu.matmul %26, %30, %cst_24 {dimension_numbers = #tpu.dot_dimension_numbers<[1], [1], [0], [0], [0, 0, 1, 0], [], []>} : vector<8x8xf32>, vector<8x8xf32>, vector<8x8xf32> -> vector<8x8xf32>
    %39 = arith.cmpi slt, %17, %16 : vector<8x8xi32>
    %cst_25 = arith.constant 0.000000e+00 : f32
    %40 = vector.broadcast %cst_25 : f32 to vector<8x8xf32>
    %41 = arith.select %39, %38, %40 : vector<8x8xi1>, vector<8x8xf32>
    %cst_26 = arith.constant dense<0.000000e+00> : vector<8x8xf32>
    %42 = tpu.matmul %41, %8, %cst_26 {dimension_numbers = #tpu.dot_dimension_numbers<[1], [0], [0], [1], [0, 0, 1, 1], [], []>} : vector<8x8xf32>, vector<8x8xf32>, vector<8x8xf32> -> vector<8x8xf32>
    %43 = arith.addf %37, %42 : vector<8x8xf32>
    %44 = vector.broadcast %10 : vector<1x8xf32> to vector<8x8xf32>
    %45 = arith.mulf %4, %44 : vector<8x8xf32>
    %46 = arith.mulf %45, %6 : vector<8x8xf32>
    %cst_27 = arith.constant dense<0.000000e+00> : vector<8xf32>
    %47 = vector.multi_reduction <add>, %46, %cst_27 [1] : vector<8x8xf32> to vector<8xf32>
    %48 = vector.shape_cast %47 : vector<8xf32> to vector<8x1xf32>
    %49 = vector.broadcast %48 : vector<8x1xf32> to vector<8x8xf32>
    %50 = arith.mulf %49, %8 : vector<8x8xf32>
    %51 = arith.addf %43, %50 : vector<8x8xf32>
    %c0_28 = arith.constant 0 : index
    %c0_29 = arith.constant 0 : index
    %c0_30 = arith.constant 0 : index
    %c0_31 = arith.constant 0 : index
    %52 = vector.load %arg8[%c0_28, %c0_29, %c0_30, %c0_31] : memref<1x1x8x8xf32, #tpu.memory_space<vmem>>, vector<1x1x8x8xf32>
    %53 = vector.shape_cast %52 : vector<1x1x8x8xf32> to vector<8x8xf32>
    %54 = vector.shape_cast %51 : vector<8x8xf32> to vector<1x1x8x8xf32>
    tpu.vector_store %arg8[%c0_28, %c0_29, %c0_30, %c0_31], %54 {strides = array<i32>} : memref<1x1x8x8xf32, #tpu.memory_space<vmem>>, vector<1x1x8x8xf32>,
    %55 = vector.broadcast %24 : vector<1x8xf32> to vector<8x8xf32>
    %56 = arith.mulf %55, %36 : vector<8x8xf32>
    %cst_32 = arith.constant dense<0.000000e+00> : vector<8x8xf32>
    %57 = tpu.matmul %8, %35, %cst_32 {dimension_numbers = #tpu.dot_dimension_numbers<[0], [0], [1], [1], [0, 1, 1, 1], [], []>} : vector<8x8xf32>, vector<8x8xf32>, vector<8x8xf32> -> vector<8x8xf32>
    %58 = arith.addf %56, %57 : vector<8x8xf32>
    %c0_33 = arith.constant 0 : index
    %c0_34 = arith.constant 0 : index
    %59 = vector.load %arg9[%c0_33, %c0_34] : memref<8x8xf32, #tpu.memory_space<vmem>>, vector<8x8xf32>
    tpu.vector_store %arg9[%c0_33, %c0_34], %58 {strides = array<i32>} : memref<8x8xf32, #tpu.memory_space<vmem>>, vector<8x8xf32>,
    return
  }
  func.func @transform_0(%arg0: i32, %arg1: i32, %arg2: i32) -> (i32, i32, i32, i32) {
    %c0_i32 = arith.constant 0 : i32
    %c0_i32_0 = arith.constant 0 : i32
    return %arg0, %arg1, %arg2, %c0_i32 : i32, i32, i32, i32
  }
  func.func @transform_1(%arg0: i32, %arg1: i32, %arg2: i32) -> (i32, i32, i32, i32) {
    %c0_i32 = arith.constant 0 : i32
    %c0_i32_0 = arith.constant 0 : i32
    return %arg0, %arg1, %arg2, %c0_i32 : i32, i32, i32, i32
  }
  func.func @transform_2(%arg0: i32, %arg1: i32, %arg2: i32) -> (i32, i32, i32, i32) {
    %c0_i32 = arith.constant 0 : i32
    %c0_i32_0 = arith.constant 0 : i32
    return %arg0, %arg1, %arg2, %c0_i32 : i32, i32, i32, i32
  }
  func.func @transform_3(%arg0: i32, %arg1: i32, %arg2: i32) -> (i32, i32, i32, i32) {
    %c0_i32 = arith.constant 0 : i32
    %c0_i32_0 = arith.constant 0 : i32
    return %arg0, %arg1, %arg2, %c0_i32 : i32, i32, i32, i32
  }
  func.func @transform_4(%arg0: i32, %arg1: i32, %arg2: i32) -> (i32, i32, i32) {
    %c0_i32 = arith.constant 0 : i32
    %c0_i32_0 = arith.constant 0 : i32
    %c0_i32_1 = arith.constant 0 : i32
    return %arg1, %c0_i32, %c0_i32_0 : i32, i32, i32
  }
  func.func @transform_5(%arg0: i32, %arg1: i32, %arg2: i32) -> (i32, i32, i32, i32) {
    %c0_i32 = arith.constant 0 : i32
    %c0_i32_0 = arith.constant 0 : i32
    return %arg0, %arg1, %arg2, %c0_i32 : i32, i32, i32, i32
  }
}

module attributes {stable_mosaic.version = 11 : i64} {
  func.func @_gn_gate_kernel(%arg0: i32, %arg1: memref<16x32xf32, #tpu.memory_space<vmem>>, %arg2: memref<16x32xf32, #tpu.memory_space<vmem>>, %arg3: memref<16x1xf32, #tpu.memory_space<vmem>>, %arg4: memref<16x32xf32, #tpu.memory_space<vmem>>, %arg5: memref<1x32xf32, #tpu.memory_space<vmem>>, %arg6: memref<1x32xf32, #tpu.memory_space<vmem>>, %arg7: memref<16x32xf32, #tpu.memory_space<vmem>>) attributes {dimension_semantics = [#tpu.dimension_semantics<parallel>], iteration_bounds = array<i64: 1>, scalar_prefetch = 0 : i64, scratch_operands = 0 : i64, tpu.core_type = #tpu.core_type<tc>, window_params = [{transform_indices = @transform_0, window_bounds = array<i64: 16, 32>}, {transform_indices = @transform_1, window_bounds = array<i64: 16, 32>}, {transform_indices = @transform_2, window_bounds = array<i64: 16, 1>}, {transform_indices = @transform_3, window_bounds = array<i64: 16, 32>}, {pipeline_mode = #tpu.pipeline_mode<synchronous>, transform_indices = @transform_4, window_bounds = array<i64: 1, 32>}, {pipeline_mode = #tpu.pipeline_mode<synchronous>, transform_indices = @transform_5, window_bounds = array<i64: 1, 32>}, {transform_indices = @transform_6, window_bounds = array<i64: 16, 32>}]} {
    %c0 = arith.constant 0 : index
    %c0_0 = arith.constant 0 : index
    %0 = vector.load %arg1[%c0, %c0_0] : memref<16x32xf32, #tpu.memory_space<vmem>>, vector<16x32xf32>
    %c0_1 = arith.constant 0 : index
    %c0_2 = arith.constant 0 : index
    %1 = vector.load %arg2[%c0_1, %c0_2] : memref<16x32xf32, #tpu.memory_space<vmem>>, vector<16x32xf32>
    %2 = arith.addf %0, %1 : vector<16x32xf32>
    %c0_3 = arith.constant 0 : index
    %c0_4 = arith.constant 0 : index
    %3 = vector.load %arg3[%c0_3, %c0_4] : memref<16x1xf32, #tpu.memory_space<vmem>>, vector<16x1xf32>
    %4 = vector.broadcast %3 : vector<16x1xf32> to vector<16x32xf32>
    %5 = arith.mulf %2, %4 : vector<16x32xf32>
    %6 = vector.shape_cast %5 : vector<16x32xf32> to vector<16x4x8xf32>
    %cst = arith.constant dense<0.000000e+00> : vector<16x4xf32>
    %7 = vector.multi_reduction <add>, %6, %cst [2] : vector<16x4x8xf32> to vector<16x4xf32>
    %8 = vector.shape_cast %7 : vector<16x4xf32> to vector<16x4x1xf32>
    %cst_5 = arith.constant 8.000000e+00 : f32
    %9 = vector.broadcast %cst_5 : f32 to vector<16x4x1xf32>
    %10 = arith.divf %8, %9 : vector<16x4x1xf32>
    %11 = vector.broadcast %10 : vector<16x4x1xf32> to vector<16x4x8xf32>
    %12 = arith.subf %6, %11 : vector<16x4x8xf32>
    %13 = arith.mulf %12, %12 : vector<16x4x8xf32>
    %cst_6 = arith.constant dense<0.000000e+00> : vector<16x4xf32>
    %14 = vector.multi_reduction <add>, %13, %cst_6 [2] : vector<16x4x8xf32> to vector<16x4xf32>
    %15 = vector.shape_cast %14 : vector<16x4xf32> to vector<16x4x1xf32>
    %cst_7 = arith.constant 8.000000e+00 : f32
    %16 = vector.broadcast %cst_7 : f32 to vector<16x4x1xf32>
    %17 = arith.divf %15, %16 : vector<16x4x1xf32>
    %18 = vector.broadcast %10 : vector<16x4x1xf32> to vector<16x4x8xf32>
    %19 = arith.subf %6, %18 : vector<16x4x8xf32>
    %cst_8 = arith.constant 6.400000e-04 : f32
    %20 = vector.broadcast %cst_8 : f32 to vector<16x4x1xf32>
    %21 = arith.addf %17, %20 : vector<16x4x1xf32>
    %22 = math.rsqrt %21 : vector<16x4x1xf32>
    %23 = vector.broadcast %22 : vector<16x4x1xf32> to vector<16x4x8xf32>
    %24 = arith.mulf %19, %23 : vector<16x4x8xf32>
    %25 = vector.shape_cast %24 : vector<16x4x8xf32> to vector<16x32xf32>
    %c0_9 = arith.constant 0 : index
    %c0_10 = arith.constant 0 : index
    %26 = vector.load %arg5[%c0_9, %c0_10] : memref<1x32xf32, #tpu.memory_space<vmem>>, vector<1x32xf32>
    %27 = vector.broadcast %26 : vector<1x32xf32> to vector<16x32xf32>
    %28 = arith.mulf %25, %27 : vector<16x32xf32>
    %c0_11 = arith.constant 0 : index
    %c0_12 = arith.constant 0 : index
    %29 = vector.load %arg6[%c0_11, %c0_12] : memref<1x32xf32, #tpu.memory_space<vmem>>, vector<1x32xf32>
    %30 = vector.broadcast %29 : vector<1x32xf32> to vector<16x32xf32>
    %31 = arith.addf %28, %30 : vector<16x32xf32>
    %c0_13 = arith.constant 0 : index
    %c0_14 = arith.constant 0 : index
    %32 = vector.load %arg4[%c0_13, %c0_14] : memref<16x32xf32, #tpu.memory_space<vmem>>, vector<16x32xf32>
    %33 = arith.negf %32 : vector<16x32xf32>
    %34 = math.exp %33 : vector<16x32xf32>
    %cst_15 = arith.constant 1.000000e+00 : f32
    %35 = vector.broadcast %cst_15 : f32 to vector<16x32xf32>
    %36 = arith.addf %35, %34 : vector<16x32xf32>
    %37 = arith.divf %35, %36 : vector<16x32xf32>
    %38 = arith.mulf %32, %37 : vector<16x32xf32>
    %39 = arith.mulf %31, %38 : vector<16x32xf32>
    %c0_16 = arith.constant 0 : index
    %c0_17 = arith.constant 0 : index
    %40 = vector.load %arg7[%c0_16, %c0_17] : memref<16x32xf32, #tpu.memory_space<vmem>>, vector<16x32xf32>
    tpu.vector_store %arg7[%c0_16, %c0_17], %39 {strides = array<i32>} : memref<16x32xf32, #tpu.memory_space<vmem>>, vector<16x32xf32>,
    return
  }
  func.func @transform_0(%arg0: i32) -> (i32, i32) {
    %c0_i32 = arith.constant 0 : i32
    %c0_i32_0 = arith.constant 0 : i32
    return %arg0, %c0_i32 : i32, i32
  }
  func.func @transform_1(%arg0: i32) -> (i32, i32) {
    %c0_i32 = arith.constant 0 : i32
    %c0_i32_0 = arith.constant 0 : i32
    return %arg0, %c0_i32 : i32, i32
  }
  func.func @transform_2(%arg0: i32) -> (i32, i32) {
    %c0_i32 = arith.constant 0 : i32
    %c0_i32_0 = arith.constant 0 : i32
    return %arg0, %c0_i32 : i32, i32
  }
  func.func @transform_3(%arg0: i32) -> (i32, i32) {
    %c0_i32 = arith.constant 0 : i32
    %c0_i32_0 = arith.constant 0 : i32
    return %arg0, %c0_i32 : i32, i32
  }
  func.func @transform_4(%arg0: i32) -> (i32, i32) {
    %c0_i32 = arith.constant 0 : i32
    %c0_i32_0 = arith.constant 0 : i32
    %c0_i32_1 = arith.constant 0 : i32
    return %c0_i32, %c0_i32_0 : i32, i32
  }
  func.func @transform_5(%arg0: i32) -> (i32, i32) {
    %c0_i32 = arith.constant 0 : i32
    %c0_i32_0 = arith.constant 0 : i32
    %c0_i32_1 = arith.constant 0 : i32
    return %c0_i32, %c0_i32_0 : i32, i32
  }
  func.func @transform_6(%arg0: i32) -> (i32, i32) {
    %c0_i32 = arith.constant 0 : i32
    %c0_i32_0 = arith.constant 0 : i32
    return %arg0, %c0_i32 : i32, i32
  }
}

module attributes {stable_mosaic.version = 11 : i64} {
  func.func @_matmul_kernel(%arg0: i32, %arg1: i32, %arg2: i32, %arg3: memref<16x32xbf16, #tpu.memory_space<vmem>>, %arg4: memref<32x32xbf16, #tpu.memory_space<vmem>>, %arg5: memref<16x32xf32, #tpu.memory_space<vmem>>, %arg6: memref<16x32xf32, #tpu.memory_space<vmem>>) attributes {dimension_semantics = [#tpu.dimension_semantics<parallel>, #tpu.dimension_semantics<parallel>, #tpu.dimension_semantics<arbitrary>], iteration_bounds = array<i64: 1, 1, 1>, scalar_prefetch = 0 : i64, scratch_operands = 1 : i64, tpu.core_type = #tpu.core_type<tc>, window_params = [{transform_indices = @transform_0, window_bounds = array<i64: 16, 32>}, {transform_indices = @transform_1, window_bounds = array<i64: 32, 32>}, {transform_indices = @transform_2, window_bounds = array<i64: 16, 32>}]} {
    %c0_i32 = arith.constant 0 : i32
    %0 = arith.cmpi eq, %arg2, %c0_i32 : i32
    %1 = arith.extui %0 : i1 to i32
    %c0_i32_0 = arith.constant 0 : i32
    %2 = arith.cmpi ne, %1, %c0_i32_0 : i32
    scf.if %2 {
      %cst_10 = arith.constant 0.000000e+00 : f32
      %12 = vector.broadcast %cst_10 : f32 to vector<16x32xf32>
      %c0_11 = arith.constant 0 : index
      %c0_12 = arith.constant 0 : index
      %13 = vector.load %arg6[%c0_11, %c0_12] : memref<16x32xf32, #tpu.memory_space<vmem>>, vector<16x32xf32>
      tpu.vector_store %arg6[%c0_11, %c0_12], %12 {strides = array<i32>} : memref<16x32xf32, #tpu.memory_space<vmem>>, vector<16x32xf32>,
    } else {
    }
    %c0 = arith.constant 0 : index
    %c0_1 = arith.constant 0 : index
    %3 = vector.load %arg6[%c0, %c0_1] : memref<16x32xf32, #tpu.memory_space<vmem>>, vector<16x32xf32>
    %c0_2 = arith.constant 0 : index
    %c0_3 = arith.constant 0 : index
    %4 = vector.load %arg3[%c0_2, %c0_3] : memref<16x32xbf16, #tpu.memory_space<vmem>>, vector<16x32xbf16>
    %c0_4 = arith.constant 0 : index
    %c0_5 = arith.constant 0 : index
    %5 = vector.load %arg4[%c0_4, %c0_5] : memref<32x32xbf16, #tpu.memory_space<vmem>>, vector<32x32xbf16>
    %cst = arith.constant dense<0.000000e+00> : vector<16x32xf32>
    %6 = tpu.matmul %4, %5, %cst {dimension_numbers = #tpu.dot_dimension_numbers<[1], [0], [0], [1], [0, 0, 1, 1], [], []>} : vector<16x32xbf16>, vector<32x32xbf16>, vector<16x32xf32> -> vector<16x32xf32>
    %7 = arith.addf %3, %6 : vector<16x32xf32>
    %c0_6 = arith.constant 0 : index
    %c0_7 = arith.constant 0 : index
    %8 = vector.load %arg6[%c0_6, %c0_7] : memref<16x32xf32, #tpu.memory_space<vmem>>, vector<16x32xf32>
    tpu.vector_store %arg6[%c0_6, %c0_7], %7 {strides = array<i32>} : memref<16x32xf32, #tpu.memory_space<vmem>>, vector<16x32xf32>,
    %c0_i32_8 = arith.constant 0 : i32
    %9 = arith.cmpi eq, %arg2, %c0_i32_8 : i32
    %10 = arith.extui %9 : i1 to i32
    %c0_i32_9 = arith.constant 0 : i32
    %11 = arith.cmpi ne, %10, %c0_i32_9 : i32
    scf.if %11 {
      %c0_10 = arith.constant 0 : index
      %c0_11 = arith.constant 0 : index
      %12 = vector.load %arg6[%c0_10, %c0_11] : memref<16x32xf32, #tpu.memory_space<vmem>>, vector<16x32xf32>
      %c0_12 = arith.constant 0 : index
      %c0_13 = arith.constant 0 : index
      %13 = vector.load %arg5[%c0_12, %c0_13] : memref<16x32xf32, #tpu.memory_space<vmem>>, vector<16x32xf32>
      tpu.vector_store %arg5[%c0_12, %c0_13], %12 {strides = array<i32>} : memref<16x32xf32, #tpu.memory_space<vmem>>, vector<16x32xf32>,
    } else {
    }
    return
  }
  func.func @transform_0(%arg0: i32, %arg1: i32, %arg2: i32) -> (i32, i32) {
    %c0_i32 = arith.constant 0 : i32
    return %arg0, %arg2 : i32, i32
  }
  func.func @transform_1(%arg0: i32, %arg1: i32, %arg2: i32) -> (i32, i32) {
    %c0_i32 = arith.constant 0 : i32
    return %arg2, %arg1 : i32, i32
  }
  func.func @transform_2(%arg0: i32, %arg1: i32, %arg2: i32) -> (i32, i32) {
    %c0_i32 = arith.constant 0 : i32
    return %arg0, %arg1 : i32, i32
  }
}

</mosaic_0001>

<llo_original>
// kernel: birwkv_tmix_forward.12
$region0: #{birwkv_tmix_forward.12}
  #allocation0 [shape = 'u32[]', space=smem, size = 0x4, offset = 0x4, fixed_abs, tag = 'smem constant byte address 0x4 - core index']
  #allocation1 [shape = 'u32[144,128]{1,0:T(1,128)}', space=vmem, size = 0x12000, scoped, tag = 'internal scratch']
  #allocation2 [shape = 'f32[16,160]{1,0:T(8,128)}', space=vmem, size = 0x4000, scoped, tag = 'scratch operand']
  %s0 = inlined_call_operand.vmem [shape: bf16[16,32], index: 0, kind: input, shape index: {}]
  %s1 = inlined_call_operand.vmem [shape: bf16[32,160], index: 1, kind: input, shape index: {}]
  %s2 = inlined_call_operand.vmem [shape: f32[16,160], index: 2, kind: output, shape index: {}]
  %s3 = sld [smem:[#allocation0]]
  $region26: #{birwkv_tmix_forward.12} parent=0
    _
  %s5 = ssub.s32 1, %s3
  %s6 = scalar_select 0, %s5, %s3
  // Predicated region
  $region2: #{birwkv_tmix_forward.12} parent=0 // pred_check
    _
  $region3: #{birwkv_tmix_forward.12} parent=0 // pred_check_branch
    %8 = sbr.rel (0) target = $region5
  $region4: #{birwkv_tmix_forward.12} parent=0 // pred_region
    _
  $region5: #{birwkv_tmix_forward.12} parent=0 // pred_fallthru
    _
  // Predicated region
  $region6: #{birwkv_tmix_forward.12} parent=0 // pred_check
    _
  $region7: #{birwkv_tmix_forward.12} parent=0 // pred_check_branch
    %10 = sbr.rel (0) target = $region9
  $region8: #{birwkv_tmix_forward.12} parent=0 // pred_region
    _
  $region9: #{birwkv_tmix_forward.12} parent=0 // pred_fallthru
    _
  %p12 = scmp.eq.s32.totalorder 0, 0
  // Predicated region
  $region10: #{birwkv_tmix_forward.12} parent=0 // pred_check
    %p13 = pneg %p12
  $region11: #{birwkv_tmix_forward.12} parent=0 // pred_check_branch
    %15 = sbr.rel (%p13) target = $region13
  $region12: #{birwkv_tmix_forward.12} parent=0 // pred_region
    %16 = vst [vmem:[#allocation2] sm:$0xff] 0.0
    %vm17 = vcmask 261120
    %18 = vst.msk [vmem:[#allocation2 + $0x8] sm:$0xff] %vm17, 0.0
    %19 = vst [vmem:[#allocation2 + $0x10] sm:$0xff] 0.0
    %20 = vst.msk [vmem:[#allocation2 + $0x18] sm:$0xff] %vm17, 0.0
  $region13: #{birwkv_tmix_forward.12} parent=0 // pred_fallthru
    _
  %v21 = vld [vmem:[#allocation2] sm:$0xff]
  %v22 = vld [vmem:[#allocation2 + $0x8] sm:$0xff]
  %v23 = vld [vmem:[#allocation2 + $0x10] sm:$0xff]
  %v24 = vld [vmem:[#allocation2 + $0x18] sm:$0xff]
  %v25 = vld [vmem:[%s0] sm:$0xf]
  %v26 = vld [vmem:[%s0 + $0x4] sm:$0xf]
  %v27 = vld [vmem:[%s1] sm:$0xff]
  %v28 = vld [vmem:[%s1 + $0x8] sm:$0xff]
  %v29 = vld [vmem:[%s1 + $0x10] sm:$0xff]
  %v30 = vld [vmem:[%s1 + $0x18] sm:$0xff]
  %v33 = vunpack.c.l.b16 %v25
  %v34 = vunpack.c.l.b16 %v26
  %v35 = vpack.c.b16 %v34, %v33
  %v40 = vunpack.c.l.b16 %v27
  %v41 = vunpack.c.h.b16 %v27
  %v42 = vunpack.c.l.b16 %v28
  %v43 = vunpack.c.h.b16 %v28
  %v44 = vunpack.c.l.b16 %v29
  %v45 = vunpack.c.h.b16 %v29
  %v46 = vunpack.c.l.b16 %v30
  %v47 = vunpack.c.h.b16 %v30
  %v48 = vpack.c.b16 %v42, %v40
  %v49 = vpack.c.b16 %v43, %v41
  %v50 = vpack.c.b16 %v46, %v44
  %v51 = vpack.c.b16 %v47, %v45
  %vm56 = vcmask 261120
  %v58 = vsel %vm56, %v35, 0
  %60 = vmatprep.subr.bf16.mxu0 %v49
  %61 = vmatpush1.bf16.msra.mxu0 %v48
  %62 = vmatprep.subr.bf16.mxu0 %v51
  %63 = vmatpush1.bf16.msra.mxu0 %v50
  %64 = vmatprep.subr.bf16.mxu0 0
  %65 = vmatpush1.bf16.msra.mxu0 0
  %66 = vmatprep.subr.bf16.mxu0 0
  %67 = vmatpush1.bf16.msra.mxu0 0
  %68 = vmatprep.subr.bf16.mxu0 0
  %69 = vmatpush1.bf16.msra.mxu0 0
  %70 = vmatprep.subr.bf16.mxu0 0
  %71 = vmatpush1.bf16.msra.mxu0 0
  %72 = vmatprep.subr.bf16.mxu0 0
  %73 = vmatpush1.bf16.msra.mxu0 0
  %74 = vmatprep.subr.bf16.mxu0 0
  %75 = vmatpush1.bf16.msra.mxu0 0
  %76 = vmatprep.subr.bf16.mxu0 0
  %77 = vmatpush1.bf16.msra.mxu0 0
  %78 = vmatprep.subr.bf16.mxu0 0
  %79 = vmatpush1.bf16.msra.mxu0 0
  %80 = vmatprep.subr.bf16.mxu0 0
  %81 = vmatpush1.bf16.msra.mxu0 0
  %82 = vmatprep.subr.bf16.mxu0 0
  %83 = vmatpush1.bf16.msra.mxu0 0
  %84 = vmatprep.subr.bf16.mxu0 0
  %85 = vmatpush1.bf16.msra.mxu0 0
  %86 = vmatprep.subr.bf16.mxu0 0
  %87 = vmatpush1.bf16.msra.mxu0 0
  %88 = vmatprep.subr.bf16.mxu0 0
  %89 = vmatpush1.bf16.msra.mxu0 0
  %90 = vmatprep.subr.bf16.mxu0 0
  %91 = vmatpush1.bf16.msra.mxu0 0
  %92 = vmatprep.mubr.bf16.mxu0 0
  %93 = vmatmul.mubr.bf16.gmra.mrb[0].mxu0 %v58
  %v94 = vpop.f32.mrb[0].mxu0
  %v95 = vadd.f32 0.0, %v94
  %v96 = vpop.f32.mrb[0].mxu0
  %v97 = vadd.f32 0.0, %v96
  %v98 = vpop.f32.mrb[0].mxu0
  %v99 = vadd.f32 0.0, %v98
  %v100 = vpop.f32.mrb[0].mxu0
  %v101 = vadd.f32 0.0, %v100
  %102 = vdwg.mxu0
  %v103 = vadd.f32 %v21, %v95
  %v104 = vadd.f32 %v22, %v97
  %v105 = vadd.f32 %v23, %v99
  %v106 = vadd.f32 %v24, %v101
  %107 = vst [vmem:[#allocation2] sm:$0xff] %v103
  %108 = vst.msk [vmem:[#allocation2 + $0x8] sm:$0xff] %vm56, %v104
  %109 = vst [vmem:[#allocation2 + $0x10] sm:$0xff] %v105
  %110 = vst.msk [vmem:[#allocation2 + $0x18] sm:$0xff] %vm56, %v106
  // Predicated region
  $region14: #{birwkv_tmix_forward.12} parent=0 // pred_check
    %p111 = pneg %p12
  $region15: #{birwkv_tmix_forward.12} parent=0 // pred_check_branch
    %113 = sbr.rel (%p111) target = $region17
  $region16: #{birwkv_tmix_forward.12} parent=0 // pred_region
    %v114 = vld [vmem:[#allocation2] sm:$0xff]
    %v115 = vld [vmem:[#allocation2 + $0x8] sm:$0xff]
    %v116 = vld [vmem:[#allocation2 + $0x10] sm:$0xff]
    %v117 = vld [vmem:[#allocation2 + $0x18] sm:$0xff]
    %v118 = vtanh.pop %v114
    %v119 = vtanh.pop %v115
    %v120 = vtanh.pop %v116
    %v121 = vtanh.pop %v117
    %122 = vst [vmem:[%s2] sm:$0xff] %v118
    %123 = vst.msk [vmem:[%s2 + $0x8] sm:$0xff] %vm56, %v119
    %124 = vst [vmem:[%s2 + $0x10] sm:$0xff] %v120
    %125 = vst.msk [vmem:[%s2 + $0x18] sm:$0xff] %vm56, %v121
  $region17: #{birwkv_tmix_forward.12} parent=0 // pred_fallthru
    _
  // Predicated region
  $region18: #{birwkv_tmix_forward.12} parent=0 // pred_check
    _
  $region19: #{birwkv_tmix_forward.12} parent=0 // pred_check_branch
    %127 = sbr.rel (0) target = $region21
  $region20: #{birwkv_tmix_forward.12} parent=0 // pred_region
    _
  $region21: #{birwkv_tmix_forward.12} parent=0 // pred_fallthru
    _
  // Predicated region
  $region22: #{birwkv_tmix_forward.12} parent=0 // pred_check
    _
  $region23: #{birwkv_tmix_forward.12} parent=0 // pred_check_branch
    %129 = sbr.rel (0) target = $region25
  $region24: #{birwkv_tmix_forward.12} parent=0 // pred_region
    _
  $region25: #{birwkv_tmix_forward.12} parent=0 // pred_fallthru
    _

// kernel: birwkv_tmix_forward.13
$region0: #{birwkv_tmix_forward.13}
  #allocation0 [shape = 'u32[]', space=smem, size = 0x4, offset = 0x4, fixed_abs, tag = 'smem constant byte address 0x4 - core index']
  #allocation1 [shape = 'u32[144,128]{1,0:T(1,128)}', space=vmem, size = 0x12000, scoped, tag = 'internal scratch']
  %s0 = inlined_call_operand.vmem [shape: bf16[16,160], index: 0, kind: input, shape index: {}]
  %s1 = inlined_call_operand.vmem [shape: bf16[5,32,32], index: 1, kind: input, shape index: {}]
  %s2 = inlined_call_operand.vmem [shape: f32[16,32], index: 2, kind: output, shape index: {0}]
  %s3 = inlined_call_operand.vmem [shape: f32[16,32], index: 3, kind: output, shape index: {1}]
  %s4 = inlined_call_operand.vmem [shape: f32[16,32], index: 4, kind: output, shape index: {2}]
  %s5 = inlined_call_operand.vmem [shape: f32[16,32], index: 5, kind: output, shape index: {3}]
  %s6 = inlined_call_operand.vmem [shape: f32[16,32], index: 6, kind: output, shape index: {4}]
  %7 = xla_tuple %s2, %s3, %s4, %s5, %s6
  %s8 = sld [smem:[#allocation0]]
  $region50: #{birwkv_tmix_forward.13} parent=0
    _
  %s10 = ssub.s32 1, %s8
  %s11 = scalar_select 0, %s10, %s8
  // Predicated region
  $region2: #{birwkv_tmix_forward.13} parent=0 // pred_check
    _
  $region3: #{birwkv_tmix_forward.13} parent=0 // pred_check_branch
    %13 = sbr.rel (0) target = $region5
  $region4: #{birwkv_tmix_forward.13} parent=0 // pred_region
    _
  $region5: #{birwkv_tmix_forward.13} parent=0 // pred_fallthru
    _
  // Predicated region
  $region6: #{birwkv_tmix_forward.13} parent=0 // pred_check
    _
  $region7: #{birwkv_tmix_forward.13} parent=0 // pred_check_branch
    %15 = sbr.rel (0) target = $region9
  $region8: #{birwkv_tmix_forward.13} parent=0 // pred_region
    _
  $region9: #{birwkv_tmix_forward.13} parent=0 // pred_fallthru
    _
  %v17 = vld [vmem:[%s0] sm:$0xff]
  %v18 = vld [vmem:[%s0 + $0x8] sm:$0xff]
  %v19 = vld [vmem:[%s1] sm:$0xf]
  %v20 = vld [vmem:[%s1 + $0x4] sm:$0xf]
  %v21 = vld [vmem:[%s1 + $0x8] sm:$0xf]
  %v22 = vld [vmem:[%s1 + $0xc] sm:$0xf]
  %v25 = vunpack.c.l.b16 %v17
  %v26 = vunpack.c.l.b16 %v18
  %v27 = vpack.c.b16 %v26, %v25
  %v32 = vunpack.c.l.b16 %v19
  %v33 = vunpack.c.l.b16 %v20
  %v34 = vunpack.c.l.b16 %v21
  %v35 = vunpack.c.l.b16 %v22
  %v36 = vpack.c.b16 %v33, %v32
  %v37 = vpack.c.b16 %v35, %v34
  %vm40 = vcmask 261120
  %v42 = vsel %vm40, %v27, 0
  %44 = vmatprep.subr.bf16.mxu0 0
  %45 = vmatpush1.bf16.msra.mxu0 %v36
  %46 = vmatprep.subr.bf16.mxu0 0
  %47 = vmatpush1.bf16.msra.mxu0 %v37
  %48 = vmatprep.subr.bf16.mxu0 0
  %49 = vmatpush1.bf16.msra.mxu0 0
  %50 = vmatprep.subr.bf16.mxu0 0
  %51 = vmatpush1.bf16.msra.mxu0 0
  %52 = vmatprep.subr.bf16.mxu0 0
  %53 = vmatpush1.bf16.msra.mxu0 0
  %54 = vmatprep.subr.bf16.mxu0 0
  %55 = vmatpush1.bf16.msra.mxu0 0
  %56 = vmatprep.subr.bf16.mxu0 0
  %57 = vmatpush1.bf16.msra.mxu0 0
  %58 = vmatprep.subr.bf16.mxu0 0
  %59 = vmatpush1.bf16.msra.mxu0 0
  %60 = vmatprep.subr.bf16.mxu0 0
  %61 = vmatpush1.bf16.msra.mxu0 0
  %62 = vmatprep.subr.bf16.mxu0 0
  %63 = vmatpush1.bf16.msra.mxu0 0
  %64 = vmatprep.subr.bf16.mxu0 0
  %65 = vmatpush1.bf16.msra.mxu0 0
  %66 = vmatprep.subr.bf16.mxu0 0
  %67 = vmatpush1.bf16.msra.mxu0 0
  %68 = vmatprep.subr.bf16.mxu0 0
  %69 = vmatpush1.bf16.msra.mxu0 0
  %70 = vmatprep.subr.bf16.mxu0 0
  %71 = vmatpush1.bf16.msra.mxu0 0
  %72 = vmatprep.subr.bf16.mxu0 0
  %73 = vmatpush1.bf16.msra.mxu0 0
  %74 = vmatprep.subr.bf16.mxu0 0
  %75 = vmatpush1.bf16.msra.mxu0 0
  %76 = vmatprep.mubr.bf16.mxu0 0
  %77 = vmatmul.mubr.bf16.gmra.mrb[0].mxu0 %v42
  %v78 = vpop.f32.mrb[0].mxu0
  %v79 = vadd.f32 0.0, %v78
  %v80 = vpop.f32.mrb[0].mxu0
  %v81 = vpop.f32.mrb[0].mxu0
  %v82 = vadd.f32 0.0, %v81
  %v83 = vpop.f32.mrb[0].mxu0
  %84 = vdwg.mxu0
  %85 = vst.msk [vmem:[%s2] sm:$0xff] %vm40, %v79
  %86 = vst.msk [vmem:[%s2 + $0x8] sm:$0xff] %vm40, %v82
  %s87 = scalar_lea.vmem %s1, 16
  %v88 = vld [vmem:[%s87] sm:$0xf]
  %v89 = vld [vmem:[%s87 + $0x4] sm:$0xf]
  %v90 = vld [vmem:[%s87 + $0x8] sm:$0xf]
  %v91 = vld [vmem:[%s87 + $0xc] sm:$0xf]
  %92 = vrot.lane.b32.xlu0 %v27, 96
  %v93 = vpop.permute.xlu0 %92
  %v98 = vunpack.c.l.b16 %v88
  %v99 = vunpack.c.l.b16 %v89
  %v100 = vunpack.c.l.b16 %v90
  %v101 = vunpack.c.l.b16 %v91
  %v102 = vpack.c.b16 %v99, %v98
  %v103 = vpack.c.b16 %v101, %v100
  %v107 = vsel %vm40, %v93, 0
  %109 = vmatprep.subr.bf16.mxu0 0
  %110 = vmatpush1.bf16.msra.mxu0 %v102
  %111 = vmatprep.subr.bf16.mxu0 0
  %112 = vmatpush1.bf16.msra.mxu0 %v103
  %113 = vmatprep.subr.bf16.mxu0 0
  %114 = vmatpush1.bf16.msra.mxu0 0
  %115 = vmatprep.subr.bf16.mxu0 0
  %116 = vmatpush1.bf16.msra.mxu0 0
  %117 = vmatprep.subr.bf16.mxu0 0
  %118 = vmatpush1.bf16.msra.mxu0 0
  %119 = vmatprep.subr.bf16.mxu0 0
  %120 = vmatpush1.bf16.msra.mxu0 0
  %121 = vmatprep.subr.bf16.mxu0 0
  %122 = vmatpush1.bf16.msra.mxu0 0
  %123 = vmatprep.subr.bf16.mxu0 0
  %124 = vmatpush1.bf16.msra.mxu0 0
  %125 = vmatprep.subr.bf16.mxu0 0
  %126 = vmatpush1.bf16.msra.mxu0 0
  %127 = vmatprep.subr.bf16.mxu0 0
  %128 = vmatpush1.bf16.msra.mxu0 0
  %129 = vmatprep.subr.bf16.mxu0 0
  %130 = vmatpush1.bf16.msra.mxu0 0
  %131 = vmatprep.subr.bf16.mxu0 0
  %132 = vmatpush1.bf16.msra.mxu0 0
  %133 = vmatprep.subr.bf16.mxu0 0
  %134 = vmatpush1.bf16.msra.mxu0 0
  %135 = vmatprep.subr.bf16.mxu0 0
  %136 = vmatpush1.bf16.msra.mxu0 0
  %137 = vmatprep.subr.bf16.mxu0 0
  %138 = vmatpush1.bf16.msra.mxu0 0
  %139 = vmatprep.subr.bf16.mxu0 0
  %140 = vmatpush1.bf16.msra.mxu0 0
  %141 = vmatprep.mubr.bf16.mxu0 0
  %142 = vmatmul.mubr.bf16.gmra.mrb[0].mxu0 %v107
  %v143 = vpop.f32.mrb[0].mxu0
  %v144 = vadd.f32 0.0, %v143
  %v145 = vpop.f32.mrb[0].mxu0
  %v146 = vpop.f32.mrb[0].mxu0
  %v147 = vadd.f32 0.0, %v146
  %v148 = vpop.f32.mrb[0].mxu0
  %149 = vdwg.mxu0
  %150 = vst.msk [vmem:[%s3] sm:$0xff] %vm40, %v144
  %151 = vst.msk [vmem:[%s3 + $0x8] sm:$0xff] %vm40, %v147
  %s152 = scalar_lea.vmem %s1, 32
  %v153 = vld [vmem:[%s152] sm:$0xf]
  %v154 = vld [vmem:[%s152 + $0x4] sm:$0xf]
  %v155 = vld [vmem:[%s152 + $0x8] sm:$0xf]
  %v156 = vld [vmem:[%s152 + $0xc] sm:$0xf]
  %157 = vrot.lane.b32.xlu0 %v27, 64
  %v158 = vpop.permute.xlu0 %157
  %v163 = vunpack.c.l.b16 %v153
  %v164 = vunpack.c.l.b16 %v154
  %v165 = vunpack.c.l.b16 %v155
  %v166 = vunpack.c.l.b16 %v156
  %v167 = vpack.c.b16 %v164, %v163
  %v168 = vpack.c.b16 %v166, %v165
  %v172 = vsel %vm40, %v158, 0
  %174 = vmatprep.subr.bf16.mxu0 0
  %175 = vmatpush1.bf16.msra.mxu0 %v167
  %176 = vmatprep.subr.bf16.mxu0 0
  %177 = vmatpush1.bf16.msra.mxu0 %v168
  %178 = vmatprep.subr.bf16.mxu0 0
  %179 = vmatpush1.bf16.msra.mxu0 0
  %180 = vmatprep.subr.bf16.mxu0 0
  %181 = vmatpush1.bf16.msra.mxu0 0
  %182 = vmatprep.subr.bf16.mxu0 0
  %183 = vmatpush1.bf16.msra.mxu0 0
  %184 = vmatprep.subr.bf16.mxu0 0
  %185 = vmatpush1.bf16.msra.mxu0 0
  %186 = vmatprep.subr.bf16.mxu0 0
  %187 = vmatpush1.bf16.msra.mxu0 0
  %188 = vmatprep.subr.bf16.mxu0 0
  %189 = vmatpush1.bf16.msra.mxu0 0
  %190 = vmatprep.subr.bf16.mxu0 0
  %191 = vmatpush1.bf16.msra.mxu0 0
  %192 = vmatprep.subr.bf16.mxu0 0
  %193 = vmatpush1.bf16.msra.mxu0 0
  %194 = vmatprep.subr.bf16.mxu0 0
  %195 = vmatpush1.bf16.msra.mxu0 0
  %196 = vmatprep.subr.bf16.mxu0 0
  %197 = vmatpush1.bf16.msra.mxu0 0
  %198 = vmatprep.subr.bf16.mxu0 0
  %199 = vmatpush1.bf16.msra.mxu0 0
  %200 = vmatprep.subr.bf16.mxu0 0
  %201 = vmatpush1.bf16.msra.mxu0 0
  %202 = vmatprep.subr.bf16.mxu0 0
  %203 = vmatpush1.bf16.msra.mxu0 0
  %204 = vmatprep.subr.bf16.mxu0 0
  %205 = vmatpush1.bf16.msra.mxu0 0
  %206 = vmatprep.mubr.bf16.mxu0 0
  %207 = vmatmul.mubr.bf16.gmra.mrb[0].mxu0 %v172
  %v208 = vpop.f32.mrb[0].mxu0
  %v209 = vadd.f32 0.0, %v208
  %v210 = vpop.f32.mrb[0].mxu0
  %v211 = vpop.f32.mrb[0].mxu0
  %v212 = vadd.f32 0.0, %v211
  %v213 = vpop.f32.mrb[0].mxu0
  %214 = vdwg.mxu0
  %215 = vst.msk [vmem:[%s4] sm:$0xff] %vm40, %v209
  %216 = vst.msk [vmem:[%s4 + $0x8] sm:$0xff] %vm40, %v212
  %s217 = scalar_lea.vmem %s1, 48
  %v218 = vld [vmem:[%s217] sm:$0xf]
  %v219 = vld [vmem:[%s217 + $0x4] sm:$0xf]
  %v220 = vld [vmem:[%s217 + $0x8] sm:$0xf]
  %v221 = vld [vmem:[%s217 + $0xc] sm:$0xf]
  %222 = vrot.lane.b32.xlu0 %v27, 32
  %v223 = vpop.permute.xlu0 %222
  %v228 = vunpack.c.l.b16 %v218
  %v229 = vunpack.c.l.b16 %v219
  %v230 = vunpack.c.l.b16 %v220
  %v231 = vunpack.c.l.b16 %v221
  %v232 = vpack.c.b16 %v229, %v228
  %v233 = vpack.c.b16 %v231, %v230
  %v237 = vsel %vm40, %v223, 0
  %239 = vmatprep.subr.bf16.mxu0 0
  %240 = vmatpush1.bf16.msra.mxu0 %v232
  %241 = vmatprep.subr.bf16.mxu0 0
  %242 = vmatpush1.bf16.msra.mxu0 %v233
  %243 = vmatprep.subr.bf16.mxu0 0
  %244 = vmatpush1.bf16.msra.mxu0 0
  %245 = vmatprep.subr.bf16.mxu0 0
  %246 = vmatpush1.bf16.msra.mxu0 0
  %247 = vmatprep.subr.bf16.mxu0 0
  %248 = vmatpush1.bf16.msra.mxu0 0
  %249 = vmatprep.subr.bf16.mxu0 0
  %250 = vmatpush1.bf16.msra.mxu0 0
  %251 = vmatprep.subr.bf16.mxu0 0
  %252 = vmatpush1.bf16.msra.mxu0 0
  %253 = vmatprep.subr.bf16.mxu0 0
  %254 = vmatpush1.bf16.msra.mxu0 0
  %255 = vmatprep.subr.bf16.mxu0 0
  %256 = vmatpush1.bf16.msra.mxu0 0
  %257 = vmatprep.subr.bf16.mxu0 0
  %258 = vmatpush1.bf16.msra.mxu0 0
  %259 = vmatprep.subr.bf16.mxu0 0
  %260 = vmatpush1.bf16.msra.mxu0 0
  %261 = vmatprep.subr.bf16.mxu0 0
  %262 = vmatpush1.bf16.msra.mxu0 0
  %263 = vmatprep.subr.bf16.mxu0 0
  %264 = vmatpush1.bf16.msra.mxu0 0
  %265 = vmatprep.subr.bf16.mxu0 0
  %266 = vmatpush1.bf16.msra.mxu0 0
  %267 = vmatprep.subr.bf16.mxu0 0
  %268 = vmatpush1.bf16.msra.mxu0 0
  %269 = vmatprep.subr.bf16.mxu0 0
  %270 = vmatpush1.bf16.msra.mxu0 0
  %271 = vmatprep.mubr.bf16.mxu0 0
  %272 = vmatmul.mubr.bf16.gmra.mrb[0].mxu0 %v237
  %v273 = vpop.f32.mrb[0].mxu0
  %v274 = vadd.f32 0.0, %v273
  %v275 = vpop.f32.mrb[0].mxu0
  %v276 = vpop.f32.mrb[0].mxu0
  %v277 = vadd.f32 0.0, %v276
  %v278 = vpop.f32.mrb[0].mxu0
  %279 = vdwg.mxu0
  %280 = vst.msk [vmem:[%s5] sm:$0xff] %vm40, %v274
  %281 = vst.msk [vmem:[%s5 + $0x8] sm:$0xff] %vm40, %v277
  %s282 = scalar_lea.vmem %s1, 64
  %v283 = vld [vmem:[%s282] sm:$0xf]
  %v284 = vld [vmem:[%s282 + $0x4] sm:$0xf]
  %v285 = vld [vmem:[%s282 + $0x8] sm:$0xf]
  %v286 = vld [vmem:[%s282 + $0xc] sm:$0xf]
  %v287 = vunpack.c.h.b16 %v17
  %v288 = vunpack.c.h.b16 %v18
  %v289 = vpack.c.b16 %v288, %v287
  %v294 = vunpack.c.l.b16 %v283
  %v295 = vunpack.c.l.b16 %v284
  %v296 = vunpack.c.l.b16 %v285
  %v297 = vunpack.c.l.b16 %v286
  %v298 = vpack.c.b16 %v295, %v294
  %v299 = vpack.c.b16 %v297, %v296
  %v303 = vsel %vm40, %v289, 0
  %305 = vmatprep.subr.bf16.mxu0 0
  %306 = vmatpush1.bf16.msra.mxu0 %v298
  %307 = vmatprep.subr.bf16.mxu0 0
  %308 = vmatpush1.bf16.msra.mxu0 %v299
  %309 = vmatprep.subr.bf16.mxu0 0
  %310 = vmatpush1.bf16.msra.mxu0 0
  %311 = vmatprep.subr.bf16.mxu0 0
  %312 = vmatpush1.bf16.msra.mxu0 0
  %313 = vmatprep.subr.bf16.mxu0 0
  %314 = vmatpush1.bf16.msra.mxu0 0
  %315 = vmatprep.subr.bf16.mxu0 0
  %316 = vmatpush1.bf16.msra.mxu0 0
  %317 = vmatprep.subr.bf16.mxu0 0
  %318 = vmatpush1.bf16.msra.mxu0 0
  %319 = vmatprep.subr.bf16.mxu0 0
  %320 = vmatpush1.bf16.msra.mxu0 0
  %321 = vmatprep.subr.bf16.mxu0 0
  %322 = vmatpush1.bf16.msra.mxu0 0
  %323 = vmatprep.subr.bf16.mxu0 0
  %324 = vmatpush1.bf16.msra.mxu0 0
  %325 = vmatprep.subr.bf16.mxu0 0
  %326 = vmatpush1.bf16.msra.mxu0 0
  %327 = vmatprep.subr.bf16.mxu0 0
  %328 = vmatpush1.bf16.msra.mxu0 0
  %329 = vmatprep.subr.bf16.mxu0 0
  %330 = vmatpush1.bf16.msra.mxu0 0
  %331 = vmatprep.subr.bf16.mxu0 0
  %332 = vmatpush1.bf16.msra.mxu0 0
  %333 = vmatprep.subr.bf16.mxu0 0
  %334 = vmatpush1.bf16.msra.mxu0 0
  %335 = vmatprep.subr.bf16.mxu0 0
  %336 = vmatpush1.bf16.msra.mxu0 0
  %337 = vmatprep.mubr.bf16.mxu0 0
  %338 = vmatmul.mubr.bf16.gmra.mrb[0].mxu0 %v303
  %v339 = vpop.f32.mrb[0].mxu0
  %v340 = vadd.f32 0.0, %v339
  %v341 = vpop.f32.mrb[0].mxu0
  %v342 = vpop.f32.mrb[0].mxu0
  %v343 = vadd.f32 0.0, %v342
  %v344 = vpop.f32.mrb[0].mxu0
  %345 = vdwg.mxu0
  %346 = vst.msk [vmem:[%s6] sm:$0xff] %vm40, %v340
  %347 = vst.msk [vmem:[%s6 + $0x8] sm:$0xff] %vm40, %v343
  // Predicated region
  $region10: #{birwkv_tmix_forward.13} parent=0 // pred_check
    _
  $region11: #{birwkv_tmix_forward.13} parent=0 // pred_check_branch
    %349 = sbr.rel (0) target = $region13
  $region12: #{birwkv_tmix_forward.13} parent=0 // pred_region
    _
  $region13: #{birwkv_tmix_forward.13} parent=0 // pred_fallthru
    _
  // Predicated region
  $region14: #{birwkv_tmix_forward.13} parent=0 // pred_check
    _
  $region15: #{birwkv_tmix_forward.13} parent=0 // pred_check_branch
    %351 = sbr.rel (0) target = $region17
  $region16: #{birwkv_tmix_forward.13} parent=0 // pred_region
    _
  $region17: #{birwkv_tmix_forward.13} parent=0 // pred_fallthru
    _
  // Predicated region
  $region18: #{birwkv_tmix_forward.13} parent=0 // pred_check
    _
  $region19: #{birwkv_tmix_forward.13} parent=0 // pred_check_branch
    %353 = sbr.rel (0) target = $region21
  $region20: #{birwkv_tmix_forward.13} parent=0 // pred_region
    _
  $region21: #{birwkv_tmix_forward.13} parent=0 // pred_fallthru
    _
  // Predicated region
  $region22: #{birwkv_tmix_forward.13} parent=0 // pred_check
    _
  $region23: #{birwkv_tmix_forward.13} parent=0 // pred_check_branch
    %355 = sbr.rel (0) target = $region25
  $region24: #{birwkv_tmix_forward.13} parent=0 // pred_region
    _
  $region25: #{birwkv_tmix_forward.13} parent=0 // pred_fallthru
    _
  // Predicated region
  $region26: #{birwkv_tmix_forward.13} parent=0 // pred_check
    _
  $region27: #{birwkv_tmix_forward.13} parent=0 // pred_check_branch
    %357 = sbr.rel (0) target = $region29
  $region28: #{birwkv_tmix_forward.13} parent=0 // pred_region
    _
  $region29: #{birwkv_tmix_forward.13} parent=0 // pred_fallthru
    _
  // Predicated region
  $region30: #{birwkv_tmix_forward.13} parent=0 // pred_check
    _
  $region31: #{birwkv_tmix_forward.13} parent=0 // pred_check_branch
    %359 = sbr.rel (0) target = $region33
  $region32: #{birwkv_tmix_forward.13} parent=0 // pred_region
    _
  $region33: #{birwkv_tmix_forward.13} parent=0 // pred_fallthru
    _
  // Predicated region
  $region34: #{birwkv_tmix_forward.13} parent=0 // pred_check
    _
  $region35: #{birwkv_tmix_forward.13} parent=0 // pred_check_branch
    %361 = sbr.rel (0) target = $region37
  $region36: #{birwkv_tmix_forward.13} parent=0 // pred_region
    _
  $region37: #{birwkv_tmix_forward.13} parent=0 // pred_fallthru
    _
  // Predicated region
  $region38: #{birwkv_tmix_forward.13} parent=0 // pred_check
    _
  $region39: #{birwkv_tmix_forward.13} parent=0 // pred_check_branch
    %363 = sbr.rel (0) target = $region41
  $region40: #{birwkv_tmix_forward.13} parent=0 // pred_region
    _
  $region41: #{birwkv_tmix_forward.13} parent=0 // pred_fallthru
    _
  // Predicated region
  $region42: #{birwkv_tmix_forward.13} parent=0 // pred_check
    _
  $region43: #{birwkv_tmix_forward.13} parent=0 // pred_check_branch
    %365 = sbr.rel (0) target = $region45
  $region44: #{birwkv_tmix_forward.13} parent=0 // pred_region
    _
  $region45: #{birwkv_tmix_forward.13} parent=0 // pred_fallthru
    _
  // Predicated region
  $region46: #{birwkv_tmix_forward.13} parent=0 // pred_check
    _
  $region47: #{birwkv_tmix_forward.13} parent=0 // pred_check_branch
    %367 = sbr.rel (0) target = $region49
  $region48: #{birwkv_tmix_forward.13} parent=0 // pred_region
    _
  $region49: #{birwkv_tmix_forward.13} parent=0 // pred_fallthru
    _

// kernel: birwkv_tmix_forward.15
$region0: #{birwkv_tmix_forward.15}
  #allocation0 [shape = 'u32[]', space=smem, size = 0x4, offset = 0x4, fixed_abs, tag = 'smem constant byte address 0x4 - core index']
  #allocation1 [shape = 'u32[144,128]{1,0:T(1,128)}', space=vmem, size = 0x12000, scoped, tag = 'internal scratch']
  #allocation2 [shape = 'f32[16,32]{1,0:T(8,128)}', space=vmem, size = 0x2000, scoped, tag = 'scratch operand']
  %s0 = inlined_call_operand.vmem [shape: bf16[16,32], index: 0, kind: input, shape index: {}]
  %s1 = inlined_call_operand.vmem [shape: bf16[32,32], index: 1, kind: input, shape index: {}]
  %s2 = inlined_call_operand.vmem [shape: f32[16,32], index: 2, kind: output, shape index: {}]
  %s3 = sld [smem:[#allocation0]]
  $region26: #{birwkv_tmix_forward.15} parent=0
    _
  %s5 = ssub.s32 1, %s3
  %s6 = scalar_select 0, %s5, %s3
  // Predicated region
  $region2: #{birwkv_tmix_forward.15} parent=0 // pred_check
    _
  $region3: #{birwkv_tmix_forward.15} parent=0 // pred_check_branch
    %8 = sbr.rel (0) target = $region5
  $region4: #{birwkv_tmix_forward.15} parent=0 // pred_region
    _
  $region5: #{birwkv_tmix_forward.15} parent=0 // pred_fallthru
    _
  // Predicated region
  $region6: #{birwkv_tmix_forward.15} parent=0 // pred_check
    _
  $region7: #{birwkv_tmix_forward.15} parent=0 // pred_check_branch
    %10 = sbr.rel (0) target = $region9
  $region8: #{birwkv_tmix_forward.15} parent=0 // pred_region
    _
  $region9: #{birwkv_tmix_forward.15} parent=0 // pred_fallthru
    _
  %p12 = scmp.eq.s32.totalorder 0, 0
  // Predicated region
  $region10: #{birwkv_tmix_forward.15} parent=0 // pred_check
    %p13 = pneg %p12
  $region11: #{birwkv_tmix_forward.15} parent=0 // pred_check_branch
    %15 = sbr.rel (%p13) target = $region13
  $region12: #{birwkv_tmix_forward.15} parent=0 // pred_region
    %vm16 = vcmask 261120
    %17 = vst.msk [vmem:[#allocation2] sm:$0xff] %vm16, 0.0
    %18 = vst.msk [vmem:[#allocation2 + $0x8] sm:$0xff] %vm16, 0.0
  $region13: #{birwkv_tmix_forward.15} parent=0 // pred_fallthru
    _
  %v19 = vld [vmem:[#allocation2] sm:$0xff]
  %v20 = vld [vmem:[#allocation2 + $0x8] sm:$0xff]
  %v21 = vld [vmem:[%s0] sm:$0xf]
  %v22 = vld [vmem:[%s0 + $0x4] sm:$0xf]
  %v23 = vld [vmem:[%s1] sm:$0xf]
  %v24 = vld [vmem:[%s1 + $0x4] sm:$0xf]
  %v25 = vld [vmem:[%s1 + $0x8] sm:$0xf]
  %v26 = vld [vmem:[%s1 + $0xc] sm:$0xf]
  %v29 = vunpack.c.l.b16 %v21
  %v30 = vunpack.c.l.b16 %v22
  %v31 = vpack.c.b16 %v30, %v29
  %v36 = vunpack.c.l.b16 %v23
  %v37 = vunpack.c.l.b16 %v24
  %v38 = vunpack.c.l.b16 %v25
  %v39 = vunpack.c.l.b16 %v26
  %v40 = vpack.c.b16 %v37, %v36
  %v41 = vpack.c.b16 %v39, %v38
  %vm44 = vcmask 261120
  %v46 = vsel %vm44, %v31, 0
  %48 = vmatprep.subr.bf16.mxu0 0
  %49 = vmatpush1.bf16.msra.mxu0 %v40
  %50 = vmatprep.subr.bf16.mxu0 0
  %51 = vmatpush1.bf16.msra.mxu0 %v41
  %52 = vmatprep.subr.bf16.mxu0 0
  %53 = vmatpush1.bf16.msra.mxu0 0
  %54 = vmatprep.subr.bf16.mxu0 0
  %55 = vmatpush1.bf16.msra.mxu0 0
  %56 = vmatprep.subr.bf16.mxu0 0
  %57 = vmatpush1.bf16.msra.mxu0 0
  %58 = vmatprep.subr.bf16.mxu0 0
  %59 = vmatpush1.bf16.msra.mxu0 0
  %60 = vmatprep.subr.bf16.mxu0 0
  %61 = vmatpush1.bf16.msra.mxu0 0
  %62 = vmatprep.subr.bf16.mxu0 0
  %63 = vmatpush1.bf16.msra.mxu0 0
  %64 = vmatprep.subr.bf16.mxu0 0
  %65 = vmatpush1.bf16.msra.mxu0 0
  %66 = vmatprep.subr.bf16.mxu0 0
  %67 = vmatpush1.bf16.msra.mxu0 0
  %68 = vmatprep.subr.bf16.mxu0 0
  %69 = vmatpush1.bf16.msra.mxu0 0
  %70 = vmatprep.subr.bf16.mxu0 0
  %71 = vmatpush1.bf16.msra.mxu0 0
  %72 = vmatprep.subr.bf16.mxu0 0
  %73 = vmatpush1.bf16.msra.mxu0 0
  %74 = vmatprep.subr.bf16.mxu0 0
  %75 = vmatpush1.bf16.msra.mxu0 0
  %76 = vmatprep.subr.bf16.mxu0 0
  %77 = vmatpush1.bf16.msra.mxu0 0
  %78 = vmatprep.subr.bf16.mxu0 0
  %79 = vmatpush1.bf16.msra.mxu0 0
  %80 = vmatprep.mubr.bf16.mxu0 0
  %81 = vmatmul.mubr.bf16.gmra.mrb[0].mxu0 %v46
  %v82 = vpop.f32.mrb[0].mxu0
  %v83 = vadd.f32 0.0, %v82
  %v84 = vpop.f32.mrb[0].mxu0
  %v85 = vpop.f32.mrb[0].mxu0
  %v86 = vadd.f32 0.0, %v85
  %v87 = vpop.f32.mrb[0].mxu0
  %88 = vdwg.mxu0
  %v89 = vadd.f32 %v19, %v83
  %v90 = vadd.f32 %v20, %v86
  %91 = vst.msk [vmem:[#allocation2] sm:$0xff] %vm44, %v89
  %92 = vst.msk [vmem:[#allocation2 + $0x8] sm:$0xff] %vm44, %v90
  // Predicated region
  $region14: #{birwkv_tmix_forward.15} parent=0 // pred_check
    %p93 = pneg %p12
  $region15: #{birwkv_tmix_forward.15} parent=0 // pred_check_branch
    %95 = sbr.rel (%p93) target = $region17
  $region16: #{birwkv_tmix_forward.15} parent=0 // pred_region
    %v96 = vld [vmem:[#allocation2] sm:$0xff]
    %v97 = vld [vmem:[#allocation2 + $0x8] sm:$0xff]
    %98 = vst.msk [vmem:[%s2] sm:$0xff] %vm44, %v96
    %99 = vst.msk [vmem:[%s2 + $0x8] sm:$0xff] %vm44, %v97
  $region17: #{birwkv_tmix_forward.15} parent=0 // pred_fallthru
    _
  // Predicated region
  $region18: #{birwkv_tmix_forward.15} parent=0 // pred_check
    _
  $region19: #{birwkv_tmix_forward.15} parent=0 // pred_check_branch
    %101 = sbr.rel (0) target = $region21
  $region20: #{birwkv_tmix_forward.15} parent=0 // pred_region
    _
  $region21: #{birwkv_tmix_forward.15} parent=0 // pred_fallthru
    _
  // Predicated region
  $region22: #{birwkv_tmix_forward.15} parent=0 // pred_check
    _
  $region23: #{birwkv_tmix_forward.15} parent=0 // pred_check_branch
    %103 = sbr.rel (0) target = $region25
  $region24: #{birwkv_tmix_forward.15} parent=0 // pred_region
    _
  $region25: #{birwkv_tmix_forward.15} parent=0 // pred_fallthru
    _

// kernel: birwkv_tmix_forward.18
$region0: #{birwkv_tmix_forward.18}
  #allocation0 [shape = 'u32[]', space=smem, size = 0x4, offset = 0x4, fixed_abs, tag = 'smem constant byte address 0x4 - core index']
  #allocation1 [shape = 'u32[144,128]{1,0:T(1,128)}', space=vmem, size = 0x12000, scoped, tag = 'internal scratch']
  #allocation2 [shape = 'f32[16,64]{1,0:T(8,128)}', space=vmem, size = 0x2000, scoped, tag = 'scratch operand']
  %s0 = inlined_call_operand.vmem [shape: bf16[16,32], index: 0, kind: input, shape index: {}]
  %s1 = inlined_call_operand.vmem [shape: bf16[32,64], index: 1, kind: input, shape index: {}]
  %s2 = inlined_call_operand.vmem [shape: f32[16,64], index: 2, kind: output, shape index: {}]
  %s3 = sld [smem:[#allocation0]]
  $region26: #{birwkv_tmix_forward.18} parent=0
    _
  %s5 = ssub.s32 1, %s3
  %s6 = scalar_select 0, %s5, %s3
  // Predicated region
  $region2: #{birwkv_tmix_forward.18} parent=0 // pred_check
    _
  $region3: #{birwkv_tmix_forward.18} parent=0 // pred_check_branch
    %8 = sbr.rel (0) target = $region5
  $region4: #{birwkv_tmix_forward.18} parent=0 // pred_region
    _
  $region5: #{birwkv_tmix_forward.18} parent=0 // pred_fallthru
    _
  // Predicated region
  $region6: #{birwkv_tmix_forward.18} parent=0 // pred_check
    _
  $region7: #{birwkv_tmix_forward.18} parent=0 // pred_check_branch
    %10 = sbr.rel (0) target = $region9
  $region8: #{birwkv_tmix_forward.18} parent=0 // pred_region
    _
  $region9: #{birwkv_tmix_forward.18} parent=0 // pred_fallthru
    _
  %p12 = scmp.eq.s32.totalorder 0, 0
  // Predicated region
  $region10: #{birwkv_tmix_forward.18} parent=0 // pred_check
    %p13 = pneg %p12
  $region11: #{birwkv_tmix_forward.18} parent=0 // pred_check_branch
    %15 = sbr.rel (%p13) target = $region13
  $region12: #{birwkv_tmix_forward.18} parent=0 // pred_region
    %vm16 = vcmask 523264
    %17 = vst.msk [vmem:[#allocation2] sm:$0xff] %vm16, 0.0
    %18 = vst.msk [vmem:[#allocation2 + $0x8] sm:$0xff] %vm16, 0.0
  $region13: #{birwkv_tmix_forward.18} parent=0 // pred_fallthru
    _
  %v19 = vld [vmem:[#allocation2] sm:$0xff]
  %v20 = vld [vmem:[#allocation2 + $0x8] sm:$0xff]
  %v21 = vld [vmem:[%s0] sm:$0xf]
  %v22 = vld [vmem:[%s0 + $0x4] sm:$0xf]
  %v23 = vld [vmem:[%s1] sm:$0xf]
  %v24 = vld [vmem:[%s1 + $0x4] sm:$0xf]
  %v25 = vld [vmem:[%s1 + $0x8] sm:$0xf]
  %v26 = vld [vmem:[%s1 + $0xc] sm:$0xf]
  %v29 = vunpack.c.l.b16 %v21
  %v30 = vunpack.c.l.b16 %v22
  %v31 = vpack.c.b16 %v30, %v29
  %v36 = vunpack.c.l.b16 %v23
  %v37 = vunpack.c.l.b16 %v24
  %v38 = vunpack.c.l.b16 %v25
  %v39 = vunpack.c.l.b16 %v26
  %v40 = vpack.c.b16 %v37, %v36
  %v41 = vpack.c.b16 %v39, %v38
  %vm44 = vcmask 261120
  %v46 = vsel %vm44, %v31, 0
  %48 = vmatprep.subr.bf16.mxu0 0
  %49 = vmatpush1.bf16.msra.mxu0 %v40
  %50 = vmatprep.subr.bf16.mxu0 0
  %51 = vmatpush1.bf16.msra.mxu0 %v41
  %52 = vmatprep.subr.bf16.mxu0 0
  %53 = vmatpush1.bf16.msra.mxu0 0
  %54 = vmatprep.subr.bf16.mxu0 0
  %55 = vmatpush1.bf16.msra.mxu0 0
  %56 = vmatprep.subr.bf16.mxu0 0
  %57 = vmatpush1.bf16.msra.mxu0 0
  %58 = vmatprep.subr.bf16.mxu0 0
  %59 = vmatpush1.bf16.msra.mxu0 0
  %60 = vmatprep.subr.bf16.mxu0 0
  %61 = vmatpush1.bf16.msra.mxu0 0
  %62 = vmatprep.subr.bf16.mxu0 0
  %63 = vmatpush1.bf16.msra.mxu0 0
  %64 = vmatprep.subr.bf16.mxu0 0
  %65 = vmatpush1.bf16.msra.mxu0 0
  %66 = vmatprep.subr.bf16.mxu0 0
  %67 = vmatpush1.bf16.msra.mxu0 0
  %68 = vmatprep.subr.bf16.mxu0 0
  %69 = vmatpush1.bf16.msra.mxu0 0
  %70 = vmatprep.subr.bf16.mxu0 0
  %71 = vmatpush1.bf16.msra.mxu0 0
  %72 = vmatprep.subr.bf16.mxu0 0
  %73 = vmatpush1.bf16.msra.mxu0 0
  %74 = vmatprep.subr.bf16.mxu0 0
  %75 = vmatpush1.bf16.msra.mxu0 0
  %76 = vmatprep.subr.bf16.mxu0 0
  %77 = vmatpush1.bf16.msra.mxu0 0
  %78 = vmatprep.subr.bf16.mxu0 0
  %79 = vmatpush1.bf16.msra.mxu0 0
  %80 = vmatprep.mubr.bf16.mxu0 0
  %81 = vmatmul.mubr.bf16.gmra.mrb[0].mxu0 %v46
  %v82 = vpop.f32.mrb[0].mxu0
  %v83 = vadd.f32 0.0, %v82
  %v84 = vpop.f32.mrb[0].mxu0
  %v85 = vpop.f32.mrb[0].mxu0
  %v86 = vadd.f32 0.0, %v85
  %v87 = vpop.f32.mrb[0].mxu0
  %88 = vdwg.mxu0
  %v89 = vadd.f32 %v19, %v83
  %v90 = vadd.f32 %v20, %v86
  %vm91 = vcmask 523264
  %92 = vst.msk [vmem:[#allocation2] sm:$0xff] %vm91, %v89
  %93 = vst.msk [vmem:[#allocation2 + $0x8] sm:$0xff] %vm91, %v90
  // Predicated region
  $region14: #{birwkv_tmix_forward.18} parent=0 // pred_check
    %p94 = pneg %p12
  $region15: #{birwkv_tmix_forward.18} parent=0 // pred_check_branch
    %96 = sbr.rel (%p94) target = $region17
  $region16: #{birwkv_tmix_forward.18} parent=0 // pred_region
    %v97 = vld [vmem:[#allocation2] sm:$0xff]
    %v98 = vld [vmem:[#allocation2 + $0x8] sm:$0xff]
    %v99 = vtanh.pop %v97
    %v100 = vtanh.pop %v98
    %101 = vst.msk [vmem:[%s2] sm:$0xff] %vm91, %v99
    %102 = vst.msk [vmem:[%s2 + $0x8] sm:$0xff] %vm91, %v100
  $region17: #{birwkv_tmix_forward.18} parent=0 // pred_fallthru
    _
  // Predicated region
  $region18: #{birwkv_tmix_forward.18} parent=0 // pred_check
    _
  $region19: #{birwkv_tmix_forward.18} parent=0 // pred_check_branch
    %104 = sbr.rel (0) target = $region21
  $region20: #{birwkv_tmix_forward.18} parent=0 // pred_region
    _
  $region21: #{birwkv_tmix_forward.18} parent=0 // pred_fallthru
    _
  // Predicated region
  $region22: #{birwkv_tmix_forward.18} parent=0 // pred_check
    _
  $region23: #{birwkv_tmix_forward.18} parent=0 // pred_check_branch
    %106 = sbr.rel (0) target = $region25
  $region24: #{birwkv_tmix_forward.18} parent=0 // pred_region
    _
  $region25: #{birwkv_tmix_forward.18} parent=0 // pred_fallthru
    _

// kernel: birwkv_tmix_forward.19
$region0: #{birwkv_tmix_forward.19}
  #allocation0 [shape = 'u32[]', space=smem, size = 0x4, offset = 0x4, fixed_abs, tag = 'smem constant byte address 0x4 - core index']
  #allocation1 [shape = 'u32[144,128]{1,0:T(1,128)}', space=vmem, size = 0x12000, scoped, tag = 'internal scratch']
  #allocation2 [shape = 'f32[16,32]{1,0:T(8,128)}', space=vmem, size = 0x2000, scoped, tag = 'scratch operand']
  %s0 = inlined_call_operand.vmem [shape: bf16[16,64], index: 0, kind: input, shape index: {}]
  %s1 = inlined_call_operand.vmem [shape: bf16[64,32], index: 1, kind: input, shape index: {}]
  %s2 = inlined_call_operand.vmem [shape: f32[16,32], index: 2, kind: output, shape index: {}]
  %s3 = sld [smem:[#allocation0]]
  $region26: #{birwkv_tmix_forward.19} parent=0
    _
  %s5 = ssub.s32 1, %s3
  %s6 = scalar_select 0, %s5, %s3
  // Predicated region
  $region2: #{birwkv_tmix_forward.19} parent=0 // pred_check
    _
  $region3: #{birwkv_tmix_forward.19} parent=0 // pred_check_branch
    %8 = sbr.rel (0) target = $region5
  $region4: #{birwkv_tmix_forward.19} parent=0 // pred_region
    _
  $region5: #{birwkv_tmix_forward.19} parent=0 // pred_fallthru
    _
  // Predicated region
  $region6: #{birwkv_tmix_forward.19} parent=0 // pred_check
    _
  $region7: #{birwkv_tmix_forward.19} parent=0 // pred_check_branch
    %10 = sbr.rel (0) target = $region9
  $region8: #{birwkv_tmix_forward.19} parent=0 // pred_region
    _
  $region9: #{birwkv_tmix_forward.19} parent=0 // pred_fallthru
    _
  %p12 = scmp.eq.s32.totalorder 0, 0
  // Predicated region
  $region10: #{birwkv_tmix_forward.19} parent=0 // pred_check
    %p13 = pneg %p12
  $region11: #{birwkv_tmix_forward.19} parent=0 // pred_check_branch
    %15 = sbr.rel (%p13) target = $region13
  $region12: #{birwkv_tmix_forward.19} parent=0 // pred_region
    %vm16 = vcmask 261120
    %17 = vst.msk [vmem:[#allocation2] sm:$0xff] %vm16, 0.0
    %18 = vst.msk [vmem:[#allocation2 + $0x8] sm:$0xff] %vm16, 0.0
  $region13: #{birwkv_tmix_forward.19} parent=0 // pred_fallthru
    _
  %v19 = vld [vmem:[#allocation2] sm:$0xff]
  %v20 = vld [vmem:[#allocation2 + $0x8] sm:$0xff]
  %v21 = vld [vmem:[%s0] sm:$0xf]
  %v22 = vld [vmem:[%s0 + $0x4] sm:$0xf]
  %v23 = vld [vmem:[%s1] sm:$0xf]
  %v24 = vld [vmem:[%s1 + $0x4] sm:$0xf]
  %v25 = vld [vmem:[%s1 + $0x8] sm:$0xf]
  %v26 = vld [vmem:[%s1 + $0xc] sm:$0xf]
  %v27 = vld [vmem:[%s1 + $0x10] sm:$0xf]
  %v28 = vld [vmem:[%s1 + $0x14] sm:$0xf]
  %v29 = vld [vmem:[%s1 + $0x18] sm:$0xf]
  %v30 = vld [vmem:[%s1 + $0x1c] sm:$0xf]
  %v33 = vunpack.c.l.b16 %v21
  %v34 = vunpack.c.l.b16 %v22
  %v35 = vpack.c.b16 %v34, %v33
  %v44 = vunpack.c.l.b16 %v23
  %v45 = vunpack.c.l.b16 %v24
  %v46 = vunpack.c.l.b16 %v25
  %v47 = vunpack.c.l.b16 %v26
  %v48 = vunpack.c.l.b16 %v27
  %v49 = vunpack.c.l.b16 %v28
  %v50 = vunpack.c.l.b16 %v29
  %v51 = vunpack.c.l.b16 %v30
  %v52 = vpack.c.b16 %v45, %v44
  %v53 = vpack.c.b16 %v47, %v46
  %v54 = vpack.c.b16 %v49, %v48
  %v55 = vpack.c.b16 %v51, %v50
  %vm60 = vcmask 523264
  %v62 = vsel %vm60, %v35, 0
  %64 = vmatprep.subr.bf16.mxu0 0
  %65 = vmatpush1.bf16.msra.mxu0 %v52
  %66 = vmatprep.subr.bf16.mxu0 0
  %67 = vmatpush1.bf16.msra.mxu0 %v53
  %68 = vmatprep.subr.bf16.mxu0 0
  %69 = vmatpush1.bf16.msra.mxu0 %v54
  %70 = vmatprep.subr.bf16.mxu0 0
  %71 = vmatpush1.bf16.msra.mxu0 %v55
  %72 = vmatprep.subr.bf16.mxu0 0
  %73 = vmatpush1.bf16.msra.mxu0 0
  %74 = vmatprep.subr.bf16.mxu0 0
  %75 = vmatpush1.bf16.msra.mxu0 0
  %76 = vmatprep.subr.bf16.mxu0 0
  %77 = vmatpush1.bf16.msra.mxu0 0
  %78 = vmatprep.subr.bf16.mxu0 0
  %79 = vmatpush1.bf16.msra.mxu0 0
  %80 = vmatprep.subr.bf16.mxu0 0
  %81 = vmatpush1.bf16.msra.mxu0 0
  %82 = vmatprep.subr.bf16.mxu0 0
  %83 = vmatpush1.bf16.msra.mxu0 0
  %84 = vmatprep.subr.bf16.mxu0 0
  %85 = vmatpush1.bf16.msra.mxu0 0
  %86 = vmatprep.subr.bf16.mxu0 0
  %87 = vmatpush1.bf16.msra.mxu0 0
  %88 = vmatprep.subr.bf16.mxu0 0
  %89 = vmatpush1.bf16.msra.mxu0 0
  %90 = vmatprep.subr.bf16.mxu0 0
  %91 = vmatpush1.bf16.msra.mxu0 0
  %92 = vmatprep.subr.bf16.mxu0 0
  %93 = vmatpush1.bf16.msra.mxu0 0
  %94 = vmatprep.subr.bf16.mxu0 0
  %95 = vmatpush1.bf16.msra.mxu0 0
  %96 = vmatprep.mubr.bf16.mxu0 0
  %97 = vmatmul.mubr.bf16.gmra.mrb[0].mxu0 %v62
  %v98 = vpop.f32.mrb[0].mxu0
  %v99 = vadd.f32 0.0, %v98
  %v100 = vpop.f32.mrb[0].mxu0
  %v101 = vpop.f32.mrb[0].mxu0
  %v102 = vadd.f32 0.0, %v101
  %v103 = vpop.f32.mrb[0].mxu0
  %104 = vdwg.mxu0
  %v105 = vadd.f32 %v19, %v99
  %v106 = vadd.f32 %v20, %v102
  %vm107 = vcmask 261120
  %108 = vst.msk [vmem:[#allocation2] sm:$0xff] %vm107, %v105
  %109 = vst.msk [vmem:[#allocation2 + $0x8] sm:$0xff] %vm107, %v106
  // Predicated region
  $region14: #{birwkv_tmix_forward.19} parent=0 // pred_check
    %p110 = pneg %p12
  $region15: #{birwkv_tmix_forward.19} parent=0 // pred_check_branch
    %112 = sbr.rel (%p110) target = $region17
  $region16: #{birwkv_tmix_forward.19} parent=0 // pred_region
    %v113 = vld [vmem:[#allocation2] sm:$0xff]
    %v114 = vld [vmem:[#allocation2 + $0x8] sm:$0xff]
    %115 = vst.msk [vmem:[%s2] sm:$0xff] %vm107, %v113
    %116 = vst.msk [vmem:[%s2 + $0x8] sm:$0xff] %vm107, %v114
  $region17: #{birwkv_tmix_forward.19} parent=0 // pred_fallthru
    _
  // Predicated region
  $region18: #{birwkv_tmix_forward.19} parent=0 // pred_check
    _
  $region19: #{birwkv_tmix_forward.19} parent=0 // pred_check_branch
    %118 = sbr.rel (0) target = $region21
  $region20: #{birwkv_tmix_forward.19} parent=0 // pred_region
    _
  $region21: #{birwkv_tmix_forward.19} parent=0 // pred_fallthru
    _
  // Predicated region
  $region22: #{birwkv_tmix_forward.19} parent=0 // pred_check
    _
  $region23: #{birwkv_tmix_forward.19} parent=0 // pred_check_branch
    %120 = sbr.rel (0) target = $region25
  $region24: #{birwkv_tmix_forward.19} parent=0 // pred_region
    _
  $region25: #{birwkv_tmix_forward.19} parent=0 // pred_fallthru
    _

// kernel: birwkv_tmix_forward.20
$region0: #{birwkv_tmix_forward.20}
  #allocation0 [shape = 'u32[]', space=smem, size = 0x4, offset = 0x4, fixed_abs, tag = 'smem constant byte address 0x4 - core index']
  #allocation1 [shape = 'u32[144,128]{1,0:T(1,128)}', space=vmem, size = 0x12000, scoped, tag = 'internal scratch']
  #allocation2 [shape = 'f32[8,8]{1,0:T(8,128)}', space=vmem, size = 0x1000, scoped, tag = 'scratch operand']
  %s0 = inlined_call_operand.vmem [shape: f32[2,4,8,8], index: 0, kind: input, shape index: {}]
  %s1 = inlined_call_operand.vmem [shape: f32[2,4,8,8], index: 1, kind: input, shape index: {}]
  %s2 = inlined_call_operand.vmem [shape: f32[2,4,8,8], index: 2, kind: input, shape index: {}]
  %s3 = inlined_call_operand.vmem [shape: f32[2,4,8,8], index: 3, kind: input, shape index: {}]
  %s4 = inlined_call_operand.vmem [shape: f32[4,1,8], index: 4, kind: input, shape index: {}]
  %s5 = inlined_call_operand.vmem [shape: f32[2,4,8,8], index: 5, kind: output, shape index: {}]
  %s6 = sld [smem:[#allocation0]]
  $region57: #{birwkv_tmix_forward.20} parent=0
    _
  %s8 = ssub.s32 1, %s6
  %s9 = scalar_select 0, %s8, %s6
  loop: start=0, step=1, limit=10
  $region2: #{birwkv_tmix_forward.20} parent=0 // loop_pre_header
    _
  $region3: #{birwkv_tmix_forward.20} parent=0 // loop_header
    %s11 = sphi 0, %s15
    %p12 = scmp.ge.s32.totalorder %s11, 10
    %s18 = sphi 0, %s37
    %s19 = sphi 0, %s33
    %s20 = sphi 0, %s29
    %s21 = sphi 0, %s18
    %s22 = sphi 0, %s19
    %s23 = sphi 0, %s20
    %s24 = sphi 0, %s21
    %s25 = sphi 0, %s22
    %s26 = sphi 0, %s23
    %s44 = sphi 0, %s46
    %s47 = sphi 0, %s44
    %s48 = sphi 0, %s47
    %s64 = sphi 0, %s48
    %s74 = sphi 0, %s76
    %s77 = sphi 0, %s74
    %s78 = sphi 0, %s77
    %s94 = sphi 0, %s78
    %s104 = sphi 0, %s106
    %s107 = sphi 0, %s104
    %s108 = sphi 0, %s107
    %s124 = sphi 0, %s108
    %s134 = sphi 0, %s136
    %s137 = sphi 0, %s134
    %s138 = sphi 0, %s137
    %s154 = sphi 0, %s138
    %s160 = sphi 0, %s162
    %s163 = sphi 0, %s160
    %s164 = sphi 0, %s163
    %s180 = sphi 0, %s164
    %s190 = sphi 0, %s192
    %s193 = sphi 0, %s190
    %s194 = sphi 0, %s193
    %s210 = sphi 0, %s194
  $region4: #{birwkv_tmix_forward.20} parent=0 // loop_header_branch
    %14 = sbr.rel (%p12) target = $region8
  $region5: #{birwkv_tmix_forward.20} parent=0 // loop_body
    %s16 = ssub.s32 %s11, 1
    %s17 = ssub.s32 %s11, 2
    %s27 = sadd.s32 1, %s20
    %p28 = scmp.ge.s32.totalorder %s27, 1
    %s29 = scalar_select %p28, 0, %s27
    %s30 = sadd.s32 1, %s19
    %s31 = scalar_select %p28, %s30, %s19
    %p32 = scmp.ge.s32.totalorder %s31, 4
    %s33 = scalar_select %p32, 0, %s31
    %s34 = sadd.s32 1, %s18
    %s35 = scalar_select %p32, %s34, %s18
    %p36 = scmp.ge.s32.totalorder %s35, 2
    %s37 = scalar_select %p36, 0, %s35
    %s38 = ssub.s32 %s18, %s37
    %s39 = ssub.s32 %s19, %s33
    %s40 = sor.u32 %s38, %s39
    %s41 = ssub.s32 %s20, %s29
    %s42 = sor.u32 %s40, %s41
    %p43 = scmp.eq.s32.totalorder %s42, 0
    %s45 = sadd.s32 %s44, 1
    %s46 = scalar_select %p43, %s44, %s45
    %p49 = pneg %p43
    %p50 = scmp.eq.s32.totalorder %s11, 7
    %p51 = por %p49, %p50
    %p52 = scmp.ne.s32.totalorder %s44, %s47
    %p53 = scmp.eq.s32.totalorder %s11, 0
    %p54 = por %p52, %p53
    %p55 = scmp.ne.s32.totalorder %s44, %s47
    %p56 = scmp.eq.s32.totalorder %s16, 7
    %p57 = por %p55, %p56
    %p58 = scmp.ne.s32.totalorder %s47, %s48
    %p59 = scmp.eq.s32.totalorder %s16, 0
    %p60 = por %p58, %p59
    %p61 = scmp.ne.s32.totalorder %s47, %s48
    %p62 = scmp.eq.s32.totalorder %s17, 7
    %p63 = por %p61, %p62
    %p65 = scmp.ne.s32.totalorder %s48, %s64
    %p66 = scmp.eq.s32.totalorder %s17, 0
    %p67 = por %p65, %p66
    %s68 = ssub.s32 %s18, %s37
    %s69 = ssub.s32 %s19, %s33
    %s70 = sor.u32 %s68, %s69
    %s71 = ssub.s32 %s20, %s29
    %s72 = sor.u32 %s70, %s71
    %p73 = scmp.eq.s32.totalorder %s72, 0
    %s75 = sadd.s32 %s74, 1
    %s76 = scalar_select %p73, %s74, %s75
    %p79 = pneg %p73
    %p80 = scmp.eq.s32.totalorder %s11, 7
    %p81 = por %p79, %p80
    %p82 = scmp.ne.s32.totalorder %s74, %s77
    %p83 = scmp.eq.s32.totalorder %s11, 0
    %p84 = por %p82, %p83
    %p85 = scmp.ne.s32.totalorder %s74, %s77
    %p86 = scmp.eq.s32.totalorder %s16, 7
    %p87 = por %p85, %p86
    %p88 = scmp.ne.s32.totalorder %s77, %s78
    %p89 = scmp.eq.s32.totalorder %s16, 0
    %p90 = por %p88, %p89
    %p91 = scmp.ne.s32.totalorder %s77, %s78
    %p92 = scmp.eq.s32.totalorder %s17, 7
    %p93 = por %p91, %p92
    %p95 = scmp.ne.s32.totalorder %s78, %s94
    %p96 = scmp.eq.s32.totalorder %s17, 0
    %p97 = por %p95, %p96
    %s98 = ssub.s32 %s18, %s37
    %s99 = ssub.s32 %s19, %s33
    %s100 = sor.u32 %s98, %s99
    %s101 = ssub.s32 %s20, %s29
    %s102 = sor.u32 %s100, %s101
    %p103 = scmp.eq.s32.totalorder %s102, 0
    %s105 = sadd.s32 %s104, 1
    %s106 = scalar_select %p103, %s104, %s105
    %p109 = pneg %p103
    %p110 = scmp.eq.s32.totalorder %s11, 7
    %p111 = por %p109, %p110
    %p112 = scmp.ne.s32.totalorder %s104, %s107
    %p113 = scmp.eq.s32.totalorder %s11, 0
    %p114 = por %p112, %p113
    %p115 = scmp.ne.s32.totalorder %s104, %s107
    %p116 = scmp.eq.s32.totalorder %s16, 7
    %p117 = por %p115, %p116
    %p118 = scmp.ne.s32.totalorder %s107, %s108
    %p119 = scmp.eq.s32.totalorder %s16, 0
    %p120 = por %p118, %p119
    %p121 = scmp.ne.s32.totalorder %s107, %s108
    %p122 = scmp.eq.s32.totalorder %s17, 7
    %p123 = por %p121, %p122
    %p125 = scmp.ne.s32.totalorder %s108, %s124
    %p126 = scmp.eq.s32.totalorder %s17, 0
    %p127 = por %p125, %p126
    %s128 = ssub.s32 %s18, %s37
    %s129 = ssub.s32 %s19, %s33
    %s130 = sor.u32 %s128, %s129
    %s131 = ssub.s32 %s20, %s29
    %s132 = sor.u32 %s130, %s131
    %p133 = scmp.eq.s32.totalorder %s132, 0
    %s135 = sadd.s32 %s134, 1
    %s136 = scalar_select %p133, %s134, %s135
    %p139 = pneg %p133
    %p140 = scmp.eq.s32.totalorder %s11, 7
    %p141 = por %p139, %p140
    %p142 = scmp.ne.s32.totalorder %s134, %s137
    %p143 = scmp.eq.s32.totalorder %s11, 0
    %p144 = por %p142, %p143
    %p145 = scmp.ne.s32.totalorder %s134, %s137
    %p146 = scmp.eq.s32.totalorder %s16, 7
    %p147 = por %p145, %p146
    %p148 = scmp.ne.s32.totalorder %s137, %s138
    %p149 = scmp.eq.s32.totalorder %s16, 0
    %p150 = por %p148, %p149
    %p151 = scmp.ne.s32.totalorder %s137, %s138
    %p152 = scmp.eq.s32.totalorder %s17, 7
    %p153 = por %p151, %p152
    %p155 = scmp.ne.s32.totalorder %s138, %s154
    %p156 = scmp.eq.s32.totalorder %s17, 0
    %p157 = por %p155, %p156
    %s158 = ssub.s32 %s19, %s33
    %p159 = scmp.eq.s32.totalorder %s158, 0
    %s161 = sadd.s32 %s160, 1
    %s162 = scalar_select %p159, %s160, %s161
    %p165 = pneg %p159
    %p166 = scmp.eq.s32.totalorder %s11, 7
    %p167 = por %p165, %p166
    %p168 = scmp.ne.s32.totalorder %s160, %s163
    %p169 = scmp.eq.s32.totalorder %s11, 0
    %p170 = por %p168, %p169
    %p171 = scmp.ne.s32.totalorder %s160, %s163
    %p172 = scmp.eq.s32.totalorder %s16, 7
    %p173 = por %p171, %p172
    %p174 = scmp.ne.s32.totalorder %s163, %s164
    %p175 = scmp.eq.s32.totalorder %s16, 0
    %p176 = por %p174, %p175
    %p177 = scmp.ne.s32.totalorder %s163, %s164
    %p178 = scmp.eq.s32.totalorder %s17, 7
    %p179 = por %p177, %p178
    %p181 = scmp.ne.s32.totalorder %s164, %s180
    %p182 = scmp.eq.s32.totalorder %s17, 0
    %p183 = por %p181, %p182
    %s184 = ssub.s32 %s18, %s37
    %s185 = ssub.s32 %s19, %s33
    %s186 = sor.u32 %s184, %s185
    %s187 = ssub.s32 %s20, %s29
    %s188 = sor.u32 %s186, %s187
    %p189 = scmp.eq.s32.totalorder %s188, 0
    %s191 = sadd.s32 %s190, 1
    %s192 = scalar_select %p189, %s190, %s191
    %p195 = pneg %p189
    %p196 = scmp.eq.s32.totalorder %s11, 7
    %p197 = por %p195, %p196
    %p198 = scmp.ne.s32.totalorder %s190, %s193
    %p199 = scmp.eq.s32.totalorder %s11, 0
    %p200 = por %p198, %p199
    %p201 = scmp.ne.s32.totalorder %s190, %s193
    %p202 = scmp.eq.s32.totalorder %s16, 7
    %p203 = por %p201, %p202
    %p204 = scmp.ne.s32.totalorder %s193, %s194
    %p205 = scmp.eq.s32.totalorder %s16, 0
    %p206 = por %p204, %p205
    %p207 = scmp.ne.s32.totalorder %s193, %s194
    %p208 = scmp.eq.s32.totalorder %s17, 7
    %p209 = por %p207, %p208
    %p211 = scmp.ne.s32.totalorder %s194, %s210
    %p212 = scmp.eq.s32.totalorder %s17, 0
    %p213 = por %p211, %p212
    %p214 = scmp.le.s32.totalorder 1, %s11
    %p215 = scmp.lt.s32.totalorder %s11, 9
    %p216 = pnand %p214, %p215
    %p217 = pneg %p216
    // Predicated region
    $region9: #{birwkv_tmix_forward.20} parent=5 // pred_check
      _
    $region10: #{birwkv_tmix_forward.20} parent=5 // pred_check_branch
      %219 = sbr.rel (%p216) target = $region12
    $region11: #{birwkv_tmix_forward.20} parent=5 // pred_region
      %s220 = ssub.s32 %s11, 1
    $region12: #{birwkv_tmix_forward.20} parent=5 // pred_fallthru
      _
    %p221 = scmp.lt.s32.totalorder %s11, 8
    // Predicated region
    $region13: #{birwkv_tmix_forward.20} parent=5 // pred_check
      %p222 = pneg %p221
    $region14: #{birwkv_tmix_forward.20} parent=5 // pred_check_branch
      %224 = sbr.rel (%p222) target = $region16
    $region15: #{birwkv_tmix_forward.20} parent=5 // pred_region
      // Predicated region
      $region17: #{birwkv_tmix_forward.20} parent=15 // pred_check
        %p225 = pneg %p54
      $region18: #{birwkv_tmix_forward.20} parent=15 // pred_check_branch
        %227 = sbr.rel (%p225) target = $region20
      $region19: #{birwkv_tmix_forward.20} parent=15 // pred_region
        %p228 = scmp.lt.s32.totalorder %s18, 1
        %s229 = scalar_select %p228, %s18, 1
        %p230 = scmp.lt.s32.totalorder %s19, 3
        %s231 = scalar_select %p230, %s19, 3
        %p232 = scmp.lt.s32.totalorder %s20, 0
        %s233 = scalar_select %p232, %s20, 0
        %s234 = sadd.s32 %s233, %s231
        %s235 = smul.addr %s229, 4
        %s236 = sadd.s32 %s234, %s235
        %s237 = smul.addr %s236, 8
        %s238 = scalar_lea.vmem %s0, %s237
      $region20: #{birwkv_tmix_forward.20} parent=15 // pred_fallthru
        _
      // Predicated region
      $region21: #{birwkv_tmix_forward.20} parent=15 // pred_check
        %p239 = pneg %p84
      $region22: #{birwkv_tmix_forward.20} parent=15 // pred_check_branch
        %241 = sbr.rel (%p239) target = $region24
      $region23: #{birwkv_tmix_forward.20} parent=15 // pred_region
        %p242 = scmp.lt.s32.totalorder %s18, 1
        %s243 = scalar_select %p242, %s18, 1
        %p244 = scmp.lt.s32.totalorder %s19, 3
        %s245 = scalar_select %p244, %s19, 3
        %p246 = scmp.lt.s32.totalorder %s20, 0
        %s247 = scalar_select %p246, %s20, 0
        %s248 = sadd.s32 %s247, %s245
        %s249 = smul.addr %s243, 4
        %s250 = sadd.s32 %s248, %s249
        %s251 = smul.addr %s250, 8
        %s252 = scalar_lea.vmem %s1, %s251
      $region24: #{birwkv_tmix_forward.20} parent=15 // pred_fallthru
        _
      // Predicated region
      $region25: #{birwkv_tmix_forward.20} parent=15 // pred_check
        %p253 = pneg %p114
      $region26: #{birwkv_tmix_forward.20} parent=15 // pred_check_branch
        %255 = sbr.rel (%p253) target = $region28
      $region27: #{birwkv_tmix_forward.20} parent=15 // pred_region
        %p256 = scmp.lt.s32.totalorder %s18, 1
        %s257 = scalar_select %p256, %s18, 1
        %p258 = scmp.lt.s32.totalorder %s19, 3
        %s259 = scalar_select %p258, %s19, 3
        %p260 = scmp.lt.s32.totalorder %s20, 0
        %s261 = scalar_select %p260, %s20, 0
        %s262 = sadd.s32 %s261, %s259
        %s263 = smul.addr %s257, 4
        %s264 = sadd.s32 %s262, %s263
        %s265 = smul.addr %s264, 8
        %s266 = scalar_lea.vmem %s2, %s265
      $region28: #{birwkv_tmix_forward.20} parent=15 // pred_fallthru
        _
      // Predicated region
      $region29: #{birwkv_tmix_forward.20} parent=15 // pred_check
        %p267 = pneg %p144
      $region30: #{birwkv_tmix_forward.20} parent=15 // pred_check_branch
        %269 = sbr.rel (%p267) target = $region32
      $region31: #{birwkv_tmix_forward.20} parent=15 // pred_region
        %p270 = scmp.lt.s32.totalorder %s18, 1
        %s271 = scalar_select %p270, %s18, 1
        %p272 = scmp.lt.s32.totalorder %s19, 3
        %s273 = scalar_select %p272, %s19, 3
        %p274 = scmp.lt.s32.totalorder %s20, 0
        %s275 = scalar_select %p274, %s20, 0
        %s276 = sadd.s32 %s275, %s273
        %s277 = smul.addr %s271, 4
        %s278 = sadd.s32 %s276, %s277
        %s279 = smul.addr %s278, 8
        %s280 = scalar_lea.vmem %s3, %s279
      $region32: #{birwkv_tmix_forward.20} parent=15 // pred_fallthru
        _
      // Predicated region
      $region33: #{birwkv_tmix_forward.20} parent=15 // pred_check
        %p281 = pneg %p170
      $region34: #{birwkv_tmix_forward.20} parent=15 // pred_check_branch
        %283 = sbr.rel (%p281) target = $region36
      $region35: #{birwkv_tmix_forward.20} parent=15 // pred_region
        %p284 = scmp.lt.s32.totalorder %s19, 3
        %s285 = scalar_select %p284, %s19, 3
        %s286 = scalar_lea.vmem %s4, %s285
      $region36: #{birwkv_tmix_forward.20} parent=15 // pred_fallthru
        _
    $region16: #{birwkv_tmix_forward.20} parent=5 // pred_fallthru
      _
    %p287 = scmp.le.s32.totalorder 1, %s11
    %p288 = scmp.lt.s32.totalorder %s11, 9
    %p289 = pnand %p287, %p288
    %p290 = pneg %p289
    // Predicated region
    $region37: #{birwkv_tmix_forward.20} parent=5 // pred_check
      _
    $region38: #{birwkv_tmix_forward.20} parent=5 // pred_check_branch
      %292 = sbr.rel (%p289) target = $region40
    $region39: #{birwkv_tmix_forward.20} parent=5 // pred_region
      %s293 = ssub.s32 %s11, 1
      %p294 = scmp.lt.s32.totalorder %s21, 1
      %s295 = scalar_select %p294, %s21, 1
      %p296 = scmp.lt.s32.totalorder %s22, 3
      %s297 = scalar_select %p296, %s22, 3
      %p298 = scmp.lt.s32.totalorder %s23, 0
      %s299 = scalar_select %p298, %s23, 0
      %s300 = sadd.s32 %s299, %s297
      %s301 = smul.addr %s295, 4
      %s302 = sadd.s32 %s300, %s301
      %s303 = smul.addr %s302, 8
      %s304 = scalar_lea.vmem %s0, %s303
      %p305 = pneg %p60
      %p306 = pneg %p57
      %p307 = scmp.lt.s32.totalorder %s21, 1
      %s308 = scalar_select %p307, %s21, 1
      %p309 = scmp.lt.s32.totalorder %s22, 3
      %s310 = scalar_select %p309, %s22, 3
      %p311 = scmp.lt.s32.totalorder %s23, 0
      %s312 = scalar_select %p311, %s23, 0
      %s313 = sadd.s32 %s312, %s310
      %s314 = smul.addr %s308, 4
      %s315 = sadd.s32 %s313, %s314
      %s316 = smul.addr %s315, 8
      %s317 = scalar_lea.vmem %s1, %s316
      %p318 = pneg %p90
      %p319 = pneg %p87
      %p320 = scmp.lt.s32.totalorder %s21, 1
      %s321 = scalar_select %p320, %s21, 1
      %p322 = scmp.lt.s32.totalorder %s22, 3
      %s323 = scalar_select %p322, %s22, 3
      %p324 = scmp.lt.s32.totalorder %s23, 0
      %s325 = scalar_select %p324, %s23, 0
      %s326 = sadd.s32 %s325, %s323
      %s327 = smul.addr %s321, 4
      %s328 = sadd.s32 %s326, %s327
      %s329 = smul.addr %s328, 8
      %s330 = scalar_lea.vmem %s2, %s329
      %p331 = pneg %p120
      %p332 = pneg %p117
      %p333 = scmp.lt.s32.totalorder %s21, 1
      %s334 = scalar_select %p333, %s21, 1
      %p335 = scmp.lt.s32.totalorder %s22, 3
      %s336 = scalar_select %p335, %s22, 3
      %p337 = scmp.lt.s32.totalorder %s23, 0
      %s338 = scalar_select %p337, %s23, 0
      %s339 = sadd.s32 %s338, %s336
      %s340 = smul.addr %s334, 4
      %s341 = sadd.s32 %s339, %s340
      %s342 = smul.addr %s341, 8
      %s343 = scalar_lea.vmem %s3, %s342
      %p344 = pneg %p150
      %p345 = pneg %p147
      %p346 = scmp.lt.s32.totalorder %s22, 3
      %s347 = scalar_select %p346, %s22, 3
      %s348 = scalar_lea.vmem %s4, %s347
      %p349 = pneg %p176
      %p350 = pneg %p173
      %p351 = pneg %p206
      %p352 = pneg %p203
      %p353 = scmp.lt.s32.totalorder %s21, 1
      %s354 = scalar_select %p353, %s21, 1
      %p355 = scmp.lt.s32.totalorder %s22, 3
      %s356 = scalar_select %p355, %s22, 3
      %p357 = scmp.lt.s32.totalorder %s23, 0
      %s358 = scalar_select %p357, %s23, 0
      %s359 = sadd.s32 %s358, %s356
      %s360 = smul.addr %s354, 4
      %s361 = sadd.s32 %s359, %s360
      %s362 = smul.addr %s361, 8
      %s363 = scalar_lea.vmem %s5, %s362
      %p364 = scmp.lt.s32.totalorder %s21, 1
      %s365 = scalar_select %p364, %s21, 1
      %p366 = scmp.lt.s32.totalorder %s22, 3
      %s367 = scalar_select %p366, %s22, 3
      %p368 = scmp.lt.s32.totalorder %s23, 0
      %s369 = scalar_select %p368, %s23, 0
      %s370 = sadd.s32 %s369, %s367
      %s371 = smul.addr %s365, 4
      %s372 = sadd.s32 %s370, %s371
      %s373 = smul.addr %s372, 8
      %s374 = scalar_lea.vmem %s0, %s373
      %p375 = scmp.lt.s32.totalorder %s21, 1
      %s376 = scalar_select %p375, %s21, 1
      %p377 = scmp.lt.s32.totalorder %s22, 3
      %s378 = scalar_select %p377, %s22, 3
      %p379 = scmp.lt.s32.totalorder %s23, 0
      %s380 = scalar_select %p379, %s23, 0
      %s381 = sadd.s32 %s380, %s378
      %s382 = smul.addr %s376, 4
      %s383 = sadd.s32 %s381, %s382
      %s384 = smul.addr %s383, 8
      %s385 = scalar_lea.vmem %s1, %s384
      %p386 = scmp.lt.s32.totalorder %s21, 1
      %s387 = scalar_select %p386, %s21, 1
      %p388 = scmp.lt.s32.totalorder %s22, 3
      %s389 = scalar_select %p388, %s22, 3
      %p390 = scmp.lt.s32.totalorder %s23, 0
      %s391 = scalar_select %p390, %s23, 0
      %s392 = sadd.s32 %s391, %s389
      %s393 = smul.addr %s387, 4
      %s394 = sadd.s32 %s392, %s393
      %s395 = smul.addr %s394, 8
      %s396 = scalar_lea.vmem %s2, %s395
      %p397 = scmp.lt.s32.totalorder %s21, 1
      %s398 = scalar_select %p397, %s21, 1
      %p399 = scmp.lt.s32.totalorder %s22, 3
      %s400 = scalar_select %p399, %s22, 3
      %p401 = scmp.lt.s32.totalorder %s23, 0
      %s402 = scalar_select %p401, %s23, 0
      %s403 = sadd.s32 %s402, %s400
      %s404 = smul.addr %s398, 4
      %s405 = sadd.s32 %s403, %s404
      %s406 = smul.addr %s405, 8
      %s407 = scalar_lea.vmem %s3, %s406
      %p408 = scmp.lt.s32.totalorder %s22, 3
      %s409 = scalar_select %p408, %s22, 3
      %s410 = scalar_lea.vmem %s4, %s409
      %p411 = scmp.lt.s32.totalorder %s21, 1
      %s412 = scalar_select %p411, %s21, 1
      %p413 = scmp.lt.s32.totalorder %s22, 3
      %s414 = scalar_select %p413, %s22, 3
      %p415 = scmp.lt.s32.totalorder %s23, 0
      %s416 = scalar_select %p415, %s23, 0
      %s417 = sadd.s32 %s416, %s414
      %s418 = smul.addr %s412, 4
      %s419 = sadd.s32 %s417, %s418
      %s420 = smul.addr %s419, 8
      %s421 = scalar_lea.vmem %s5, %s420
      %p422 = scmp.eq.s32.totalorder %s23, 0
      // Predicated region
      $region41: #{birwkv_tmix_forward.20} parent=39 // pred_check
        %p423 = pneg %p422
      $region42: #{birwkv_tmix_forward.20} parent=39 // pred_check_branch
        %425 = sbr.rel (%p423) target = $region44
      $region43: #{birwkv_tmix_forward.20} parent=39 // pred_region
        %vm426 = vcmask 64512
        %427 = vst.msk [vmem:[#allocation2] sm:$0xff] %vm426, 0.0
      $region44: #{birwkv_tmix_forward.20} parent=39 // pred_fallthru
        _
      %v428 = vld [vmem:[%s374] sm:$0xff]
      %v429 = vld [vmem:[%s385] sm:$0xff]
      %v430 = vld [vmem:[%s396] sm:$0xff]
      %v431 = vld [vmem:[%s410] sm:$0x1]
      %v432 = vld [vmem:[%s407] sm:$0xff]
      %v433 = vmul.f32 %v432, 1.442695
      %v434 = vpow.pop %v433
      %v435 = vsub.f32 0.0, %v434
      %v436 = vlaneseq
      %v437 = vshrl.u32 %v436, 7
      %v438 = vlaneseq
      %v439 = vand.u32 %v438, 127
      %vm440 = vcmp.le.s32.totalorder %v439, %v437
      %v441 = vsel %vm440, 1, 0
      %v442 = vcvt.s32.f32 %v441
      %vm443 = vcmask 64512
      %v445 = vsel %vm443, %v442, 0
      %447 = vmatprep.subr.mxu0 0.0
      %448 = vmatpush1.msra.mxu0 %v435
      %449 = vmatprep.subr.mxu0 0.0
      %450 = vmatpush1.msra.mxu0 0.0
      %451 = vmatprep.subr.mxu0 0.0
      %452 = vmatpush1.msra.mxu0 0.0
      %453 = vmatprep.subr.mxu0 0.0
      %454 = vmatpush1.msra.mxu0 0.0
      %455 = vmatprep.subr.mxu0 0.0
      %456 = vmatpush1.msra.mxu0 0.0
      %457 = vmatprep.subr.mxu0 0.0
      %458 = vmatpush1.msra.mxu0 0.0
      %459 = vmatprep.subr.mxu0 0.0
      %460 = vmatpush1.msra.mxu0 0.0
      %461 = vmatprep.subr.mxu0 0.0
      %462 = vmatpush1.msra.mxu0 0.0
      %463 = vmatprep.subr.mxu0 0.0
      %464 = vmatpush1.msra.mxu0 0.0
      %465 = vmatprep.subr.mxu0 0.0
      %466 = vmatpush1.msra.mxu0 0.0
      %467 = vmatprep.subr.mxu0 0.0
      %468 = vmatpush1.msra.mxu0 0.0
      %469 = vmatprep.subr.mxu0 0.0
      %470 = vmatpush1.msra.mxu0 0.0
      %471 = vmatprep.subr.mxu0 0.0
      %472 = vmatpush1.msra.mxu0 0.0
      %473 = vmatprep.subr.mxu0 0.0
      %474 = vmatpush1.msra.mxu0 0.0
      %475 = vmatprep.subr.mxu0 0.0
      %476 = vmatpush1.msra.mxu0 0.0
      %477 = vmatprep.subr.mxu0 0.0
      %478 = vmatpush1.msra.mxu0 0.0
      %479 = vmatprep.subr.mxu0 0.0
      %480 = vmatpush1.msra.mxu0 0.0
      %481 = vmatprep.subr.mxu0 0.0
      %482 = vmatpush1.msra.mxu0 0.0
      %483 = vmatprep.subr.mxu0 0.0
      %484 = vmatpush1.msra.mxu0 0.0
      %485 = vmatprep.subr.mxu0 0.0
      %486 = vmatpush1.msra.mxu0 0.0
      %487 = vmatprep.subr.mxu0 0.0
      %488 = vmatpush1.msra.mxu0 0.0
      %489 = vmatprep.subr.mxu0 0.0
      %490 = vmatpush1.msra.mxu0 0.0
      %491 = vmatprep.subr.mxu0 0.0
      %492 = vmatpush1.msra.mxu0 0.0
      %493 = vmatprep.subr.mxu0 0.0
      %494 = vmatpush1.msra.mxu0 0.0
      %495 = vmatprep.subr.mxu0 0.0
      %496 = vmatpush1.msra.mxu0 0.0
      %497 = vmatprep.subr.mxu0 0.0
      %498 = vmatpush1.msra.mxu0 0.0
      %499 = vmatprep.subr.mxu0 0.0
      %500 = vmatpush1.msra.mxu0 0.0
      %501 = vmatprep.subr.mxu0 0.0
      %502 = vmatpush1.msra.mxu0 0.0
      %503 = vmatprep.subr.mxu0 0.0
      %504 = vmatpush1.msra.mxu0 0.0
      %505 = vmatprep.subr.mxu0 0.0
      %506 = vmatpush1.msra.mxu0 0.0
      %507 = vmatprep.subr.mxu0 0.0
      %508 = vmatpush1.msra.mxu0 0.0
      %509 = vmatprep.subr.mxu0 0.0
      %510 = vmatpush1.msra.mxu0 0.0
      %511 = vmatprep.mubr.f32.mxu0 0.0
      %512 = vmatmul.mubr.f32.gmra.mrb[0].mxu0 %v445
      %v513 = vpop.f32.mrb[0].mxu0
      %v514 = vadd.f32 0.0, %v513
      %v515 = vpop.f32.mrb[0].mxu0
      %516 = vdwg.mxu0
      %v517 = vsub.f32 %v514, %v435
      %v518 = vmul.f32 %v514, 1.442695
      %v519 = vpow.pop %v518
      %v520 = vmul.f32 %v517, 1.442695
      %v521 = vpow.pop %v520
      %v522 = vmul.f32 %v428, %v521
      %v523 = vsub.f32 0.0, %v514
      %v524 = vmul.f32 %v523, 1.442695
      %v525 = vpow.pop %v524
      %v526 = vmul.f32 %v429, %v525
      %v527 = vlaneseq
      %v528 = vshrl.u32 %v527, 7
      %v529 = vsub.s32 7, %v528
      %v530 = vrot.slane %v514, %v529
      %v531 = vsub.f32 %v530, %v514
      %v532 = vmul.f32 %v531, 1.442695
      %v533 = vpow.pop %v532
      %v534 = vmul.f32 %v429, %v533
      %v535 = vld [vmem:[#allocation2] sm:$0xff]
      %v537 = vsel %vm443, %v522, 0
      %v540 = vsel %vm443, %v526, 0
      %542 = vmatprep.subr.mxu0 0.0
      %543 = vmatpush1.xpose.msra.mxu0 %v540
      %544 = vmatprep.subr.mxu0 0.0
      %545 = vmatpush1.xpose.msra.mxu0 0.0
      %546 = vmatprep.subr.mxu0 0.0
      %547 = vmatpush1.xpose.msra.mxu0 0.0
      %548 = vmatprep.subr.mxu0 0.0
      %549 = vmatpush1.xpose.msra.mxu0 0.0
      %550 = vmatprep.subr.mxu0 0.0
      %551 = vmatpush1.xpose.msra.mxu0 0.0
      %552 = vmatprep.subr.mxu0 0.0
      %553 = vmatpush1.xpose.msra.mxu0 0.0
      %554 = vmatprep.subr.mxu0 0.0
      %555 = vmatpush1.xpose.msra.mxu0 0.0
      %556 = vmatprep.subr.mxu0 0.0
      %557 = vmatpush1.xpose.msra.mxu0 0.0
      %558 = vmatprep.subr.mxu0 0.0
      %559 = vmatpush1.xpose.msra.mxu0 0.0
      %560 = vmatprep.subr.mxu0 0.0
      %561 = vmatpush1.xpose.msra.mxu0 0.0
      %562 = vmatprep.subr.mxu0 0.0
      %563 = vmatpush1.xpose.msra.mxu0 0.0
      %564 = vmatprep.subr.mxu0 0.0
      %565 = vmatpush1.xpose.msra.mxu0 0.0
      %566 = vmatprep.subr.mxu0 0.0
      %567 = vmatpush1.xpose.msra.mxu0 0.0
      %568 = vmatprep.subr.mxu0 0.0
      %569 = vmatpush1.xpose.msra.mxu0 0.0
      %570 = vmatprep.subr.mxu0 0.0
      %571 = vmatpush1.xpose.msra.mxu0 0.0
      %572 = vmatprep.subr.mxu0 0.0
      %573 = vmatpush1.xpose.msra.mxu0 0.0
      %574 = vmatprep.subr.mxu0 0.0
      %575 = vmatpush1.xpose.msra.mxu0 0.0
      %576 = vmatprep.subr.mxu0 0.0
      %577 = vmatpush1.xpose.msra.mxu0 0.0
      %578 = vmatprep.subr.mxu0 0.0
      %579 = vmatpush1.xpose.msra.mxu0 0.0
      %580 = vmatprep.subr.mxu0 0.0
      %581 = vmatpush1.xpose.msra.mxu0 0.0
      %582 = vmatprep.subr.mxu0 0.0
      %583 = vmatpush1.xpose.msra.mxu0 0.0
      %584 = vmatprep.subr.mxu0 0.0
      %585 = vmatpush1.xpose.msra.mxu0 0.0
      %586 = vmatprep.subr.mxu0 0.0
      %587 = vmatpush1.xpose.msra.mxu0 0.0
      %588 = vmatprep.subr.mxu0 0.0
      %589 = vmatpush1.xpose.msra.mxu0 0.0
      %590 = vmatprep.subr.mxu0 0.0
      %591 = vmatpush1.xpose.msra.mxu0 0.0
      %592 = vmatprep.subr.mxu0 0.0
      %593 = vmatpush1.xpose.msra.mxu0 0.0
      %594 = vmatprep.subr.mxu0 0.0
      %595 = vmatpush1.xpose.msra.mxu0 0.0
      %596 = vmatprep.subr.mxu0 0.0
      %597 = vmatpush1.xpose.msra.mxu0 0.0
      %598 = vmatprep.subr.mxu0 0.0
      %599 = vmatpush1.xpose.msra.mxu0 0.0
      %600 = vmatprep.subr.mxu0 0.0
      %601 = vmatpush1.xpose.msra.mxu0 0.0
      %602 = vmatprep.subr.mxu0 0.0
      %603 = vmatpush1.xpose.msra.mxu0 0.0
      %604 = vmatprep.subr.mxu0 0.0
      %605 = vmatpush1.xpose.msra.mxu0 0.0
      %606 = vmatprep.mubr.f32.mxu0 0.0
      %607 = vmatmul.mubr.f32.gmra.mrb[0].mxu0 %v537
      %v608 = vpop.f32.mrb[0].mxu0
      %v609 = vadd.f32 0.0, %v608
      %v610 = vpop.f32.mrb[0].mxu0
      %611 = vdwg.mxu0
      %vm612 = vcmp.lt.s32.totalorder %v439, %v437
      %v613 = vsel %vm612, %v609, 0.0
      %v615 = vsel %vm443, %v613, 0
      %617 = vmatprep.subr.mxu0 0.0
      %618 = vmatpush1.msra.mxu0 %v430
      %619 = vmatprep.subr.mxu0 0.0
      %620 = vmatpush1.msra.mxu0 0.0
      %621 = vmatprep.subr.mxu0 0.0
      %622 = vmatpush1.msra.mxu0 0.0
      %623 = vmatprep.subr.mxu0 0.0
      %624 = vmatpush1.msra.mxu0 0.0
      %625 = vmatprep.subr.mxu0 0.0
      %626 = vmatpush1.msra.mxu0 0.0
      %627 = vmatprep.subr.mxu0 0.0
      %628 = vmatpush1.msra.mxu0 0.0
      %629 = vmatprep.subr.mxu0 0.0
      %630 = vmatpush1.msra.mxu0 0.0
      %631 = vmatprep.subr.mxu0 0.0
      %632 = vmatpush1.msra.mxu0 0.0
      %633 = vmatprep.subr.mxu0 0.0
      %634 = vmatpush1.msra.mxu0 0.0
      %635 = vmatprep.subr.mxu0 0.0
      %636 = vmatpush1.msra.mxu0 0.0
      %637 = vmatprep.subr.mxu0 0.0
      %638 = vmatpush1.msra.mxu0 0.0
      %639 = vmatprep.subr.mxu0 0.0
      %640 = vmatpush1.msra.mxu0 0.0
      %641 = vmatprep.subr.mxu0 0.0
      %642 = vmatpush1.msra.mxu0 0.0
      %643 = vmatprep.subr.mxu0 0.0
      %644 = vmatpush1.msra.mxu0 0.0
      %645 = vmatprep.subr.mxu0 0.0
      %646 = vmatpush1.msra.mxu0 0.0
      %647 = vmatprep.subr.mxu0 0.0
      %648 = vmatpush1.msra.mxu0 0.0
      %649 = vmatprep.subr.mxu0 0.0
      %650 = vmatpush1.msra.mxu0 0.0
      %651 = vmatprep.subr.mxu0 0.0
      %652 = vmatpush1.msra.mxu0 0.0
      %653 = vmatprep.subr.mxu0 0.0
      %654 = vmatpush1.msra.mxu0 0.0
      %655 = vmatprep.subr.mxu0 0.0
      %656 = vmatpush1.msra.mxu0 0.0
      %657 = vmatprep.subr.mxu0 0.0
      %658 = vmatpush1.msra.mxu0 0.0
      %659 = vmatprep.subr.mxu0 0.0
      %660 = vmatpush1.msra.mxu0 0.0
      %661 = vmatprep.subr.mxu0 0.0
      %662 = vmatpush1.msra.mxu0 0.0
      %663 = vmatprep.subr.mxu0 0.0
      %664 = vmatpush1.msra.mxu0 0.0
      %665 = vmatprep.subr.mxu0 0.0
      %666 = vmatpush1.msra.mxu0 0.0
      %667 = vmatprep.subr.mxu0 0.0
      %668 = vmatpush1.msra.mxu0 0.0
      %669 = vmatprep.subr.mxu0 0.0
      %670 = vmatpush1.msra.mxu0 0.0
      %671 = vmatprep.subr.mxu0 0.0
      %672 = vmatpush1.msra.mxu0 0.0
      %673 = vmatprep.subr.mxu0 0.0
      %674 = vmatpush1.msra.mxu0 0.0
      %675 = vmatprep.subr.mxu0 0.0
      %676 = vmatpush1.msra.mxu0 0.0
      %677 = vmatprep.subr.mxu0 0.0
      %678 = vmatpush1.msra.mxu0 0.0
      %679 = vmatprep.subr.mxu0 0.0
      %680 = vmatpush1.msra.mxu0 0.0
      %681 = vmatprep.mubr.f32.mxu0 0.0
      %682 = vmatmul.mubr.f32.gmra.mrb[0].mxu0 %v615
      %v683 = vpop.f32.mrb[0].mxu0
      %v684 = vadd.f32 0.0, %v683
      %v685 = vpop.f32.mrb[0].mxu0
      %686 = vdwg.mxu0
      %v688 = vsel %vm443, %v535, 0
      %690 = vmatprep.subr.mxu0 0.0
      %691 = vmatpush1.xpose.msra.mxu0 %v688
      %692 = vmatprep.subr.mxu0 0.0
      %693 = vmatpush1.xpose.msra.mxu0 0.0
      %694 = vmatprep.subr.mxu0 0.0
      %695 = vmatpush1.xpose.msra.mxu0 0.0
      %696 = vmatprep.subr.mxu0 0.0
      %697 = vmatpush1.xpose.msra.mxu0 0.0
      %698 = vmatprep.subr.mxu0 0.0
      %699 = vmatpush1.xpose.msra.mxu0 0.0
      %700 = vmatprep.subr.mxu0 0.0
      %701 = vmatpush1.xpose.msra.mxu0 0.0
      %702 = vmatprep.subr.mxu0 0.0
      %703 = vmatpush1.xpose.msra.mxu0 0.0
      %704 = vmatprep.subr.mxu0 0.0
      %705 = vmatpush1.xpose.msra.mxu0 0.0
      %706 = vmatprep.subr.mxu0 0.0
      %707 = vmatpush1.xpose.msra.mxu0 0.0
      %708 = vmatprep.subr.mxu0 0.0
      %709 = vmatpush1.xpose.msra.mxu0 0.0
      %710 = vmatprep.subr.mxu0 0.0
      %711 = vmatpush1.xpose.msra.mxu0 0.0
      %712 = vmatprep.subr.mxu0 0.0
      %713 = vmatpush1.xpose.msra.mxu0 0.0
      %714 = vmatprep.subr.mxu0 0.0
      %715 = vmatpush1.xpose.msra.mxu0 0.0
      %716 = vmatprep.subr.mxu0 0.0
      %717 = vmatpush1.xpose.msra.mxu0 0.0
      %718 = vmatprep.subr.mxu0 0.0
      %719 = vmatpush1.xpose.msra.mxu0 0.0
      %720 = vmatprep.subr.mxu0 0.0
      %721 = vmatpush1.xpose.msra.mxu0 0.0
      %722 = vmatprep.subr.mxu0 0.0
      %723 = vmatpush1.xpose.msra.mxu0 0.0
      %724 = vmatprep.subr.mxu0 0.0
      %725 = vmatpush1.xpose.msra.mxu0 0.0
      %726 = vmatprep.subr.mxu0 0.0
      %727 = vmatpush1.xpose.msra.mxu0 0.0
      %728 = vmatprep.subr.mxu0 0.0
      %729 = vmatpush1.xpose.msra.mxu0 0.0
      %730 = vmatprep.subr.mxu0 0.0
      %731 = vmatpush1.xpose.msra.mxu0 0.0
      %732 = vmatprep.subr.mxu0 0.0
      %733 = vmatpush1.xpose.msra.mxu0 0.0
      %734 = vmatprep.subr.mxu0 0.0
      %735 = vmatpush1.xpose.msra.mxu0 0.0
      %736 = vmatprep.subr.mxu0 0.0
      %737 = vmatpush1.xpose.msra.mxu0 0.0
      %738 = vmatprep.subr.mxu0 0.0
      %739 = vmatpush1.xpose.msra.mxu0 0.0
      %740 = vmatprep.subr.mxu0 0.0
      %741 = vmatpush1.xpose.msra.mxu0 0.0
      %742 = vmatprep.subr.mxu0 0.0
      %743 = vmatpush1.xpose.msra.mxu0 0.0
      %744 = vmatprep.subr.mxu0 0.0
      %745 = vmatpush1.xpose.msra.mxu0 0.0
      %746 = vmatprep.subr.mxu0 0.0
      %747 = vmatpush1.xpose.msra.mxu0 0.0
      %748 = vmatprep.subr.mxu0 0.0
      %749 = vmatpush1.xpose.msra.mxu0 0.0
      %750 = vmatprep.subr.mxu0 0.0
      %751 = vmatpush1.xpose.msra.mxu0 0.0
      %752 = vmatprep.subr.mxu0 0.0
      %753 = vmatpush1.xpose.msra.mxu0 0.0
      %754 = vmatprep.mubr.f32.mxu0 0.0
      %755 = vmatmul.mubr.f32.gmra.mrb[0].mxu0 %v537
      %v756 = vpop.f32.mrb[0].mxu0
      %v757 = vadd.f32 %v684, %v756
      %v758 = vpop.f32.mrb[0].mxu0
      %759 = vdwg.mxu0
      %v761 = vlaneseq
      %v762 = vshrl.u32 %v761, 7
      %v763 = vsub.s32 0, %v762
      %v764 = vrot.slane %v431, %v763
      %v766 = vmul.f32 %v428, %v764
      %v767 = vmul.f32 %v766, %v429
      %v768 = vsel %vm443, %v767, 0.0
      %769 = vadd.xlane.f32.xlu0 %v768
      %v770 = vpop.xlane.xlu0 %769
      %v771 = vmul.f32 %v770, %v430
      %v772 = vadd.f32 %v757, %v771
      %773 = vst.msk [vmem:[%s421] sm:$0xff] %vm443, %v772
      %v774 = vlaneseq
      %v775 = vshrl.u32 %v774, 7
      %v776 = vsub.s32 7, %v775
      %v777 = vrot.slane %v519, %v776
      %v778 = vmul.f32 %v777, %v535
      %779 = vxpose.xlu0.b32.start [1/16] %v430, 128
      %780 = vxpose.xlu0.b32.cont [2/16] 0.0, 128
      %781 = vxpose.xlu0.b32.cont [3/16] 0.0, 128
      %782 = vxpose.xlu0.b32.cont [4/16] 0.0, 128
      %783 = vxpose.xlu0.b32.cont [5/16] 0.0, 128
      %784 = vxpose.xlu0.b32.cont [6/16] 0.0, 128
      %785 = vxpose.xlu0.b32.cont [7/16] 0.0, 128
      %786 = vxpose.xlu0.b32.cont [8/16] 0.0, 128
      %787 = vxpose.xlu0.b32.cont [9/16] 0.0, 128
      %788 = vxpose.xlu0.b32.cont [10/16] 0.0, 128
      %789 = vxpose.xlu0.b32.cont [11/16] 0.0, 128
      %790 = vxpose.xlu0.b32.cont [12/16] 0.0, 128
      %791 = vxpose.xlu0.b32.cont [13/16] 0.0, 128
      %792 = vxpose.xlu0.b32.cont [14/16] 0.0, 128
      %793 = vxpose.xlu0.b32.cont [15/16] 0.0, 128
      %794 = vxpose.xlu0.b32.end [16/16] 0.0, 128
      %v795 = vpop.trf.xlu0
      %v796 = vpop.trf.xlu0
      %v797 = vpop.trf.xlu0
      %v798 = vpop.trf.xlu0
      %v799 = vpop.trf.xlu0
      %v800 = vpop.trf.xlu0
      %v801 = vpop.trf.xlu0
      %v802 = vpop.trf.xlu0
      %v803 = vpop.trf.xlu0
      %v804 = vpop.trf.xlu0
      %v805 = vpop.trf.xlu0
      %v806 = vpop.trf.xlu0
      %v807 = vpop.trf.xlu0
      %v808 = vpop.trf.xlu0
      %v809 = vpop.trf.xlu0
      %v810 = vpop.trf.xlu0
      %v812 = vsel %vm443, %v795, 0
      %814 = vmatprep.subr.mxu0 0.0
      %815 = vmatpush1.msra.mxu0 %v534
      %816 = vmatprep.subr.mxu0 0.0
      %817 = vmatpush1.msra.mxu0 0.0
      %818 = vmatprep.subr.mxu0 0.0
      %819 = vmatpush1.msra.mxu0 0.0
      %820 = vmatprep.subr.mxu0 0.0
      %821 = vmatpush1.msra.mxu0 0.0
      %822 = vmatprep.subr.mxu0 0.0
      %823 = vmatpush1.msra.mxu0 0.0
      %824 = vmatprep.subr.mxu0 0.0
      %825 = vmatpush1.msra.mxu0 0.0
      %826 = vmatprep.subr.mxu0 0.0
      %827 = vmatpush1.msra.mxu0 0.0
      %828 = vmatprep.subr.mxu0 0.0
      %829 = vmatpush1.msra.mxu0 0.0
      %830 = vmatprep.subr.mxu0 0.0
      %831 = vmatpush1.msra.mxu0 0.0
      %832 = vmatprep.subr.mxu0 0.0
      %833 = vmatpush1.msra.mxu0 0.0
      %834 = vmatprep.subr.mxu0 0.0
      %835 = vmatpush1.msra.mxu0 0.0
      %836 = vmatprep.subr.mxu0 0.0
      %837 = vmatpush1.msra.mxu0 0.0
      %838 = vmatprep.subr.mxu0 0.0
      %839 = vmatpush1.msra.mxu0 0.0
      %840 = vmatprep.subr.mxu0 0.0
      %841 = vmatpush1.msra.mxu0 0.0
      %842 = vmatprep.subr.mxu0 0.0
      %843 = vmatpush1.msra.mxu0 0.0
      %844 = vmatprep.subr.mxu0 0.0
      %845 = vmatpush1.msra.mxu0 0.0
      %846 = vmatprep.subr.mxu0 0.0
      %847 = vmatpush1.msra.mxu0 0.0
      %848 = vmatprep.subr.mxu0 0.0
      %849 = vmatpush1.msra.mxu0 0.0
      %850 = vmatprep.subr.mxu0 0.0
      %851 = vmatpush1.msra.mxu0 0.0
      %852 = vmatprep.subr.mxu0 0.0
      %853 = vmatpush1.msra.mxu0 0.0
      %854 = vmatprep.subr.mxu0 0.0
      %855 = vmatpush1.msra.mxu0 0.0
      %856 = vmatprep.subr.mxu0 0.0
      %857 = vmatpush1.msra.mxu0 0.0
      %858 = vmatprep.subr.mxu0 0.0
      %859 = vmatpush1.msra.mxu0 0.0
      %860 = vmatprep.subr.mxu0 0.0
      %861 = vmatpush1.msra.mxu0 0.0
      %862 = vmatprep.subr.mxu0 0.0
      %863 = vmatpush1.msra.mxu0 0.0
      %864 = vmatprep.subr.mxu0 0.0
      %865 = vmatpush1.msra.mxu0 0.0
      %866 = vmatprep.subr.mxu0 0.0
      %867 = vmatpush1.msra.mxu0 0.0
      %868 = vmatprep.subr.mxu0 0.0
      %869 = vmatpush1.msra.mxu0 0.0
      %870 = vmatprep.subr.mxu0 0.0
      %871 = vmatpush1.msra.mxu0 0.0
      %872 = vmatprep.subr.mxu0 0.0
      %873 = vmatpush1.msra.mxu0 0.0
      %874 = vmatprep.subr.mxu0 0.0
      %875 = vmatpush1.msra.mxu0 0.0
      %876 = vmatprep.subr.mxu0 0.0
      %877 = vmatpush1.msra.mxu0 0.0
      %878 = vmatprep.mubr.f32.mxu0 0.0
      %879 = vmatmul.mubr.f32.gmra.mrb[0].mxu0 %v812
      %v880 = vpop.f32.mrb[0].mxu0
      %v881 = vadd.f32 0.0, %v880
      %v882 = vpop.f32.mrb[0].mxu0
      %883 = vdwg.mxu0
      %v884 = vadd.f32 %v778, %v881
      %885 = vst.msk [vmem:[#allocation2] sm:$0xff] %vm443, %v884
      %p886 = scmp.lt.s32.totalorder %s21, 1
      %s887 = scalar_select %p886, %s21, 1
      %p888 = scmp.lt.s32.totalorder %s22, 3
      %s889 = scalar_select %p888, %s22, 3
      %p890 = scmp.lt.s32.totalorder %s23, 0
      %s891 = scalar_select %p890, %s23, 0
      %s892 = sadd.s32 %s891, %s889
      %s893 = smul.addr %s887, 4
      %s894 = sadd.s32 %s892, %s893
      %s895 = smul.addr %s894, 8
      %s896 = scalar_lea.vmem %s5, %s895
      // Predicated region
      $region45: #{birwkv_tmix_forward.20} parent=39 // pred_check
        %p897 = pneg %p203
      $region46: #{birwkv_tmix_forward.20} parent=39 // pred_check_branch
        %899 = sbr.rel (%p897) target = $region48
      $region47: #{birwkv_tmix_forward.20} parent=39 // pred_region
        _
      $region48: #{birwkv_tmix_forward.20} parent=39 // pred_fallthru
        _
    $region40: #{birwkv_tmix_forward.20} parent=5 // pred_fallthru
      _
    %p900 = scmp.le.s32.totalorder 2, %s11
    // Predicated region
    $region49: #{birwkv_tmix_forward.20} parent=5 // pred_check
      %p901 = pneg %p900
    $region50: #{birwkv_tmix_forward.20} parent=5 // pred_check_branch
      %903 = sbr.rel (%p901) target = $region52
    $region51: #{birwkv_tmix_forward.20} parent=5 // pred_region
      %s904 = ssub.s32 %s11, 2
      // Predicated region
      $region53: #{birwkv_tmix_forward.20} parent=51 // pred_check
        %p905 = pneg %p209
      $region54: #{birwkv_tmix_forward.20} parent=51 // pred_check_branch
        %907 = sbr.rel (%p905) target = $region56
      $region55: #{birwkv_tmix_forward.20} parent=51 // pred_region
        %p908 = scmp.lt.s32.totalorder %s24, 1
        %s909 = scalar_select %p908, %s24, 1
        %p910 = scmp.lt.s32.totalorder %s25, 3
        %s911 = scalar_select %p910, %s25, 3
        %p912 = scmp.lt.s32.totalorder %s26, 0
        %s913 = scalar_select %p912, %s26, 0
        %s914 = sadd.s32 %s913, %s911
        %s915 = smul.addr %s909, 4
        %s916 = sadd.s32 %s914, %s915
        %s917 = smul.addr %s916, 8
        %s918 = scalar_lea.vmem %s5, %s917
      $region56: #{birwkv_tmix_forward.20} parent=51 // pred_fallthru
        _
    $region52: #{birwkv_tmix_forward.20} parent=5 // pred_fallthru
      _
  $region6: #{birwkv_tmix_forward.20} parent=0 // loop_footer
    %s15 = sadd.s32 1, %s11
  $region7: #{birwkv_tmix_forward.20} parent=0 // loop_footer_branch
    %10 = sbr.rel target = $region3
  $region8: #{birwkv_tmix_forward.20} parent=0 // loop_exit
    _

// kernel: birwkv_tmix_forward.22
$region0: #{birwkv_tmix_forward.22}
  #allocation0 [shape = 'u32[]', space=smem, size = 0x4, offset = 0x4, fixed_abs, tag = 'smem constant byte address 0x4 - core index']
  #allocation1 [shape = 'u32[144,128]{1,0:T(1,128)}', space=vmem, size = 0x12000, scoped, tag = 'internal scratch']
  %s0 = inlined_call_operand.vmem [shape: f32[16,32], index: 0, kind: input, shape index: {}]
  %s1 = inlined_call_operand.vmem [shape: f32[16,32], index: 1, kind: input, shape index: {}]
  %s2 = inlined_call_operand.vmem [shape: f32[16,1], index: 2, kind: input, shape index: {}]
  %s3 = inlined_call_operand.vmem [shape: f32[16,32], index: 3, kind: input, shape index: {}]
  %s4 = inlined_call_operand.vmem [shape: f32[1,32], index: 4, kind: input, shape index: {}]
  %s5 = inlined_call_operand.vmem [shape: f32[1,32], index: 5, kind: input, shape index: {}]
  %s6 = inlined_call_operand.vmem [shape: f32[16,32], index: 6, kind: output, shape index: {}]
  %s7 = sld [smem:[#allocation0]]
  $region34: #{birwkv_tmix_forward.22} parent=0
    _
  %s9 = ssub.s32 1, %s7
  %s10 = scalar_select 0, %s9, %s7
  // Predicated region
  $region2: #{birwkv_tmix_forward.22} parent=0 // pred_check
    _
  $region3: #{birwkv_tmix_forward.22} parent=0 // pred_check_branch
    %12 = sbr.rel (0) target = $region5
  $region4: #{birwkv_tmix_forward.22} parent=0 // pred_region
    _
  $region5: #{birwkv_tmix_forward.22} parent=0 // pred_fallthru
    _
  // Predicated region
  $region6: #{birwkv_tmix_forward.22} parent=0 // pred_check
    _
  $region7: #{birwkv_tmix_forward.22} parent=0 // pred_check_branch
    %14 = sbr.rel (0) target = $region9
  $region8: #{birwkv_tmix_forward.22} parent=0 // pred_region
    _
  $region9: #{birwkv_tmix_forward.22} parent=0 // pred_fallthru
    _
  // Predicated region
  $region10: #{birwkv_tmix_forward.22} parent=0 // pred_check
    _
  $region11: #{birwkv_tmix_forward.22} parent=0 // pred_check_branch
    %16 = sbr.rel (0) target = $region13
  $region12: #{birwkv_tmix_forward.22} parent=0 // pred_region
    _
  $region13: #{birwkv_tmix_forward.22} parent=0 // pred_fallthru
    _
  // Predicated region
  $region14: #{birwkv_tmix_forward.22} parent=0 // pred_check
    _
  $region15: #{birwkv_tmix_forward.22} parent=0 // pred_check_branch
    %18 = sbr.rel (0) target = $region17
  $region16: #{birwkv_tmix_forward.22} parent=0 // pred_region
    _
  $region17: #{birwkv_tmix_forward.22} parent=0 // pred_fallthru
    _
  // Predicated region
  $region18: #{birwkv_tmix_forward.22} parent=0 // pred_check
    _
  $region19: #{birwkv_tmix_forward.22} parent=0 // pred_check_branch
    %20 = sbr.rel (0) target = $region21
  $region20: #{birwkv_tmix_forward.22} parent=0 // pred_region
    _
  $region21: #{birwkv_tmix_forward.22} parent=0 // pred_fallthru
    _
  // Predicated region
  $region22: #{birwkv_tmix_forward.22} parent=0 // pred_check
    _
  $region23: #{birwkv_tmix_forward.22} parent=0 // pred_check_branch
    %22 = sbr.rel (0) target = $region25
  $region24: #{birwkv_tmix_forward.22} parent=0 // pred_region
    _
  $region25: #{birwkv_tmix_forward.22} parent=0 // pred_fallthru
    _
  %v23 = vld [vmem:[%s0] sm:$0xff]
  %v24 = vld [vmem:[%s0 + $0x8] sm:$0xff]
  %v25 = vld [vmem:[%s1] sm:$0xff]
  %v26 = vld [vmem:[%s1 + $0x8] sm:$0xff]
  %v27 = vadd.f32 %v23, %v25
  %v28 = vadd.f32 %v24, %v26
  %v29 = vld [vmem:[%s2] sm:$0xff]
  %v30 = vld [vmem:[%s2 + $0x8] sm:$0xff]
  %32 = vset.pattern.permute.xlu0 0
  %33 = vperm.xlu0 %32, %v29
  %v34 = vpop.permute.xlu0 %33
  %37 = vset.pattern.permute.xlu0 0
  %38 = vperm.xlu0 %37, %v30
  %v39 = vpop.permute.xlu0 %38
  %v41 = vmul.f32 %v27, %v34
  %v42 = vmul.f32 %v28, %v39
  %45 = vrot.lane.b32.xlu0 %v41, 120
  %v46 = vpop.permute.xlu0 %45
  %47 = vrot.lane.b32.xlu0 %v42, 120
  %v48 = vpop.permute.xlu0 %47
  %51 = vrot.lane.b32.xlu0 %v41, 112
  %v52 = vpop.permute.xlu0 %51
  %53 = vrot.lane.b32.xlu0 %v42, 112
  %v54 = vpop.permute.xlu0 %53
  %57 = vrot.lane.b32.xlu0 %v41, 104
  %v58 = vpop.permute.xlu0 %57
  %59 = vrot.lane.b32.xlu0 %v42, 104
  %v60 = vpop.permute.xlu0 %59
  %v63 = vcombine.low %v41, %v52
  %v64 = vcombine.high %v41, %v52
  %v66 = vunpack.c.l.s4 1983009808
  %v67 = vunpack.c.0.s8 %v66
  %v68 = vlaneseq
  %v69 = vshrl.u32 %v68, 7
  %v70 = vsub.s32 %v67, %v69
  %v71 = vrot.slane %v63, %v70
  %v73 = vunpack.c.l.s4 1983009808
  %v74 = vunpack.c.0.s8 %v73
  %v75 = vlaneseq
  %v76 = vshrl.u32 %v75, 7
  %v77 = vsub.s32 %v74, %v76
  %v78 = vrot.slane %v64, %v77
  %v79 = vcombine.low %v46, %v58
  %v80 = vcombine.high %v46, %v58
  %v82 = vunpack.c.l.s4 1983009808
  %v83 = vunpack.c.0.s8 %v82
  %v84 = vlaneseq
  %v85 = vshrl.u32 %v84, 7
  %v86 = vsub.s32 %v83, %v85
  %v87 = vrot.slane %v79, %v86
  %v89 = vunpack.c.l.s4 1983009808
  %v90 = vunpack.c.0.s8 %v89
  %v91 = vlaneseq
  %v92 = vshrl.u32 %v91, 7
  %v93 = vsub.s32 %v90, %v92
  %v94 = vrot.slane %v80, %v93
  %v95 = vcombine.low %v71, %v87
  %v96 = vcombine.high %v71, %v87
  %v98 = vunpack.c.l.s4 1934713408
  %v99 = vunpack.c.0.s8 %v98
  %v100 = vlaneseq
  %v101 = vshrl.u32 %v100, 7
  %v102 = vsub.s32 %v99, %v101
  %v103 = vrot.slane %v95, %v102
  %v105 = vunpack.c.l.s4 1934713408
  %v106 = vunpack.c.0.s8 %v105
  %v107 = vlaneseq
  %v108 = vshrl.u32 %v107, 7
  %v109 = vsub.s32 %v106, %v108
  %v110 = vrot.slane %v96, %v109
  %v111 = vcombine.low %v78, %v94
  %v112 = vcombine.high %v78, %v94
  %v114 = vunpack.c.l.s4 1934713408
  %v115 = vunpack.c.0.s8 %v114
  %v116 = vlaneseq
  %v117 = vshrl.u32 %v116, 7
  %v118 = vsub.s32 %v115, %v117
  %v119 = vrot.slane %v111, %v118
  %v121 = vunpack.c.l.s4 1934713408
  %v122 = vunpack.c.0.s8 %v121
  %v123 = vlaneseq
  %v124 = vshrl.u32 %v123, 7
  %v125 = vsub.s32 %v122, %v124
  %v126 = vrot.slane %v112, %v125
  %v127 = vcombine.high %v103, 0.0
  %v128 = vcombine.high %v110, 0.0
  %v129 = vcombine.high %v119, 0.0
  %v130 = vcombine.high %v126, 0.0
  %v131 = vcombine.low %v42, %v54
  %v132 = vcombine.high %v42, %v54
  %v134 = vunpack.c.l.s4 1983009808
  %v135 = vunpack.c.0.s8 %v134
  %v136 = vlaneseq
  %v137 = vshrl.u32 %v136, 7
  %v138 = vsub.s32 %v135, %v137
  %v139 = vrot.slane %v131, %v138
  %v141 = vunpack.c.l.s4 1983009808
  %v142 = vunpack.c.0.s8 %v141
  %v143 = vlaneseq
  %v144 = vshrl.u32 %v143, 7
  %v145 = vsub.s32 %v142, %v144
  %v146 = vrot.slane %v132, %v145
  %v147 = vcombine.low %v48, %v60
  %v148 = vcombine.high %v48, %v60
  %v150 = vunpack.c.l.s4 1983009808
  %v151 = vunpack.c.0.s8 %v150
  %v152 = vlaneseq
  %v153 = vshrl.u32 %v152, 7
  %v154 = vsub.s32 %v151, %v153
  %v155 = vrot.slane %v147, %v154
  %v157 = vunpack.c.l.s4 1983009808
  %v158 = vunpack.c.0.s8 %v157
  %v159 = vlaneseq
  %v160 = vshrl.u32 %v159, 7
  %v161 = vsub.s32 %v158, %v160
  %v162 = vrot.slane %v148, %v161
  %v163 = vcombine.low %v139, %v155
  %v164 = vcombine.high %v139, %v155
  %v166 = vunpack.c.l.s4 1934713408
  %v167 = vunpack.c.0.s8 %v166
  %v168 = vlaneseq
  %v169 = vshrl.u32 %v168, 7
  %v170 = vsub.s32 %v167, %v169
  %v171 = vrot.slane %v163, %v170
  %v173 = vunpack.c.l.s4 1934713408
  %v174 = vunpack.c.0.s8 %v173
  %v175 = vlaneseq
  %v176 = vshrl.u32 %v175, 7
  %v177 = vsub.s32 %v174, %v176
  %v178 = vrot.slane %v164, %v177
  %v179 = vcombine.low %v146, %v162
  %v180 = vcombine.high %v146, %v162
  %v182 = vunpack.c.l.s4 1934713408
  %v183 = vunpack.c.0.s8 %v182
  %v184 = vlaneseq
  %v185 = vshrl.u32 %v184, 7
  %v186 = vsub.s32 %v183, %v185
  %v187 = vrot.slane %v179, %v186
  %v189 = vunpack.c.l.s4 1934713408
  %v190 = vunpack.c.0.s8 %v189
  %v191 = vlaneseq
  %v192 = vshrl.u32 %v191, 7
  %v193 = vsub.s32 %v190, %v192
  %v194 = vrot.slane %v180, %v193
  %v195 = vcombine.high %v171, 0.0
  %v196 = vcombine.high %v178, 0.0
  %v197 = vcombine.high %v187, 0.0
  %v198 = vcombine.high %v194, 0.0
  %vm199 = vcmask 60416
  %v200 = vsel %vm199, %v103, 0.0
  %201 = vadd.xlane.f32.xlu0 %v200
  %v202 = vpop.xlane.xlu0 %201
  %v203 = vsel %vm199, %v127, 0.0
  %204 = vadd.xlane.f32.xlu0 %v203
  %v205 = vpop.xlane.xlu0 %204
  %v206 = vsel %vm199, %v110, 0.0
  %207 = vadd.xlane.f32.xlu0 %v206
  %v208 = vpop.xlane.xlu0 %207
  %v209 = vsel %vm199, %v128, 0.0
  %210 = vadd.xlane.f32.xlu0 %v209
  %v211 = vpop.xlane.xlu0 %210
  %v212 = vsel %vm199, %v119, 0.0
  %213 = vadd.xlane.f32.xlu0 %v212
  %v214 = vpop.xlane.xlu0 %213
  %v215 = vsel %vm199, %v129, 0.0
  %216 = vadd.xlane.f32.xlu0 %v215
  %v217 = vpop.xlane.xlu0 %216
  %v218 = vsel %vm199, %v126, 0.0
  %219 = vadd.xlane.f32.xlu0 %v218
  %v220 = vpop.xlane.xlu0 %219
  %v221 = vsel %vm199, %v130, 0.0
  %222 = vadd.xlane.f32.xlu0 %v221
  %v223 = vpop.xlane.xlu0 %222
  %v224 = vsel %vm199, %v171, 0.0
  %225 = vadd.xlane.f32.xlu0 %v224
  %v226 = vpop.xlane.xlu0 %225
  %v227 = vsel %vm199, %v195, 0.0
  %228 = vadd.xlane.f32.xlu0 %v227
  %v229 = vpop.xlane.xlu0 %228
  %v230 = vsel %vm199, %v178, 0.0
  %231 = vadd.xlane.f32.xlu0 %v230
  %v232 = vpop.xlane.xlu0 %231
  %v233 = vsel %vm199, %v196, 0.0
  %234 = vadd.xlane.f32.xlu0 %v233
  %v235 = vpop.xlane.xlu0 %234
  %v236 = vsel %vm199, %v187, 0.0
  %237 = vadd.xlane.f32.xlu0 %v236
  %v238 = vpop.xlane.xlu0 %237
  %v239 = vsel %vm199, %v197, 0.0
  %240 = vadd.xlane.f32.xlu0 %v239
  %v241 = vpop.xlane.xlu0 %240
  %v242 = vsel %vm199, %v194, 0.0
  %243 = vadd.xlane.f32.xlu0 %v242
  %v244 = vpop.xlane.xlu0 %243
  %v245 = vsel %vm199, %v198, 0.0
  %246 = vadd.xlane.f32.xlu0 %v245
  %v247 = vpop.xlane.xlu0 %246
  %v248 = vrcp.pop 8.0
  %v249 = vmul.f32 %v202, %v248
  %v250 = vmul.f32 %v205, %v248
  %v251 = vmul.f32 %v208, %v248
  %v252 = vmul.f32 %v211, %v248
  %v253 = vmul.f32 %v214, %v248
  %v254 = vmul.f32 %v217, %v248
  %v255 = vmul.f32 %v220, %v248
  %v256 = vmul.f32 %v223, %v248
  %v257 = vmul.f32 %v226, %v248
  %v258 = vmul.f32 %v229, %v248
  %v259 = vmul.f32 %v232, %v248
  %v260 = vmul.f32 %v235, %v248
  %v261 = vmul.f32 %v238, %v248
  %v262 = vmul.f32 %v241, %v248
  %v263 = vmul.f32 %v244, %v248
  %v264 = vmul.f32 %v247, %v248
  %v265 = vsub.f32 %v103, %v249
  %v266 = vsub.f32 %v127, %v250
  %v267 = vsub.f32 %v110, %v251
  %v268 = vsub.f32 %v128, %v252
  %v269 = vsub.f32 %v119, %v253
  %v270 = vsub.f32 %v129, %v254
  %v271 = vsub.f32 %v126, %v255
  %v272 = vsub.f32 %v130, %v256
  %v273 = vsub.f32 %v171, %v257
  %v274 = vsub.f32 %v195, %v258
  %v275 = vsub.f32 %v178, %v259
  %v276 = vsub.f32 %v196, %v260
  %v277 = vsub.f32 %v187, %v261
  %v278 = vsub.f32 %v197, %v262
  %v279 = vsub.f32 %v194, %v263
  %v280 = vsub.f32 %v198, %v264
  %v281 = vmul.f32 %v265, %v265
  %v282 = vmul.f32 %v266, %v266
  %v283 = vmul.f32 %v267, %v267
  %v284 = vmul.f32 %v268, %v268
  %v285 = vmul.f32 %v269, %v269
  %v286 = vmul.f32 %v270, %v270
  %v287 = vmul.f32 %v271, %v271
  %v288 = vmul.f32 %v272, %v272
  %v289 = vmul.f32 %v273, %v273
  %v290 = vmul.f32 %v274, %v274
  %v291 = vmul.f32 %v275, %v275
  %v292 = vmul.f32 %v276, %v276
  %v293 = vmul.f32 %v277, %v277
  %v294 = vmul.f32 %v278, %v278
  %v295 = vmul.f32 %v279, %v279
  %v296 = vmul.f32 %v280, %v280
  %v297 = vsel %vm199, %v281, 0.0
  %298 = vadd.xlane.f32.xlu0 %v297
  %v299 = vpop.xlane.xlu0 %298
  %v300 = vsel %vm199, %v282, 0.0
  %301 = vadd.xlane.f32.xlu0 %v300
  %v302 = vpop.xlane.xlu0 %301
  %v303 = vsel %vm199, %v283, 0.0
  %304 = vadd.xlane.f32.xlu0 %v303
  %v305 = vpop.xlane.xlu0 %304
  %v306 = vsel %vm199, %v284, 0.0
  %307 = vadd.xlane.f32.xlu0 %v306
  %v308 = vpop.xlane.xlu0 %307
  %v309 = vsel %vm199, %v285, 0.0
  %310 = vadd.xlane.f32.xlu0 %v309
  %v311 = vpop.xlane.xlu0 %310
  %v312 = vsel %vm199, %v286, 0.0
  %313 = vadd.xlane.f32.xlu0 %v312
  %v314 = vpop.xlane.xlu0 %313
  %v315 = vsel %vm199, %v287, 0.0
  %316 = vadd.xlane.f32.xlu0 %v315
  %v317 = vpop.xlane.xlu0 %316
  %v318 = vsel %vm199, %v288, 0.0
  %319 = vadd.xlane.f32.xlu0 %v318
  %v320 = vpop.xlane.xlu0 %319
  %v321 = vsel %vm199, %v289, 0.0
  %322 = vadd.xlane.f32.xlu0 %v321
  %v323 = vpop.xlane.xlu0 %322
  %v324 = vsel %vm199, %v290, 0.0
  %325 = vadd.xlane.f32.xlu0 %v324
  %v326 = vpop.xlane.xlu0 %325
  %v327 = vsel %vm199, %v291, 0.0
  %328 = vadd.xlane.f32.xlu0 %v327
  %v329 = vpop.xlane.xlu0 %328
  %v330 = vsel %vm199, %v292, 0.0
  %331 = vadd.xlane.f32.xlu0 %v330
  %v332 = vpop.xlane.xlu0 %331
  %v333 = vsel %vm199, %v293, 0.0
  %334 = vadd.xlane.f32.xlu0 %v333
  %v335 = vpop.xlane.xlu0 %334
  %v336 = vsel %vm199, %v294, 0.0
  %337 = vadd.xlane.f32.xlu0 %v336
  %v338 = vpop.xlane.xlu0 %337
  %v339 = vsel %vm199, %v295, 0.0
  %340 = vadd.xlane.f32.xlu0 %v339
  %v341 = vpop.xlane.xlu0 %340
  %v342 = vsel %vm199, %v296, 0.0
  %343 = vadd.xlane.f32.xlu0 %v342
  %v344 = vpop.xlane.xlu0 %343
  %v345 = vmul.f32 %v299, %v248
  %v346 = vmul.f32 %v302, %v248
  %v347 = vmul.f32 %v305, %v248
  %v348 = vmul.f32 %v308, %v248
  %v349 = vmul.f32 %v311, %v248
  %v350 = vmul.f32 %v314, %v248
  %v351 = vmul.f32 %v317, %v248
  %v352 = vmul.f32 %v320, %v248
  %v353 = vmul.f32 %v323, %v248
  %v354 = vmul.f32 %v326, %v248
  %v355 = vmul.f32 %v329, %v248
  %v356 = vmul.f32 %v332, %v248
  %v357 = vmul.f32 %v335, %v248
  %v358 = vmul.f32 %v338, %v248
  %v359 = vmul.f32 %v341, %v248
  %v360 = vmul.f32 %v344, %v248
  %v361 = vadd.f32 %v345, 0.00064
  %v362 = vadd.f32 %v346, 0.00064
  %v363 = vadd.f32 %v347, 0.00064
  %v364 = vadd.f32 %v348, 0.00064
  %v365 = vadd.f32 %v349, 0.00064
  %v366 = vadd.f32 %v350, 0.00064
  %v367 = vadd.f32 %v351, 0.00064
  %v368 = vadd.f32 %v352, 0.00064
  %v369 = vadd.f32 %v353, 0.00064
  %v370 = vadd.f32 %v354, 0.00064
  %v371 = vadd.f32 %v355, 0.00064
  %v372 = vadd.f32 %v356, 0.00064
  %v373 = vadd.f32 %v357, 0.00064
  %v374 = vadd.f32 %v358, 0.00064
  %v375 = vadd.f32 %v359, 0.00064
  %v376 = vadd.f32 %v360, 0.00064
  %v377 = vrsqrt.pop %v361
  %v378 = vrsqrt.pop %v362
  %v379 = vrsqrt.pop %v363
  %v380 = vrsqrt.pop %v364
  %v381 = vrsqrt.pop %v365
  %v382 = vrsqrt.pop %v366
  %v383 = vrsqrt.pop %v367
  %v384 = vrsqrt.pop %v368
  %v385 = vrsqrt.pop %v369
  %v386 = vrsqrt.pop %v370
  %v387 = vrsqrt.pop %v371
  %v388 = vrsqrt.pop %v372
  %v389 = vrsqrt.pop %v373
  %v390 = vrsqrt.pop %v374
  %v391 = vrsqrt.pop %v375
  %v392 = vrsqrt.pop %v376
  %v393 = vmul.f32 %v265, %v377
  %v394 = vmul.f32 %v266, %v378
  %v395 = vmul.f32 %v267, %v379
  %v396 = vmul.f32 %v268, %v380
  %v397 = vmul.f32 %v269, %v381
  %v398 = vmul.f32 %v270, %v382
  %v399 = vmul.f32 %v271, %v383
  %v400 = vmul.f32 %v272, %v384
  %v401 = vmul.f32 %v273, %v385
  %v402 = vmul.f32 %v274, %v386
  %v403 = vmul.f32 %v275, %v387
  %v404 = vmul.f32 %v276, %v388
  %v405 = vmul.f32 %v277, %v389
  %v406 = vmul.f32 %v278, %v390
  %v407 = vmul.f32 %v279, %v391
  %v408 = vmul.f32 %v280, %v392
  %v409 = vcombine.low %v393, %v395
  %v411 = vunpack.c.l.s4 1983009808
  %v412 = vunpack.c.0.s8 %v411
  %v413 = vlaneseq
  %v414 = vshrl.u32 %v413, 7
  %v415 = vsub.s32 %v412, %v414
  %v416 = vrot.slane %v409, %v415
  %v417 = vcombine.low %v394, %v396
  %v419 = vunpack.c.l.s4 1983009808
  %v420 = vunpack.c.0.s8 %v419
  %v421 = vlaneseq
  %v422 = vshrl.u32 %v421, 7
  %v423 = vsub.s32 %v420, %v422
  %v424 = vrot.slane %v417, %v423
  %v425 = vcombine.low %v397, %v399
  %v427 = vunpack.c.l.s4 1983009808
  %v428 = vunpack.c.0.s8 %v427
  %v429 = vlaneseq
  %v430 = vshrl.u32 %v429, 7
  %v431 = vsub.s32 %v428, %v430
  %v432 = vrot.slane %v425, %v431
  %v433 = vcombine.low %v398, %v400
  %v435 = vunpack.c.l.s4 1983009808
  %v436 = vunpack.c.0.s8 %v435
  %v437 = vlaneseq
  %v438 = vshrl.u32 %v437, 7
  %v439 = vsub.s32 %v436, %v438
  %v440 = vrot.slane %v433, %v439
  %v441 = vcombine.low %v416, %v424
  %v442 = vcombine.high %v416, %v424
  %v444 = vunpack.c.l.s4 1934713408
  %v445 = vunpack.c.0.s8 %v444
  %v446 = vlaneseq
  %v447 = vshrl.u32 %v446, 7
  %v448 = vsub.s32 %v445, %v447
  %v449 = vrot.slane %v441, %v448
  %v451 = vunpack.c.l.s4 1934713408
  %v452 = vunpack.c.0.s8 %v451
  %v453 = vlaneseq
  %v454 = vshrl.u32 %v453, 7
  %v455 = vsub.s32 %v452, %v454
  %v456 = vrot.slane %v442, %v455
  %v457 = vcombine.low %v432, %v440
  %v458 = vcombine.high %v432, %v440
  %v460 = vunpack.c.l.s4 1934713408
  %v461 = vunpack.c.0.s8 %v460
  %v462 = vlaneseq
  %v463 = vshrl.u32 %v462, 7
  %v464 = vsub.s32 %v461, %v463
  %v465 = vrot.slane %v457, %v464
  %v467 = vunpack.c.l.s4 1934713408
  %v468 = vunpack.c.0.s8 %v467
  %v469 = vlaneseq
  %v470 = vshrl.u32 %v469, 7
  %v471 = vsub.s32 %v468, %v470
  %v472 = vrot.slane %v458, %v471
  %v473 = vcombine.low %v449, %v465
  %v474 = vcombine.high %v449, %v465
  %v475 = vcombine.low %v456, %v472
  %v476 = vcombine.high %v456, %v472
  %v477 = vcombine.low %v401, %v403
  %v479 = vunpack.c.l.s4 1983009808
  %v480 = vunpack.c.0.s8 %v479
  %v481 = vlaneseq
  %v482 = vshrl.u32 %v481, 7
  %v483 = vsub.s32 %v480, %v482
  %v484 = vrot.slane %v477, %v483
  %v485 = vcombine.low %v402, %v404
  %v487 = vunpack.c.l.s4 1983009808
  %v488 = vunpack.c.0.s8 %v487
  %v489 = vlaneseq
  %v490 = vshrl.u32 %v489, 7
  %v491 = vsub.s32 %v488, %v490
  %v492 = vrot.slane %v485, %v491
  %v493 = vcombine.low %v405, %v407
  %v495 = vunpack.c.l.s4 1983009808
  %v496 = vunpack.c.0.s8 %v495
  %v497 = vlaneseq
  %v498 = vshrl.u32 %v497, 7
  %v499 = vsub.s32 %v496, %v498
  %v500 = vrot.slane %v493, %v499
  %v501 = vcombine.low %v406, %v408
  %v503 = vunpack.c.l.s4 1983009808
  %v504 = vunpack.c.0.s8 %v503
  %v505 = vlaneseq
  %v506 = vshrl.u32 %v505, 7
  %v507 = vsub.s32 %v504, %v506
  %v508 = vrot.slane %v501, %v507
  %v509 = vcombine.low %v484, %v492
  %v510 = vcombine.high %v484, %v492
  %v512 = vunpack.c.l.s4 1934713408
  %v513 = vunpack.c.0.s8 %v512
  %v514 = vlaneseq
  %v515 = vshrl.u32 %v514, 7
  %v516 = vsub.s32 %v513, %v515
  %v517 = vrot.slane %v509, %v516
  %v519 = vunpack.c.l.s4 1934713408
  %v520 = vunpack.c.0.s8 %v519
  %v521 = vlaneseq
  %v522 = vshrl.u32 %v521, 7
  %v523 = vsub.s32 %v520, %v522
  %v524 = vrot.slane %v510, %v523
  %v525 = vcombine.low %v500, %v508
  %v526 = vcombine.high %v500, %v508
  %v528 = vunpack.c.l.s4 1934713408
  %v529 = vunpack.c.0.s8 %v528
  %v530 = vlaneseq
  %v531 = vshrl.u32 %v530, 7
  %v532 = vsub.s32 %v529, %v531
  %v533 = vrot.slane %v525, %v532
  %v535 = vunpack.c.l.s4 1934713408
  %v536 = vunpack.c.0.s8 %v535
  %v537 = vlaneseq
  %v538 = vshrl.u32 %v537, 7
  %v539 = vsub.s32 %v536, %v538
  %v540 = vrot.slane %v526, %v539
  %v541 = vcombine.low %v517, %v533
  %v542 = vcombine.high %v517, %v533
  %v543 = vcombine.low %v524, %v540
  %v544 = vcombine.high %v524, %v540
  %547 = vrot.lane.b32.xlu0 %v474, 8
  %v548 = vpop.permute.xlu0 %547
  %549 = vrot.lane.b32.xlu0 %v542, 8
  %v550 = vpop.permute.xlu0 %549
  %555 = vrot.lane.b32.xlu0 %v475, 16
  %v556 = vpop.permute.xlu0 %555
  %557 = vrot.lane.b32.xlu0 %v543, 16
  %v558 = vpop.permute.xlu0 %557
  %563 = vrot.lane.b32.xlu0 %v476, 24
  %v564 = vpop.permute.xlu0 %563
  %565 = vrot.lane.b32.xlu0 %v544, 24
  %v566 = vpop.permute.xlu0 %565
  %vm569 = vcmask 64512
  %v570 = vsel %vm569, %v473, %v548
  %v571 = vsel %vm569, %v541, %v550
  %vm572 = vcmask 130048
  %v573 = vsel %vm572, %v570, %v556
  %v574 = vsel %vm572, %v571, %v558
  %vm575 = vcmask 195584
  %v576 = vsel %vm575, %v573, %v564
  %v577 = vsel %vm575, %v574, %v566
  %v578 = vld [vmem:[%s4] sm:$0x1]
  %v580 = vlaneseq
  %v581 = vshrl.u32 %v580, 7
  %v582 = vsub.s32 0, %v581
  %v583 = vrot.slane %v578, %v582
  %v585 = vmul.f32 %v576, %v583
  %v586 = vmul.f32 %v577, %v583
  %v587 = vld [vmem:[%s5] sm:$0x1]
  %v589 = vlaneseq
  %v590 = vshrl.u32 %v589, 7
  %v591 = vsub.s32 0, %v590
  %v592 = vrot.slane %v587, %v591
  %v594 = vadd.f32 %v585, %v592
  %v595 = vadd.f32 %v586, %v592
  %v596 = vld [vmem:[%s3] sm:$0xff]
  %v597 = vld [vmem:[%s3 + $0x8] sm:$0xff]
  %v598 = vxor.u32 %v596, 2147483648
  %v599 = vxor.u32 %v597, 2147483648
  %v600 = vmul.f32 %v598, 1.442695
  %v601 = vpow.pop %v600
  %v602 = vmul.f32 %v599, 1.442695
  %v603 = vpow.pop %v602
  %v604 = vadd.f32 %v601, 1.0
  %v605 = vadd.f32 %v603, 1.0
  %v606 = vrcp.pop %v604
  %v607 = vmul.f32 1.0, %v606
  %v608 = vrcp.pop %v605
  %v609 = vmul.f32 1.0, %v608
  %v610 = vmul.f32 %v596, %v607
  %v611 = vmul.f32 %v597, %v609
  %v612 = vmul.f32 %v594, %v610
  %v613 = vmul.f32 %v595, %v611
  %vm614 = vcmask 261120
  %615 = vst.msk [vmem:[%s6] sm:$0xff] %vm614, %v612
  %616 = vst.msk [vmem:[%s6 + $0x8] sm:$0xff] %vm614, %v613
  // Predicated region
  $region26: #{birwkv_tmix_forward.22} parent=0 // pred_check
    _
  $region27: #{birwkv_tmix_forward.22} parent=0 // pred_check_branch
    %618 = sbr.rel (0) target = $region29
  $region28: #{birwkv_tmix_forward.22} parent=0 // pred_region
    _
  $region29: #{birwkv_tmix_forward.22} parent=0 // pred_fallthru
    _
  // Predicated region
  $region30: #{birwkv_tmix_forward.22} parent=0 // pred_check
    _
  $region31: #{birwkv_tmix_forward.22} parent=0 // pred_check_branch
    %620 = sbr.rel (0) target = $region33
  $region32: #{birwkv_tmix_forward.22} parent=0 // pred_region
    _
  $region33: #{birwkv_tmix_forward.22} parent=0 // pred_fallthru
    _

// kernel: birwkv_tmix_forward.23
$region0: #{birwkv_tmix_forward.23}
  #allocation0 [shape = 'u32[]', space=smem, size = 0x4, offset = 0x4, fixed_abs, tag = 'smem constant byte address 0x4 - core index']
  #allocation1 [shape = 'u32[144,128]{1,0:T(1,128)}', space=vmem, size = 0x12000, scoped, tag = 'internal scratch']
  #allocation2 [shape = 'f32[16,32]{1,0:T(8,128)}', space=vmem, size = 0x2000, scoped, tag = 'scratch operand']
  %s0 = inlined_call_operand.vmem [shape: bf16[16,32], index: 0, kind: input, shape index: {}]
  %s1 = inlined_call_operand.vmem [shape: bf16[32,32], index: 1, kind: input, shape index: {}]
  %s2 = inlined_call_operand.hbm [shape: f32[16,32], index: 2, kind: output, shape index: {}]
  %s3 = sld [smem:[#allocation0]]
  $region26: #{birwkv_tmix_forward.23} parent=0
    _
  %s5 = ssub.s32 1, %s3
  %s6 = scalar_select 0, %s5, %s3
  $region1: #{birwkv_tmix_forward.23} parent=0
    #allocation3 [shape = 'u8[8192]{0}', space=vmem, size = 0x2000, scoped, tag = 'output window, operand 0, single buffered']
    #allocation4 [shape = 's32[1]{0}', space=sflag, size = 0x4, scoped, tag = 'scoped memory for birwkv_tmix_forward.23']
    %7 = vsyncpa [#allocation4], 0
    // Predicated region
    $region2: #{birwkv_tmix_forward.23} parent=1 // pred_check
      _
    $region3: #{birwkv_tmix_forward.23} parent=1 // pred_check_branch
      %9 = sbr.rel (0) target = $region5
    $region4: #{birwkv_tmix_forward.23} parent=1 // pred_region
      _
    $region5: #{birwkv_tmix_forward.23} parent=1 // pred_fallthru
      _
    // Predicated region
    $region6: #{birwkv_tmix_forward.23} parent=1 // pred_check
      _
    $region7: #{birwkv_tmix_forward.23} parent=1 // pred_check_branch
      %11 = sbr.rel (0) target = $region9
    $region8: #{birwkv_tmix_forward.23} parent=1 // pred_region
      _
    $region9: #{birwkv_tmix_forward.23} parent=1 // pred_fallthru
      _
    %p13 = scmp.eq.s32.totalorder 0, 0
    // Predicated region
    $region10: #{birwkv_tmix_forward.23} parent=1 // pred_check
      %p14 = pneg %p13
    $region11: #{birwkv_tmix_forward.23} parent=1 // pred_check_branch
      %16 = sbr.rel (%p14) target = $region13
    $region12: #{birwkv_tmix_forward.23} parent=1 // pred_region
      %vm17 = vcmask 261120
      %18 = vst.msk [vmem:[#allocation2] sm:$0xff] %vm17, 0.0
      %19 = vst.msk [vmem:[#allocation2 + $0x8] sm:$0xff] %vm17, 0.0
    $region13: #{birwkv_tmix_forward.23} parent=1 // pred_fallthru
      _
    %v20 = vld [vmem:[#allocation2] sm:$0xff]
    %v21 = vld [vmem:[#allocation2 + $0x8] sm:$0xff]
    %v22 = vld [vmem:[%s0] sm:$0xf]
    %v23 = vld [vmem:[%s0 + $0x4] sm:$0xf]
    %v24 = vld [vmem:[%s1] sm:$0xf]
    %v25 = vld [vmem:[%s1 + $0x4] sm:$0xf]
    %v26 = vld [vmem:[%s1 + $0x8] sm:$0xf]
    %v27 = vld [vmem:[%s1 + $0xc] sm:$0xf]
    %v30 = vunpack.c.l.b16 %v22
    %v31 = vunpack.c.l.b16 %v23
    %v32 = vpack.c.b16 %v31, %v30
    %v37 = vunpack.c.l.b16 %v24
    %v38 = vunpack.c.l.b16 %v25
    %v39 = vunpack.c.l.b16 %v26
    %v40 = vunpack.c.l.b16 %v27
    %v41 = vpack.c.b16 %v38, %v37
    %v42 = vpack.c.b16 %v40, %v39
    %vm45 = vcmask 261120
    %v47 = vsel %vm45, %v32, 0
    %49 = vmatprep.subr.bf16.mxu0 0
    %50 = vmatpush1.bf16.msra.mxu0 %v41
    %51 = vmatprep.subr.bf16.mxu0 0
    %52 = vmatpush1.bf16.msra.mxu0 %v42
    %53 = vmatprep.subr.bf16.mxu0 0
    %54 = vmatpush1.bf16.msra.mxu0 0
    %55 = vmatprep.subr.bf16.mxu0 0
    %56 = vmatpush1.bf16.msra.mxu0 0
    %57 = vmatprep.subr.bf16.mxu0 0
    %58 = vmatpush1.bf16.msra.mxu0 0
    %59 = vmatprep.subr.bf16.mxu0 0
    %60 = vmatpush1.bf16.msra.mxu0 0
    %61 = vmatprep.subr.bf16.mxu0 0
    %62 = vmatpush1.bf16.msra.mxu0 0
    %63 = vmatprep.subr.bf16.mxu0 0
    %64 = vmatpush1.bf16.msra.mxu0 0
    %65 = vmatprep.subr.bf16.mxu0 0
    %66 = vmatpush1.bf16.msra.mxu0 0
    %67 = vmatprep.subr.bf16.mxu0 0
    %68 = vmatpush1.bf16.msra.mxu0 0
    %69 = vmatprep.subr.bf16.mxu0 0
    %70 = vmatpush1.bf16.msra.mxu0 0
    %71 = vmatprep.subr.bf16.mxu0 0
    %72 = vmatpush1.bf16.msra.mxu0 0
    %73 = vmatprep.subr.bf16.mxu0 0
    %74 = vmatpush1.bf16.msra.mxu0 0
    %75 = vmatprep.subr.bf16.mxu0 0
    %76 = vmatpush1.bf16.msra.mxu0 0
    %77 = vmatprep.subr.bf16.mxu0 0
    %78 = vmatpush1.bf16.msra.mxu0 0
    %79 = vmatprep.subr.bf16.mxu0 0
    %80 = vmatpush1.bf16.msra.mxu0 0
    %81 = vmatprep.mubr.bf16.mxu0 0
    %82 = vmatmul.mubr.bf16.gmra.mrb[0].mxu0 %v47
    %v83 = vpop.f32.mrb[0].mxu0
    %v84 = vadd.f32 0.0, %v83
    %v85 = vpop.f32.mrb[0].mxu0
    %v86 = vpop.f32.mrb[0].mxu0
    %v87 = vadd.f32 0.0, %v86
    %v88 = vpop.f32.mrb[0].mxu0
    %89 = vdwg.mxu0
    %v90 = vadd.f32 %v20, %v84
    %v91 = vadd.f32 %v21, %v87
    %92 = vst.msk [vmem:[#allocation2] sm:$0xff] %vm45, %v90
    %93 = vst.msk [vmem:[#allocation2 + $0x8] sm:$0xff] %vm45, %v91
    // Predicated region
    $region14: #{birwkv_tmix_forward.23} parent=1 // pred_check
      %p94 = pneg %p13
    $region15: #{birwkv_tmix_forward.23} parent=1 // pred_check_branch
      %96 = sbr.rel (%p94) target = $region17
    $region16: #{birwkv_tmix_forward.23} parent=1 // pred_region
      %v97 = vld [vmem:[#allocation2] sm:$0xff]
      %v98 = vld [vmem:[#allocation2 + $0x8] sm:$0xff]
      %99 = vst.msk [vmem:[#allocation3] sm:$0xff] %vm45, %v97
      %100 = vst.msk [vmem:[#allocation3 + $0x8] sm:$0xff] %vm45, %v98
    $region17: #{birwkv_tmix_forward.23} parent=1 // pred_fallthru
      _
    // Predicated region
    $region18: #{birwkv_tmix_forward.23} parent=1 // pred_check
      _
    $region19: #{birwkv_tmix_forward.23} parent=1 // pred_check_branch
      %102 = sbr.rel (0) target = $region21
    $region20: #{birwkv_tmix_forward.23} parent=1 // pred_region
      %s104 = ssub.s32 256, 256
      %105 = vsyncadd [#allocation4], %s104
      %s106 = sshll.u32 [#allocation3], 4
      %s107 = int_to_ptr.vmem [resolvable:$true] %s106
      %112 = dma.vmem_to_hbm [thread:$0]  %s107, 256, %s2, [#allocation4], 128, 128, 8
    $region21: #{birwkv_tmix_forward.23} parent=1 // pred_fallthru
      _
    // Predicated region
    $region22: #{birwkv_tmix_forward.23} parent=1 // pred_check
      _
    $region23: #{birwkv_tmix_forward.23} parent=1 // pred_check_branch
      %114 = sbr.rel (0) target = $region25
    $region24: #{birwkv_tmix_forward.23} parent=1 // pred_region
      %115 = dma.done [#allocation4], 256
    $region25: #{birwkv_tmix_forward.23} parent=1 // pred_fallthru
      _
    %116 = vsyncpa [#allocation4], 1

</llo_original>
